<compile_context>
chip_gen: v7x
topology: tpu7x:2x2x1
jax: 0.10.0
libtpu: 0.0.40
codegen_flags: <defaults>
</compile_context>

<pallas_src>
import functools

import jax
import jax.numpy as jnp
import numpy as np
from jax.experimental import pallas as pl
from jax.experimental.pallas import tpu as pltpu


# ---------------------------------------------------------------------------
# Kernel 1: conv-as-GEMM  (patches @ W + b, optional fused PReLU)
# ---------------------------------------------------------------------------
def _matmul_bias_prelu_kernel(p_ref, wp_ref, alpha_ref, o_ref, *, k, use_prelu):
    # p_ref: (M, K)   wp_ref: (K+1, Cout)  (last row = bias)   alpha_ref: SMEM (1,)
    y = jnp.dot(p_ref[...], wp_ref[:k, :], preferred_element_type=jnp.float32)
    y = y + wp_ref[k:k + 1, :]
    if use_prelu:
        a = alpha_ref[0]
        y = jnp.where(y >= 0.0, y, a * y)
    o_ref[...] = y.astype(o_ref.dtype)


def _im2col_3x3(x_nhwc):
    n, h, w, c = x_nhwc.shape
    xp = jnp.pad(x_nhwc, ((0, 0), (1, 1), (1, 1), (0, 0)))
    cols = [xp[:, dy:dy + h, dx:dx + w, :] for dy in range(3) for dx in range(3)]
    return jnp.concatenate(cols, axis=-1).reshape(n * h * w, 9 * c)


def conv3x3(x_nhwc, w_hwio, b, prelu_alpha=None, *, use_prelu):
    """3x3 / stride-1 / pad-1 conv (+ bias, optional PReLU) as one Pallas GEMM."""
    n, h, w, c = x_nhwc.shape
    cout = w_hwio.shape[-1]
    k = 9 * c
    if prelu_alpha is None:
        prelu_alpha = jnp.zeros((1,), x_nhwc.dtype)
    patches = _im2col_3x3(x_nhwc)                                    # (n*h*w, 9c)
    wp = jnp.concatenate([w_hwio.reshape(k, cout), b.reshape(1, cout)], axis=0)
    kernel = functools.partial(_matmul_bias_prelu_kernel, k=k, use_prelu=use_prelu)
    out = pl.pallas_call(
        kernel,
        out_shape=jax.ShapeDtypeStruct((n * h * w, cout), x_nhwc.dtype),
        in_specs=[
            pl.BlockSpec(memory_space=pltpu.MemorySpace.VMEM),       # patches
            pl.BlockSpec(memory_space=pltpu.MemorySpace.VMEM),       # weight (+bias row)
            pl.BlockSpec(memory_space=pltpu.MemorySpace.SMEM),       # PReLU alpha
        ],
        out_specs=pl.BlockSpec(memory_space=pltpu.MemorySpace.VMEM),
    )(patches, wp, prelu_alpha)
    return out.reshape(n, h, w, cout)


# ---------------------------------------------------------------------------
# Kernel 2: fused  global-avg-pool -> batched adapter MLP (one-hot selected)
#                  -> sigmoid gate -> residual add -> PReLU
# ---------------------------------------------------------------------------
def _se_gate_residual_kernel(feat_ref, x_ref, onehot_ref, w1p_ref, w2p_ref,
                             alpha_ref, o_ref, *, c, hc, n_adapters):
    # feat_ref / x_ref: (N, HW, C)       onehot_ref: (N, n_adapters)
    # w1p_ref: (n_adapters, C+1, Hc)     w2p_ref: (n_adapters, Hc+1, C)
    # alpha_ref: SMEM (1,)
    feat = feat_ref[...]
    inv_hw = 1.0 / feat.shape[1]
    x1 = jnp.sum(feat.astype(jnp.float32), axis=1) * inv_hw          # (N, C) avg pool
    gate = jnp.zeros_like(x1)
    for a in range(n_adapters):          # static unroll over the 3 adapters (no gathers)
        w1 = w1p_ref[a, :c, :]           # (C, Hc)
        b1 = w1p_ref[a, c:c + 1, :]      # (1, Hc)
        w2 = w2p_ref[a, :hc, :]          # (Hc, C)
        b2 = w2p_ref[a, hc:hc + 1, :]    # (1, C)
        h = jnp.maximum(jnp.dot(x1, w1, preferred_element_type=jnp.float32) + b1, 0.0)
        y = jnp.dot(h, w2, preferred_element_type=jnp.float32) + b2
        gate = gate + onehot_ref[:, a:a + 1] * y                     # per-sample select
    g = jax.nn.sigmoid(gate)                                         # (N, C)
    y = feat * g[:, None, :] + x_ref[...]                            # SE gate + residual
    alpha = alpha_ref[0]
    o_ref[...] = jnp.where(y >= 0.0, y, alpha * y).astype(o_ref.dtype)   # PReLU


# ---------------------------------------------------------------------------
# Full DomainAdaption forward
# ---------------------------------------------------------------------------
def domain_adaption_forward(x_nchw, intensity, params):
    """x_nchw: (N, C, H, W) float32.  intensity: (N,) int32 with values in {1, 2, 3}."""
    n, c, h, w = x_nchw.shape
    hc = params['ad_w1'].shape[-1]
    n_ad = params['ad_w1'].shape[0]
    x = jnp.transpose(x_nchw, (0, 2, 3, 1))                          # NHWC, lane-dense C

    out = conv3x3(x, params['conv1_w'], params['conv1_b'],
                  params['conv1_a'], use_prelu=True)                 # ConvBlock + PReLU
    out = conv3x3(out, params['conv2_w'], params['conv2_b'],
                  use_prelu=False)                                   # ConvBlock, no act

    # Pack biases into the stacked adapter weights (one operand per layer).
    w1p = jnp.concatenate([params['ad_w1'], params['ad_b1'][:, None, :]], axis=1)
    w2p = jnp.concatenate([params['ad_w2'], params['ad_b2'][:, None, :]], axis=1)
    onehot = jax.nn.one_hot(intensity - 1, n_ad, dtype=x.dtype)      # (N, 3)

    kernel = functools.partial(_se_gate_residual_kernel, c=c, hc=hc, n_adapters=n_ad)
    out = pl.pallas_call(
        kernel,
        out_shape=jax.ShapeDtypeStruct((n, h * w, c), x.dtype),
        in_specs=[pl.BlockSpec(memory_space=pltpu.MemorySpace.VMEM)] * 5
                 + [pl.BlockSpec(memory_space=pltpu.MemorySpace.SMEM)],
        out_specs=pl.BlockSpec(memory_space=pltpu.MemorySpace.VMEM),
    )(out.reshape(n, h * w, c), x.reshape(n, h * w, c), onehot, w1p, w2p,
      params['out_a'])

    return jnp.transpose(out.reshape(n, h, w, c), (0, 3, 1, 2))      # back to NCHW


# ---------------------------------------------------------------------------
# Params (torch-default-style uniform init), pure-JAX reference, demo
# ---------------------------------------------------------------------------
def init_params(key, c, contraction=4, dtype=jnp.float32):
    hc = c // contraction
    ks = jax.random.split(key, 8)

    def u(k, shape, fan_in):
        b = 1.0 / np.sqrt(fan_in)
        return jax.random.uniform(k, shape, dtype, -b, b)

    return dict(
        conv1_w=u(ks[0], (3, 3, c, c), 9 * c),   # HWIO
        conv1_b=u(ks[1], (c,), 9 * c),
        conv1_a=jnp.full((1,), 0.25, dtype),     # PReLU (torch default init)
        conv2_w=u(ks[2], (3, 3, c, c), 9 * c),
        conv2_b=u(ks[3], (c,), 9 * c),
        ad_w1=u(ks[4], (3, c, hc), c),           # 3 adapters, (in, out) layout
        ad_b1=u(ks[5], (3, hc), c),
        ad_w2=u(ks[6], (3, hc, c), hc),
        ad_b2=u(ks[7], (3, c), hc),
        out_a=jnp.full((1,), 0.25, dtype),       # final PReLU
    )


def reference_forward(x_nchw, intensity, params):
    hi = jax.lax.Precision.HIGHEST
    prelu = lambda v, a: jnp.where(v >= 0, v, a * v)
    dn = ('NHWC', 'HWIO', 'NHWC')
    x = jnp.transpose(x_nchw, (0, 2, 3, 1))
    o = jax.lax.conv_general_dilated(x, params['conv1_w'], (1, 1), 'SAME',
                                     dimension_numbers=dn, precision=hi) + params['conv1_b']
    o = prelu(o, params['conv1_a'][0])
    o = jax.lax.conv_general_dilated(o, params['conv2_w'], (1, 1), 'SAME',
                                     dimension_numbers=dn, precision=hi) + params['conv2_b']
    x1 = jnp.mean(o, axis=(1, 2))                                    # (N, C)
    sel = intensity - 1
    w1, b1 = params['ad_w1'][sel], params['ad_b1'][sel]
    w2, b2 = params['ad_w2'][sel], params['ad_b2'][sel]
    h = jnp.maximum(jnp.einsum('nc,nch->nh', x1, w1, precision=hi) + b1, 0.0)
    y = jnp.einsum('nh,nhc->nc', h, w2, precision=hi) + b2
    g = jax.nn.sigmoid(y)[:, None, None, :]
    out = prelu(o * g + x, params['out_a'][0])
    return jnp.transpose(out, (0, 3, 1, 2))


if __name__ == "__main__":
    N, C, H, W = 2, 128, 8, 8        # C=128 keeps feature maps lane-dense
    key = jax.random.PRNGKey(0)
    kp, kx = jax.random.split(key)
    params = init_params(kp, C, contraction=4)
    x = jax.random.normal(kx, (N, C, H, W), dtype=jnp.float32)
    intensity = jnp.array([1, 3], dtype=jnp.int32)   # picks adapter 0 and adapter 2

    fwd = jax.jit(domain_adaption_forward)
    out = jax.block_until_ready(fwd(x, intensity, params))
    assert out.shape == (N, C, H, W)

    ref = reference_forward(x, intensity, params)
    # Loose-ish tolerance: covers MXU f32-emulation differences between the Pallas
    # GEMM path and XLA's HIGHEST-precision conv; real bugs show up as O(1) errors.
    np.testing.assert_allclose(np.asarray(out), np.asarray(ref), rtol=2e-2, atol=2e-2)

    print("KERNEL_OK")
</pallas_src>

<mosaic_0001>
module attributes {stable_mosaic.version = 11 : i64} {
  func.func @_matmul_bias_prelu_kernel(%arg0: memref<128x1152xf32, #tpu.memory_space<vmem>>, %arg1: memref<1153x128xf32, #tpu.memory_space<vmem>>, %arg2: memref<1xf32, #tpu.memory_space<smem>>, %arg3: memref<128x128xf32, #tpu.memory_space<vmem>>) attributes {dimension_semantics = [], scalar_prefetch = 0 : i64, scratch_operands = 0 : i64, tpu.core_type = #tpu.core_type<tc>} {
    %c0 = arith.constant 0 : index
    %c0_0 = arith.constant 0 : index
    %0 = vector.load %arg0[%c0, %c0_0] : memref<128x1152xf32, #tpu.memory_space<vmem>>, vector<128x1152xf32>
    %c0_1 = arith.constant 0 : index
    %c0_2 = arith.constant 0 : index
    %1 = vector.load %arg1[%c0_1, %c0_2] : memref<1153x128xf32, #tpu.memory_space<vmem>>, vector<1152x128xf32>
    %cst = arith.constant dense<0.000000e+00> : vector<128x128xf32>
    %2 = tpu.matmul %0, %1, %cst {dimension_numbers = #tpu.dot_dimension_numbers<[1], [0], [0], [1], [0, 0, 1, 1], [], []>} : vector<128x1152xf32>, vector<1152x128xf32>, vector<128x128xf32> -> vector<128x128xf32>
    %c1152 = arith.constant 1152 : index
    %c0_3 = arith.constant 0 : index
    %3 = vector.load %arg1[%c1152, %c0_3] : memref<1153x128xf32, #tpu.memory_space<vmem>>, vector<1x128xf32>
    %4 = vector.broadcast %3 : vector<1x128xf32> to vector<128x128xf32>
    %5 = arith.addf %2, %4 : vector<128x128xf32>
    %c0_4 = arith.constant 0 : index
    %6 = memref.load %arg2[%c0_4] : memref<1xf32, #tpu.memory_space<smem>>
    %cst_5 = arith.constant 0.000000e+00 : f32
    %7 = vector.broadcast %cst_5 : f32 to vector<128x128xf32>
    %8 = arith.cmpf oge, %5, %7 : vector<128x128xf32>
    %9 = vector.broadcast %6 : f32 to vector<128x128xf32>
    %10 = arith.mulf %9, %5 : vector<128x128xf32>
    %11 = arith.select %8, %5, %10 : vector<128x128xi1>, vector<128x128xf32>
    %c0_6 = arith.constant 0 : index
    %c0_7 = arith.constant 0 : index
    %12 = vector.load %arg3[%c0_6, %c0_7] : memref<128x128xf32, #tpu.memory_space<vmem>>, vector<128x128xf32>
    tpu.vector_store %arg3[%c0_6, %c0_7], %11 {strides = array<i32>} : memref<128x128xf32, #tpu.memory_space<vmem>>, vector<128x128xf32>,
    return
  }
}

module attributes {stable_mosaic.version = 11 : i64} {
  func.func @_matmul_bias_prelu_kernel(%arg0: memref<128x1152xf32, #tpu.memory_space<vmem>>, %arg1: memref<1153x128xf32, #tpu.memory_space<vmem>>, %arg2: memref<1xf32, #tpu.memory_space<smem>>, %arg3: memref<128x128xf32, #tpu.memory_space<vmem>>) attributes {dimension_semantics = [], scalar_prefetch = 0 : i64, scratch_operands = 0 : i64, tpu.core_type = #tpu.core_type<tc>} {
    %c0 = arith.constant 0 : index
    %c0_0 = arith.constant 0 : index
    %0 = vector.load %arg0[%c0, %c0_0] : memref<128x1152xf32, #tpu.memory_space<vmem>>, vector<128x1152xf32>
    %c0_1 = arith.constant 0 : index
    %c0_2 = arith.constant 0 : index
    %1 = vector.load %arg1[%c0_1, %c0_2] : memref<1153x128xf32, #tpu.memory_space<vmem>>, vector<1152x128xf32>
    %cst = arith.constant dense<0.000000e+00> : vector<128x128xf32>
    %2 = tpu.matmul %0, %1, %cst {dimension_numbers = #tpu.dot_dimension_numbers<[1], [0], [0], [1], [0, 0, 1, 1], [], []>} : vector<128x1152xf32>, vector<1152x128xf32>, vector<128x128xf32> -> vector<128x128xf32>
    %c1152 = arith.constant 1152 : index
    %c0_3 = arith.constant 0 : index
    %3 = vector.load %arg1[%c1152, %c0_3] : memref<1153x128xf32, #tpu.memory_space<vmem>>, vector<1x128xf32>
    %4 = vector.broadcast %3 : vector<1x128xf32> to vector<128x128xf32>
    %5 = arith.addf %2, %4 : vector<128x128xf32>
    %c0_4 = arith.constant 0 : index
    %c0_5 = arith.constant 0 : index
    %6 = vector.load %arg3[%c0_4, %c0_5] : memref<128x128xf32, #tpu.memory_space<vmem>>, vector<128x128xf32>
    tpu.vector_store %arg3[%c0_4, %c0_5], %5 {strides = array<i32>} : memref<128x128xf32, #tpu.memory_space<vmem>>, vector<128x128xf32>,
    return
  }
}

module attributes {stable_mosaic.version = 11 : i64} {
  func.func @_se_gate_residual_kernel(%arg0: memref<2x64x128xf32, #tpu.memory_space<vmem>>, %arg1: memref<2x64x128xf32, #tpu.memory_space<vmem>>, %arg2: memref<2x3xf32, #tpu.memory_space<vmem>>, %arg3: memref<3x129x32xf32, #tpu.memory_space<vmem>>, %arg4: memref<3x33x128xf32, #tpu.memory_space<vmem>>, %arg5: memref<1xf32, #tpu.memory_space<smem>>, %arg6: memref<2x64x128xf32, #tpu.memory_space<vmem>>) attributes {dimension_semantics = [], scalar_prefetch = 0 : i64, scratch_operands = 0 : i64, tpu.core_type = #tpu.core_type<tc>} {
    %c0 = arith.constant 0 : index
    %c0_0 = arith.constant 0 : index
    %c0_1 = arith.constant 0 : index
    %0 = vector.load %arg0[%c0, %c0_0, %c0_1] : memref<2x64x128xf32, #tpu.memory_space<vmem>>, vector<2x64x128xf32>
    %cst = arith.constant dense<0.000000e+00> : vector<2x128xf32>
    %1 = vector.multi_reduction <add>, %0, %cst [1] : vector<2x64x128xf32> to vector<2x128xf32>
    %cst_2 = arith.constant 1.562500e-02 : f32
    %2 = vector.broadcast %cst_2 : f32 to vector<2x128xf32>
    %3 = arith.mulf %1, %2 : vector<2x128xf32>
    %cst_3 = arith.constant 0.000000e+00 : f32
    %4 = vector.broadcast %cst_3 : f32 to vector<2x128xf32>
    %c0_4 = arith.constant 0 : index
    %c0_5 = arith.constant 0 : index
    %c0_6 = arith.constant 0 : index
    %5 = vector.load %arg3[%c0_4, %c0_5, %c0_6] : memref<3x129x32xf32, #tpu.memory_space<vmem>>, vector<1x128x32xf32>
    %6 = vector.shape_cast %5 : vector<1x128x32xf32> to vector<128x32xf32>
    %c0_7 = arith.constant 0 : index
    %c128 = arith.constant 128 : index
    %c0_8 = arith.constant 0 : index
    %7 = vector.load %arg3[%c0_7, %c128, %c0_8] : memref<3x129x32xf32, #tpu.memory_space<vmem>>, vector<1x1x32xf32>
    %8 = vector.shape_cast %7 : vector<1x1x32xf32> to vector<1x32xf32>
    %c0_9 = arith.constant 0 : index
    %c0_10 = arith.constant 0 : index
    %c0_11 = arith.constant 0 : index
    %9 = vector.load %arg4[%c0_9, %c0_10, %c0_11] : memref<3x33x128xf32, #tpu.memory_space<vmem>>, vector<1x32x128xf32>
    %10 = vector.shape_cast %9 : vector<1x32x128xf32> to vector<32x128xf32>
    %c0_12 = arith.constant 0 : index
    %c32 = arith.constant 32 : index
    %c0_13 = arith.constant 0 : index
    %11 = vector.load %arg4[%c0_12, %c32, %c0_13] : memref<3x33x128xf32, #tpu.memory_space<vmem>>, vector<1x1x128xf32>
    %12 = vector.shape_cast %11 : vector<1x1x128xf32> to vector<1x128xf32>
    %cst_14 = arith.constant dense<0.000000e+00> : vector<2x32xf32>
    %13 = tpu.matmul %3, %6, %cst_14 {dimension_numbers = #tpu.dot_dimension_numbers<[1], [0], [0], [1], [0, 0, 1, 1], [], []>} : vector<2x128xf32>, vector<128x32xf32>, vector<2x32xf32> -> vector<2x32xf32>
    %14 = vector.broadcast %8 : vector<1x32xf32> to vector<2x32xf32>
    %15 = arith.addf %13, %14 : vector<2x32xf32>
    %cst_15 = arith.constant 0.000000e+00 : f32
    %16 = vector.broadcast %cst_15 : f32 to vector<2x32xf32>
    %17 = arith.maximumf %15, %16 : vector<2x32xf32>
    %cst_16 = arith.constant dense<0.000000e+00> : vector<2x128xf32>
    %18 = tpu.matmul %17, %10, %cst_16 {dimension_numbers = #tpu.dot_dimension_numbers<[1], [0], [0], [1], [0, 0, 1, 1], [], []>} : vector<2x32xf32>, vector<32x128xf32>, vector<2x128xf32> -> vector<2x128xf32>
    %19 = vector.broadcast %12 : vector<1x128xf32> to vector<2x128xf32>
    %20 = arith.addf %18, %19 : vector<2x128xf32>
    %c0_17 = arith.constant 0 : index
    %c0_18 = arith.constant 0 : index
    %21 = vector.load %arg2[%c0_17, %c0_18] : memref<2x3xf32, #tpu.memory_space<vmem>>, vector<2x1xf32>
    %22 = vector.broadcast %21 : vector<2x1xf32> to vector<2x128xf32>
    %23 = arith.mulf %22, %20 : vector<2x128xf32>
    %24 = arith.addf %4, %23 : vector<2x128xf32>
    %c1 = arith.constant 1 : index
    %c0_19 = arith.constant 0 : index
    %c0_20 = arith.constant 0 : index
    %25 = vector.load %arg3[%c1, %c0_19, %c0_20] : memref<3x129x32xf32, #tpu.memory_space<vmem>>, vector<1x128x32xf32>
    %26 = vector.shape_cast %25 : vector<1x128x32xf32> to vector<128x32xf32>
    %c1_21 = arith.constant 1 : index
    %c128_22 = arith.constant 128 : index
    %c0_23 = arith.constant 0 : index
    %27 = vector.load %arg3[%c1_21, %c128_22, %c0_23] : memref<3x129x32xf32, #tpu.memory_space<vmem>>, vector<1x1x32xf32>
    %28 = vector.shape_cast %27 : vector<1x1x32xf32> to vector<1x32xf32>
    %c1_24 = arith.constant 1 : index
    %c0_25 = arith.constant 0 : index
    %c0_26 = arith.constant 0 : index
    %29 = vector.load %arg4[%c1_24, %c0_25, %c0_26] : memref<3x33x128xf32, #tpu.memory_space<vmem>>, vector<1x32x128xf32>
    %30 = vector.shape_cast %29 : vector<1x32x128xf32> to vector<32x128xf32>
    %c1_27 = arith.constant 1 : index
    %c32_28 = arith.constant 32 : index
    %c0_29 = arith.constant 0 : index
    %31 = vector.load %arg4[%c1_27, %c32_28, %c0_29] : memref<3x33x128xf32, #tpu.memory_space<vmem>>, vector<1x1x128xf32>
    %32 = vector.shape_cast %31 : vector<1x1x128xf32> to vector<1x128xf32>
    %cst_30 = arith.constant dense<0.000000e+00> : vector<2x32xf32>
    %33 = tpu.matmul %3, %26, %cst_30 {dimension_numbers = #tpu.dot_dimension_numbers<[1], [0], [0], [1], [0, 0, 1, 1], [], []>} : vector<2x128xf32>, vector<128x32xf32>, vector<2x32xf32> -> vector<2x32xf32>
    %34 = vector.broadcast %28 : vector<1x32xf32> to vector<2x32xf32>
    %35 = arith.addf %33, %34 : vector<2x32xf32>
    %cst_31 = arith.constant 0.000000e+00 : f32
    %36 = vector.broadcast %cst_31 : f32 to vector<2x32xf32>
    %37 = arith.maximumf %35, %36 : vector<2x32xf32>
    %cst_32 = arith.constant dense<0.000000e+00> : vector<2x128xf32>
    %38 = tpu.matmul %37, %30, %cst_32 {dimension_numbers = #tpu.dot_dimension_numbers<[1], [0], [0], [1], [0, 0, 1, 1], [], []>} : vector<2x32xf32>, vector<32x128xf32>, vector<2x128xf32> -> vector<2x128xf32>
    %39 = vector.broadcast %32 : vector<1x128xf32> to vector<2x128xf32>
    %40 = arith.addf %38, %39 : vector<2x128xf32>
    %c0_33 = arith.constant 0 : index
    %c1_34 = arith.constant 1 : index
    %41 = vector.load %arg2[%c0_33, %c1_34] : memref<2x3xf32, #tpu.memory_space<vmem>>, vector<2x1xf32>
    %42 = vector.broadcast %41 : vector<2x1xf32> to vector<2x128xf32>
    %43 = arith.mulf %42, %40 : vector<2x128xf32>
    %44 = arith.addf %24, %43 : vector<2x128xf32>
    %c2 = arith.constant 2 : index
    %c0_35 = arith.constant 0 : index
    %c0_36 = arith.constant 0 : index
    %45 = vector.load %arg3[%c2, %c0_35, %c0_36] : memref<3x129x32xf32, #tpu.memory_space<vmem>>, vector<1x128x32xf32>
    %46 = vector.shape_cast %45 : vector<1x128x32xf32> to vector<128x32xf32>
    %c2_37 = arith.constant 2 : index
    %c128_38 = arith.constant 128 : index
    %c0_39 = arith.constant 0 : index
    %47 = vector.load %arg3[%c2_37, %c128_38, %c0_39] : memref<3x129x32xf32, #tpu.memory_space<vmem>>, vector<1x1x32xf32>
    %48 = vector.shape_cast %47 : vector<1x1x32xf32> to vector<1x32xf32>
    %c2_40 = arith.constant 2 : index
    %c0_41 = arith.constant 0 : index
    %c0_42 = arith.constant 0 : index
    %49 = vector.load %arg4[%c2_40, %c0_41, %c0_42] : memref<3x33x128xf32, #tpu.memory_space<vmem>>, vector<1x32x128xf32>
    %50 = vector.shape_cast %49 : vector<1x32x128xf32> to vector<32x128xf32>
    %c2_43 = arith.constant 2 : index
    %c32_44 = arith.constant 32 : index
    %c0_45 = arith.constant 0 : index
    %51 = vector.load %arg4[%c2_43, %c32_44, %c0_45] : memref<3x33x128xf32, #tpu.memory_space<vmem>>, vector<1x1x128xf32>
    %52 = vector.shape_cast %51 : vector<1x1x128xf32> to vector<1x128xf32>
    %cst_46 = arith.constant dense<0.000000e+00> : vector<2x32xf32>
    %53 = tpu.matmul %3, %46, %cst_46 {dimension_numbers = #tpu.dot_dimension_numbers<[1], [0], [0], [1], [0, 0, 1, 1], [], []>} : vector<2x128xf32>, vector<128x32xf32>, vector<2x32xf32> -> vector<2x32xf32>
    %54 = vector.broadcast %48 : vector<1x32xf32> to vector<2x32xf32>
    %55 = arith.addf %53, %54 : vector<2x32xf32>
    %cst_47 = arith.constant 0.000000e+00 : f32
    %56 = vector.broadcast %cst_47 : f32 to vector<2x32xf32>
    %57 = arith.maximumf %55, %56 : vector<2x32xf32>
    %cst_48 = arith.constant dense<0.000000e+00> : vector<2x128xf32>
    %58 = tpu.matmul %57, %50, %cst_48 {dimension_numbers = #tpu.dot_dimension_numbers<[1], [0], [0], [1], [0, 0, 1, 1], [], []>} : vector<2x32xf32>, vector<32x128xf32>, vector<2x128xf32> -> vector<2x128xf32>
    %59 = vector.broadcast %52 : vector<1x128xf32> to vector<2x128xf32>
    %60 = arith.addf %58, %59 : vector<2x128xf32>
    %c0_49 = arith.constant 0 : index
    %c2_50 = arith.constant 2 : index
    %61 = vector.load %arg2[%c0_49, %c2_50] : memref<2x3xf32, #tpu.memory_space<vmem>>, vector<2x1xf32>
    %62 = vector.broadcast %61 : vector<2x1xf32> to vector<2x128xf32>
    %63 = arith.mulf %62, %60 : vector<2x128xf32>
    %64 = arith.addf %44, %63 : vector<2x128xf32>
    %65 = arith.negf %64 : vector<2x128xf32>
    %66 = math.exp %65 : vector<2x128xf32>
    %cst_51 = arith.constant 1.000000e+00 : f32
    %67 = vector.broadcast %cst_51 : f32 to vector<2x128xf32>
    %68 = arith.addf %67, %66 : vector<2x128xf32>
    %69 = arith.divf %67, %68 : vector<2x128xf32>
    %70 = vector.shape_cast %69 : vector<2x128xf32> to vector<2x1x128xf32>
    %71 = vector.broadcast %70 : vector<2x1x128xf32> to vector<2x64x128xf32>
    %72 = arith.mulf %0, %71 : vector<2x64x128xf32>
    %c0_52 = arith.constant 0 : index
    %c0_53 = arith.constant 0 : index
    %c0_54 = arith.constant 0 : index
    %73 = vector.load %arg1[%c0_52, %c0_53, %c0_54] : memref<2x64x128xf32, #tpu.memory_space<vmem>>, vector<2x64x128xf32>
    %74 = arith.addf %72, %73 : vector<2x64x128xf32>
    %c0_55 = arith.constant 0 : index
    %75 = memref.load %arg5[%c0_55] : memref<1xf32, #tpu.memory_space<smem>>
    %cst_56 = arith.constant 0.000000e+00 : f32
    %76 = vector.broadcast %cst_56 : f32 to vector<2x64x128xf32>
    %77 = arith.cmpf oge, %74, %76 : vector<2x64x128xf32>
    %78 = vector.broadcast %75 : f32 to vector<2x64x128xf32>
    %79 = arith.mulf %78, %74 : vector<2x64x128xf32>
    %80 = arith.select %77, %74, %79 : vector<2x64x128xi1>, vector<2x64x128xf32>
    %c0_57 = arith.constant 0 : index
    %c0_58 = arith.constant 0 : index
    %c0_59 = arith.constant 0 : index
    %81 = vector.load %arg6[%c0_57, %c0_58, %c0_59] : memref<2x64x128xf32, #tpu.memory_space<vmem>>, vector<2x64x128xf32>
    tpu.vector_store %arg6[%c0_57, %c0_58, %c0_59], %80 {strides = array<i32>} : memref<2x64x128xf32, #tpu.memory_space<vmem>>, vector<2x64x128xf32>,
    return
  }
}

</mosaic_0001>

<llo_original>
// kernel: domain_adaption_forward.3
$region0: #{domain_adaption_forward.3}
  #allocation0 [shape = 'u32[]', space=smem, size = 0x4, offset = 0x4, fixed_abs, tag = 'smem constant byte address 0x4 - core index']
  #allocation1 [shape = 'u32[144,128]{1,0:T(1,128)}', space=vmem, size = 0x12000, scoped, tag = 'internal scratch']
  #allocation2 [shape = 'f32[1]{0:T(128)S(6)}', space=smem, size = 0x200, scoped, tag = 'scoped memory for domain_adaption_forward.3']
  %s0 = inlined_call_operand.vmem [shape: f32[128,1152], index: 0, kind: input, shape index: {}]
  %s1 = inlined_call_operand.vmem [shape: f32[1153,128], index: 1, kind: input, shape index: {}]
  %s2 = inlined_call_operand.<no memory space> [shape: f32[1], index: 2, kind: input, shape index: {}]
  %s3 = inlined_call_operand.vmem [shape: f32[128,128], index: 3, kind: output, shape index: {}]
  %s4 = sld [smem:[#allocation0]]
  $region22: #{domain_adaption_forward.3} parent=0
    _
  %s6 = ssub.s32 1, %s4
  %s7 = scalar_select 0, %s6, %s4
  %8 = sst [smem:[#allocation2]] %s2
  // Predicated region
  $region2: #{domain_adaption_forward.3} parent=0 // pred_check
    _
  $region3: #{domain_adaption_forward.3} parent=0 // pred_check_branch
    %10 = sbr.rel (0) target = $region5
  $region4: #{domain_adaption_forward.3} parent=0 // pred_region
    _
  $region5: #{domain_adaption_forward.3} parent=0 // pred_fallthru
    _
  // Predicated region
  $region6: #{domain_adaption_forward.3} parent=0 // pred_check
    _
  $region7: #{domain_adaption_forward.3} parent=0 // pred_check_branch
    %12 = sbr.rel (0) target = $region9
  $region8: #{domain_adaption_forward.3} parent=0 // pred_region
    _
  $region9: #{domain_adaption_forward.3} parent=0 // pred_fallthru
    _
  // Predicated region
  $region10: #{domain_adaption_forward.3} parent=0 // pred_check
    _
  $region11: #{domain_adaption_forward.3} parent=0 // pred_check_branch
    %14 = sbr.rel (0) target = $region13
  $region12: #{domain_adaption_forward.3} parent=0 // pred_region
    _
  $region13: #{domain_adaption_forward.3} parent=0 // pred_fallthru
    _
  %v15 = vld [vmem:[%s0] sm:$0xff]
  %v16 = vld [vmem:[%s0 + $0x8] sm:$0xff]
  %v17 = vld [vmem:[%s0 + $0x10] sm:$0xff]
  %v18 = vld [vmem:[%s0 + $0x18] sm:$0xff]
  %v19 = vld [vmem:[%s0 + $0x20] sm:$0xff]
  %v20 = vld [vmem:[%s0 + $0x28] sm:$0xff]
  %v21 = vld [vmem:[%s0 + $0x30] sm:$0xff]
  %v22 = vld [vmem:[%s0 + $0x38] sm:$0xff]
  %v23 = vld [vmem:[%s0 + $0x40] sm:$0xff]
  %v24 = vld [vmem:[%s0 + $0x48] sm:$0xff]
  %v25 = vld [vmem:[%s0 + $0x50] sm:$0xff]
  %v26 = vld [vmem:[%s0 + $0x58] sm:$0xff]
  %v27 = vld [vmem:[%s0 + $0x60] sm:$0xff]
  %v28 = vld [vmem:[%s0 + $0x68] sm:$0xff]
  %v29 = vld [vmem:[%s0 + $0x70] sm:$0xff]
  %v30 = vld [vmem:[%s0 + $0x78] sm:$0xff]
  %v31 = vld [vmem:[%s0 + $0x80] sm:$0xff]
  %v32 = vld [vmem:[%s0 + $0x88] sm:$0xff]
  %v33 = vld [vmem:[%s0 + $0x90] sm:$0xff]
  %v34 = vld [vmem:[%s0 + $0x98] sm:$0xff]
  %v35 = vld [vmem:[%s0 + $0xa0] sm:$0xff]
  %v36 = vld [vmem:[%s0 + $0xa8] sm:$0xff]
  %v37 = vld [vmem:[%s0 + $0xb0] sm:$0xff]
  %v38 = vld [vmem:[%s0 + $0xb8] sm:$0xff]
  %v39 = vld [vmem:[%s0 + $0xc0] sm:$0xff]
  %v40 = vld [vmem:[%s0 + $0xc8] sm:$0xff]
  %v41 = vld [vmem:[%s0 + $0xd0] sm:$0xff]
  %v42 = vld [vmem:[%s0 + $0xd8] sm:$0xff]
  %v43 = vld [vmem:[%s0 + $0xe0] sm:$0xff]
  %v44 = vld [vmem:[%s0 + $0xe8] sm:$0xff]
  %v45 = vld [vmem:[%s0 + $0xf0] sm:$0xff]
  %v46 = vld [vmem:[%s0 + $0xf8] sm:$0xff]
  %v47 = vld [vmem:[%s0 + $0x100] sm:$0xff]
  %v48 = vld [vmem:[%s0 + $0x108] sm:$0xff]
  %v49 = vld [vmem:[%s0 + $0x110] sm:$0xff]
  %v50 = vld [vmem:[%s0 + $0x118] sm:$0xff]
  %v51 = vld [vmem:[%s0 + $0x120] sm:$0xff]
  %v52 = vld [vmem:[%s0 + $0x128] sm:$0xff]
  %v53 = vld [vmem:[%s0 + $0x130] sm:$0xff]
  %v54 = vld [vmem:[%s0 + $0x138] sm:$0xff]
  %v55 = vld [vmem:[%s0 + $0x140] sm:$0xff]
  %v56 = vld [vmem:[%s0 + $0x148] sm:$0xff]
  %v57 = vld [vmem:[%s0 + $0x150] sm:$0xff]
  %v58 = vld [vmem:[%s0 + $0x158] sm:$0xff]
  %v59 = vld [vmem:[%s0 + $0x160] sm:$0xff]
  %v60 = vld [vmem:[%s0 + $0x168] sm:$0xff]
  %v61 = vld [vmem:[%s0 + $0x170] sm:$0xff]
  %v62 = vld [vmem:[%s0 + $0x178] sm:$0xff]
  %v63 = vld [vmem:[%s0 + $0x180] sm:$0xff]
  %v64 = vld [vmem:[%s0 + $0x188] sm:$0xff]
  %v65 = vld [vmem:[%s0 + $0x190] sm:$0xff]
  %v66 = vld [vmem:[%s0 + $0x198] sm:$0xff]
  %v67 = vld [vmem:[%s0 + $0x1a0] sm:$0xff]
  %v68 = vld [vmem:[%s0 + $0x1a8] sm:$0xff]
  %v69 = vld [vmem:[%s0 + $0x1b0] sm:$0xff]
  %v70 = vld [vmem:[%s0 + $0x1b8] sm:$0xff]
  %v71 = vld [vmem:[%s0 + $0x1c0] sm:$0xff]
  %v72 = vld [vmem:[%s0 + $0x1c8] sm:$0xff]
  %v73 = vld [vmem:[%s0 + $0x1d0] sm:$0xff]
  %v74 = vld [vmem:[%s0 + $0x1d8] sm:$0xff]
  %v75 = vld [vmem:[%s0 + $0x1e0] sm:$0xff]
  %v76 = vld [vmem:[%s0 + $0x1e8] sm:$0xff]
  %v77 = vld [vmem:[%s0 + $0x1f0] sm:$0xff]
  %v78 = vld [vmem:[%s0 + $0x1f8] sm:$0xff]
  %v79 = vld [vmem:[%s0 + $0x200] sm:$0xff]
  %v80 = vld [vmem:[%s0 + $0x208] sm:$0xff]
  %v81 = vld [vmem:[%s0 + $0x210] sm:$0xff]
  %v82 = vld [vmem:[%s0 + $0x218] sm:$0xff]
  %v83 = vld [vmem:[%s0 + $0x220] sm:$0xff]
  %v84 = vld [vmem:[%s0 + $0x228] sm:$0xff]
  %v85 = vld [vmem:[%s0 + $0x230] sm:$0xff]
  %v86 = vld [vmem:[%s0 + $0x238] sm:$0xff]
  %v87 = vld [vmem:[%s0 + $0x240] sm:$0xff]
  %v88 = vld [vmem:[%s0 + $0x248] sm:$0xff]
  %v89 = vld [vmem:[%s0 + $0x250] sm:$0xff]
  %v90 = vld [vmem:[%s0 + $0x258] sm:$0xff]
  %v91 = vld [vmem:[%s0 + $0x260] sm:$0xff]
  %v92 = vld [vmem:[%s0 + $0x268] sm:$0xff]
  %v93 = vld [vmem:[%s0 + $0x270] sm:$0xff]
  %v94 = vld [vmem:[%s0 + $0x278] sm:$0xff]
  %v95 = vld [vmem:[%s0 + $0x280] sm:$0xff]
  %v96 = vld [vmem:[%s0 + $0x288] sm:$0xff]
  %v97 = vld [vmem:[%s0 + $0x290] sm:$0xff]
  %v98 = vld [vmem:[%s0 + $0x298] sm:$0xff]
  %v99 = vld [vmem:[%s0 + $0x2a0] sm:$0xff]
  %v100 = vld [vmem:[%s0 + $0x2a8] sm:$0xff]
  %v101 = vld [vmem:[%s0 + $0x2b0] sm:$0xff]
  %v102 = vld [vmem:[%s0 + $0x2b8] sm:$0xff]
  %v103 = vld [vmem:[%s0 + $0x2c0] sm:$0xff]
  %v104 = vld [vmem:[%s0 + $0x2c8] sm:$0xff]
  %v105 = vld [vmem:[%s0 + $0x2d0] sm:$0xff]
  %v106 = vld [vmem:[%s0 + $0x2d8] sm:$0xff]
  %v107 = vld [vmem:[%s0 + $0x2e0] sm:$0xff]
  %v108 = vld [vmem:[%s0 + $0x2e8] sm:$0xff]
  %v109 = vld [vmem:[%s0 + $0x2f0] sm:$0xff]
  %v110 = vld [vmem:[%s0 + $0x2f8] sm:$0xff]
  %v111 = vld [vmem:[%s0 + $0x300] sm:$0xff]
  %v112 = vld [vmem:[%s0 + $0x308] sm:$0xff]
  %v113 = vld [vmem:[%s0 + $0x310] sm:$0xff]
  %v114 = vld [vmem:[%s0 + $0x318] sm:$0xff]
  %v115 = vld [vmem:[%s0 + $0x320] sm:$0xff]
  %v116 = vld [vmem:[%s0 + $0x328] sm:$0xff]
  %v117 = vld [vmem:[%s0 + $0x330] sm:$0xff]
  %v118 = vld [vmem:[%s0 + $0x338] sm:$0xff]
  %v119 = vld [vmem:[%s0 + $0x340] sm:$0xff]
  %v120 = vld [vmem:[%s0 + $0x348] sm:$0xff]
  %v121 = vld [vmem:[%s0 + $0x350] sm:$0xff]
  %v122 = vld [vmem:[%s0 + $0x358] sm:$0xff]
  %v123 = vld [vmem:[%s0 + $0x360] sm:$0xff]
  %v124 = vld [vmem:[%s0 + $0x368] sm:$0xff]
  %v125 = vld [vmem:[%s0 + $0x370] sm:$0xff]
  %v126 = vld [vmem:[%s0 + $0x378] sm:$0xff]
  %v127 = vld [vmem:[%s0 + $0x380] sm:$0xff]
  %v128 = vld [vmem:[%s0 + $0x388] sm:$0xff]
  %v129 = vld [vmem:[%s0 + $0x390] sm:$0xff]
  %v130 = vld [vmem:[%s0 + $0x398] sm:$0xff]
  %v131 = vld [vmem:[%s0 + $0x3a0] sm:$0xff]
  %v132 = vld [vmem:[%s0 + $0x3a8] sm:$0xff]
  %v133 = vld [vmem:[%s0 + $0x3b0] sm:$0xff]
  %v134 = vld [vmem:[%s0 + $0x3b8] sm:$0xff]
  %v135 = vld [vmem:[%s0 + $0x3c0] sm:$0xff]
  %v136 = vld [vmem:[%s0 + $0x3c8] sm:$0xff]
  %v137 = vld [vmem:[%s0 + $0x3d0] sm:$0xff]
  %v138 = vld [vmem:[%s0 + $0x3d8] sm:$0xff]
  %v139 = vld [vmem:[%s0 + $0x3e0] sm:$0xff]
  %v140 = vld [vmem:[%s0 + $0x3e8] sm:$0xff]
  %v141 = vld [vmem:[%s0 + $0x3f0] sm:$0xff]
  %v142 = vld [vmem:[%s0 + $0x3f8] sm:$0xff]
  %v143 = vld [vmem:[%s0 + $0x400] sm:$0xff]
  %v144 = vld [vmem:[%s0 + $0x408] sm:$0xff]
  %v145 = vld [vmem:[%s0 + $0x410] sm:$0xff]
  %v146 = vld [vmem:[%s0 + $0x418] sm:$0xff]
  %v147 = vld [vmem:[%s0 + $0x420] sm:$0xff]
  %v148 = vld [vmem:[%s0 + $0x428] sm:$0xff]
  %v149 = vld [vmem:[%s0 + $0x430] sm:$0xff]
  %v150 = vld [vmem:[%s0 + $0x438] sm:$0xff]
  %v151 = vld [vmem:[%s0 + $0x440] sm:$0xff]
  %v152 = vld [vmem:[%s0 + $0x448] sm:$0xff]
  %v153 = vld [vmem:[%s0 + $0x450] sm:$0xff]
  %v154 = vld [vmem:[%s0 + $0x458] sm:$0xff]
  %v155 = vld [vmem:[%s0 + $0x460] sm:$0xff]
  %v156 = vld [vmem:[%s0 + $0x468] sm:$0xff]
  %v157 = vld [vmem:[%s0 + $0x470] sm:$0xff]
  %v158 = vld [vmem:[%s0 + $0x478] sm:$0xff]
  %v159 = vld [vmem:[%s1] sm:$0xff]
  %v160 = vld [vmem:[%s1 + $0x8] sm:$0xff]
  %v161 = vld [vmem:[%s1 + $0x10] sm:$0xff]
  %v162 = vld [vmem:[%s1 + $0x18] sm:$0xff]
  %v163 = vld [vmem:[%s1 + $0x20] sm:$0xff]
  %v164 = vld [vmem:[%s1 + $0x28] sm:$0xff]
  %v165 = vld [vmem:[%s1 + $0x30] sm:$0xff]
  %v166 = vld [vmem:[%s1 + $0x38] sm:$0xff]
  %v167 = vld [vmem:[%s1 + $0x40] sm:$0xff]
  %v168 = vld [vmem:[%s1 + $0x48] sm:$0xff]
  %v169 = vld [vmem:[%s1 + $0x50] sm:$0xff]
  %v170 = vld [vmem:[%s1 + $0x58] sm:$0xff]
  %v171 = vld [vmem:[%s1 + $0x60] sm:$0xff]
  %v172 = vld [vmem:[%s1 + $0x68] sm:$0xff]
  %v173 = vld [vmem:[%s1 + $0x70] sm:$0xff]
  %v174 = vld [vmem:[%s1 + $0x78] sm:$0xff]
  %v175 = vld [vmem:[%s1 + $0x80] sm:$0xff]
  %v176 = vld [vmem:[%s1 + $0x88] sm:$0xff]
  %v177 = vld [vmem:[%s1 + $0x90] sm:$0xff]
  %v178 = vld [vmem:[%s1 + $0x98] sm:$0xff]
  %v179 = vld [vmem:[%s1 + $0xa0] sm:$0xff]
  %v180 = vld [vmem:[%s1 + $0xa8] sm:$0xff]
  %v181 = vld [vmem:[%s1 + $0xb0] sm:$0xff]
  %v182 = vld [vmem:[%s1 + $0xb8] sm:$0xff]
  %v183 = vld [vmem:[%s1 + $0xc0] sm:$0xff]
  %v184 = vld [vmem:[%s1 + $0xc8] sm:$0xff]
  %v185 = vld [vmem:[%s1 + $0xd0] sm:$0xff]
  %v186 = vld [vmem:[%s1 + $0xd8] sm:$0xff]
  %v187 = vld [vmem:[%s1 + $0xe0] sm:$0xff]
  %v188 = vld [vmem:[%s1 + $0xe8] sm:$0xff]
  %v189 = vld [vmem:[%s1 + $0xf0] sm:$0xff]
  %v190 = vld [vmem:[%s1 + $0xf8] sm:$0xff]
  %v191 = vld [vmem:[%s1 + $0x100] sm:$0xff]
  %v192 = vld [vmem:[%s1 + $0x108] sm:$0xff]
  %v193 = vld [vmem:[%s1 + $0x110] sm:$0xff]
  %v194 = vld [vmem:[%s1 + $0x118] sm:$0xff]
  %v195 = vld [vmem:[%s1 + $0x120] sm:$0xff]
  %v196 = vld [vmem:[%s1 + $0x128] sm:$0xff]
  %v197 = vld [vmem:[%s1 + $0x130] sm:$0xff]
  %v198 = vld [vmem:[%s1 + $0x138] sm:$0xff]
  %v199 = vld [vmem:[%s1 + $0x140] sm:$0xff]
  %v200 = vld [vmem:[%s1 + $0x148] sm:$0xff]
  %v201 = vld [vmem:[%s1 + $0x150] sm:$0xff]
  %v202 = vld [vmem:[%s1 + $0x158] sm:$0xff]
  %v203 = vld [vmem:[%s1 + $0x160] sm:$0xff]
  %v204 = vld [vmem:[%s1 + $0x168] sm:$0xff]
  %v205 = vld [vmem:[%s1 + $0x170] sm:$0xff]
  %v206 = vld [vmem:[%s1 + $0x178] sm:$0xff]
  %v207 = vld [vmem:[%s1 + $0x180] sm:$0xff]
  %v208 = vld [vmem:[%s1 + $0x188] sm:$0xff]
  %v209 = vld [vmem:[%s1 + $0x190] sm:$0xff]
  %v210 = vld [vmem:[%s1 + $0x198] sm:$0xff]
  %v211 = vld [vmem:[%s1 + $0x1a0] sm:$0xff]
  %v212 = vld [vmem:[%s1 + $0x1a8] sm:$0xff]
  %v213 = vld [vmem:[%s1 + $0x1b0] sm:$0xff]
  %v214 = vld [vmem:[%s1 + $0x1b8] sm:$0xff]
  %v215 = vld [vmem:[%s1 + $0x1c0] sm:$0xff]
  %v216 = vld [vmem:[%s1 + $0x1c8] sm:$0xff]
  %v217 = vld [vmem:[%s1 + $0x1d0] sm:$0xff]
  %v218 = vld [vmem:[%s1 + $0x1d8] sm:$0xff]
  %v219 = vld [vmem:[%s1 + $0x1e0] sm:$0xff]
  %v220 = vld [vmem:[%s1 + $0x1e8] sm:$0xff]
  %v221 = vld [vmem:[%s1 + $0x1f0] sm:$0xff]
  %v222 = vld [vmem:[%s1 + $0x1f8] sm:$0xff]
  %v223 = vld [vmem:[%s1 + $0x200] sm:$0xff]
  %v224 = vld [vmem:[%s1 + $0x208] sm:$0xff]
  %v225 = vld [vmem:[%s1 + $0x210] sm:$0xff]
  %v226 = vld [vmem:[%s1 + $0x218] sm:$0xff]
  %v227 = vld [vmem:[%s1 + $0x220] sm:$0xff]
  %v228 = vld [vmem:[%s1 + $0x228] sm:$0xff]
  %v229 = vld [vmem:[%s1 + $0x230] sm:$0xff]
  %v230 = vld [vmem:[%s1 + $0x238] sm:$0xff]
  %v231 = vld [vmem:[%s1 + $0x240] sm:$0xff]
  %v232 = vld [vmem:[%s1 + $0x248] sm:$0xff]
  %v233 = vld [vmem:[%s1 + $0x250] sm:$0xff]
  %v234 = vld [vmem:[%s1 + $0x258] sm:$0xff]
  %v235 = vld [vmem:[%s1 + $0x260] sm:$0xff]
  %v236 = vld [vmem:[%s1 + $0x268] sm:$0xff]
  %v237 = vld [vmem:[%s1 + $0x270] sm:$0xff]
  %v238 = vld [vmem:[%s1 + $0x278] sm:$0xff]
  %v239 = vld [vmem:[%s1 + $0x280] sm:$0xff]
  %v240 = vld [vmem:[%s1 + $0x288] sm:$0xff]
  %v241 = vld [vmem:[%s1 + $0x290] sm:$0xff]
  %v242 = vld [vmem:[%s1 + $0x298] sm:$0xff]
  %v243 = vld [vmem:[%s1 + $0x2a0] sm:$0xff]
  %v244 = vld [vmem:[%s1 + $0x2a8] sm:$0xff]
  %v245 = vld [vmem:[%s1 + $0x2b0] sm:$0xff]
  %v246 = vld [vmem:[%s1 + $0x2b8] sm:$0xff]
  %v247 = vld [vmem:[%s1 + $0x2c0] sm:$0xff]
  %v248 = vld [vmem:[%s1 + $0x2c8] sm:$0xff]
  %v249 = vld [vmem:[%s1 + $0x2d0] sm:$0xff]
  %v250 = vld [vmem:[%s1 + $0x2d8] sm:$0xff]
  %v251 = vld [vmem:[%s1 + $0x2e0] sm:$0xff]
  %v252 = vld [vmem:[%s1 + $0x2e8] sm:$0xff]
  %v253 = vld [vmem:[%s1 + $0x2f0] sm:$0xff]
  %v254 = vld [vmem:[%s1 + $0x2f8] sm:$0xff]
  %v255 = vld [vmem:[%s1 + $0x300] sm:$0xff]
  %v256 = vld [vmem:[%s1 + $0x308] sm:$0xff]
  %v257 = vld [vmem:[%s1 + $0x310] sm:$0xff]
  %v258 = vld [vmem:[%s1 + $0x318] sm:$0xff]
  %v259 = vld [vmem:[%s1 + $0x320] sm:$0xff]
  %v260 = vld [vmem:[%s1 + $0x328] sm:$0xff]
  %v261 = vld [vmem:[%s1 + $0x330] sm:$0xff]
  %v262 = vld [vmem:[%s1 + $0x338] sm:$0xff]
  %v263 = vld [vmem:[%s1 + $0x340] sm:$0xff]
  %v264 = vld [vmem:[%s1 + $0x348] sm:$0xff]
  %v265 = vld [vmem:[%s1 + $0x350] sm:$0xff]
  %v266 = vld [vmem:[%s1 + $0x358] sm:$0xff]
  %v267 = vld [vmem:[%s1 + $0x360] sm:$0xff]
  %v268 = vld [vmem:[%s1 + $0x368] sm:$0xff]
  %v269 = vld [vmem:[%s1 + $0x370] sm:$0xff]
  %v270 = vld [vmem:[%s1 + $0x378] sm:$0xff]
  %v271 = vld [vmem:[%s1 + $0x380] sm:$0xff]
  %v272 = vld [vmem:[%s1 + $0x388] sm:$0xff]
  %v273 = vld [vmem:[%s1 + $0x390] sm:$0xff]
  %v274 = vld [vmem:[%s1 + $0x398] sm:$0xff]
  %v275 = vld [vmem:[%s1 + $0x3a0] sm:$0xff]
  %v276 = vld [vmem:[%s1 + $0x3a8] sm:$0xff]
  %v277 = vld [vmem:[%s1 + $0x3b0] sm:$0xff]
  %v278 = vld [vmem:[%s1 + $0x3b8] sm:$0xff]
  %v279 = vld [vmem:[%s1 + $0x3c0] sm:$0xff]
  %v280 = vld [vmem:[%s1 + $0x3c8] sm:$0xff]
  %v281 = vld [vmem:[%s1 + $0x3d0] sm:$0xff]
  %v282 = vld [vmem:[%s1 + $0x3d8] sm:$0xff]
  %v283 = vld [vmem:[%s1 + $0x3e0] sm:$0xff]
  %v284 = vld [vmem:[%s1 + $0x3e8] sm:$0xff]
  %v285 = vld [vmem:[%s1 + $0x3f0] sm:$0xff]
  %v286 = vld [vmem:[%s1 + $0x3f8] sm:$0xff]
  %v287 = vld [vmem:[%s1 + $0x400] sm:$0xff]
  %v288 = vld [vmem:[%s1 + $0x408] sm:$0xff]
  %v289 = vld [vmem:[%s1 + $0x410] sm:$0xff]
  %v290 = vld [vmem:[%s1 + $0x418] sm:$0xff]
  %v291 = vld [vmem:[%s1 + $0x420] sm:$0xff]
  %v292 = vld [vmem:[%s1 + $0x428] sm:$0xff]
  %v293 = vld [vmem:[%s1 + $0x430] sm:$0xff]
  %v294 = vld [vmem:[%s1 + $0x438] sm:$0xff]
  %v295 = vld [vmem:[%s1 + $0x440] sm:$0xff]
  %v296 = vld [vmem:[%s1 + $0x448] sm:$0xff]
  %v297 = vld [vmem:[%s1 + $0x450] sm:$0xff]
  %v298 = vld [vmem:[%s1 + $0x458] sm:$0xff]
  %v299 = vld [vmem:[%s1 + $0x460] sm:$0xff]
  %v300 = vld [vmem:[%s1 + $0x468] sm:$0xff]
  %v301 = vld [vmem:[%s1 + $0x470] sm:$0xff]
  %v302 = vld [vmem:[%s1 + $0x478] sm:$0xff]
  %v303 = vld [vmem:[%s1 + $0x480] sm:$0x1]
  %v304 = vlaneseq
  %v305 = vshrl.u32 %v304, 7
  %v306 = vsub.s32 0, %v305
  %v307 = vrot.slane %v303, %v306
  %308 = vmatprep.subr.mxu0 0.0
  %309 = vmatpush1.msra.mxu0 %v159
  %310 = vmatprep.subr.mxu0 0.0
  %311 = vmatpush1.msra.mxu0 %v160
  %312 = vmatprep.subr.mxu0 0.0
  %313 = vmatpush1.msra.mxu0 %v161
  %314 = vmatprep.subr.mxu0 0.0
  %315 = vmatpush1.msra.mxu0 %v162
  %316 = vmatprep.subr.mxu0 0.0
  %317 = vmatpush1.msra.mxu0 %v163
  %318 = vmatprep.subr.mxu0 0.0
  %319 = vmatpush1.msra.mxu0 %v164
  %320 = vmatprep.subr.mxu0 0.0
  %321 = vmatpush1.msra.mxu0 %v165
  %322 = vmatprep.subr.mxu0 0.0
  %323 = vmatpush1.msra.mxu0 %v166
  %324 = vmatprep.subr.mxu0 0.0
  %325 = vmatpush1.msra.mxu0 %v167
  %326 = vmatprep.subr.mxu0 0.0
  %327 = vmatpush1.msra.mxu0 %v168
  %328 = vmatprep.subr.mxu0 0.0
  %329 = vmatpush1.msra.mxu0 %v169
  %330 = vmatprep.subr.mxu0 0.0
  %331 = vmatpush1.msra.mxu0 %v170
  %332 = vmatprep.subr.mxu0 0.0
  %333 = vmatpush1.msra.mxu0 %v171
  %334 = vmatprep.subr.mxu0 0.0
  %335 = vmatpush1.msra.mxu0 %v172
  %336 = vmatprep.subr.mxu0 0.0
  %337 = vmatpush1.msra.mxu0 %v173
  %338 = vmatprep.subr.mxu0 0.0
  %339 = vmatpush1.msra.mxu0 %v174
  %340 = vmatprep.subr.mxu0 0.0
  %341 = vmatpush1.msra.mxu0 %v175
  %342 = vmatprep.subr.mxu0 0.0
  %343 = vmatpush1.msra.mxu0 %v176
  %344 = vmatprep.subr.mxu0 0.0
  %345 = vmatpush1.msra.mxu0 %v177
  %346 = vmatprep.subr.mxu0 0.0
  %347 = vmatpush1.msra.mxu0 %v178
  %348 = vmatprep.subr.mxu0 0.0
  %349 = vmatpush1.msra.mxu0 %v179
  %350 = vmatprep.subr.mxu0 0.0
  %351 = vmatpush1.msra.mxu0 %v180
  %352 = vmatprep.subr.mxu0 0.0
  %353 = vmatpush1.msra.mxu0 %v181
  %354 = vmatprep.subr.mxu0 0.0
  %355 = vmatpush1.msra.mxu0 %v182
  %356 = vmatprep.subr.mxu0 0.0
  %357 = vmatpush1.msra.mxu0 %v183
  %358 = vmatprep.subr.mxu0 0.0
  %359 = vmatpush1.msra.mxu0 %v184
  %360 = vmatprep.subr.mxu0 0.0
  %361 = vmatpush1.msra.mxu0 %v185
  %362 = vmatprep.subr.mxu0 0.0
  %363 = vmatpush1.msra.mxu0 %v186
  %364 = vmatprep.subr.mxu0 0.0
  %365 = vmatpush1.msra.mxu0 %v187
  %366 = vmatprep.subr.mxu0 0.0
  %367 = vmatpush1.msra.mxu0 %v188
  %368 = vmatprep.subr.mxu0 0.0
  %369 = vmatpush1.msra.mxu0 %v189
  %370 = vmatprep.subr.mxu0 0.0
  %371 = vmatpush1.msra.mxu0 %v190
  %372 = vmatprep.mubr.f32.mxu0 %v16
  %373 = vmatmul.mubr.f32.gmra.mrb[0].mxu0 %v15
  %v374 = vpop.f32.mrb[0].mxu0
  %v375 = vadd.f32 %v307, %v374
  %v376 = vpop.f32.mrb[0].mxu0
  %377 = vmatprep.mubr.f32.mxu0 %v25
  %378 = vmatmul.mubr.f32.gmra.mrb[0].mxu0 %v24
  %v379 = vpop.f32.mrb[0].mxu0
  %v380 = vadd.f32 %v307, %v379
  %v381 = vpop.f32.mrb[0].mxu0
  %382 = vmatprep.mubr.f32.mxu0 %v34
  %383 = vmatmul.mubr.f32.gmra.mrb[0].mxu0 %v33
  %v384 = vpop.f32.mrb[0].mxu0
  %v385 = vadd.f32 %v307, %v384
  %v386 = vpop.f32.mrb[0].mxu0
  %387 = vmatprep.mubr.f32.mxu0 %v43
  %388 = vmatmul.mubr.f32.gmra.mrb[0].mxu0 %v42
  %v389 = vpop.f32.mrb[0].mxu0
  %v390 = vadd.f32 %v307, %v389
  %v391 = vpop.f32.mrb[0].mxu0
  %392 = vmatprep.mubr.f32.mxu0 %v52
  %393 = vmatmul.mubr.f32.gmra.mrb[0].mxu0 %v51
  %v394 = vpop.f32.mrb[0].mxu0
  %v395 = vadd.f32 %v307, %v394
  %v396 = vpop.f32.mrb[0].mxu0
  %397 = vmatprep.mubr.f32.mxu0 %v61
  %398 = vmatmul.mubr.f32.gmra.mrb[0].mxu0 %v60
  %v399 = vpop.f32.mrb[0].mxu0
  %v400 = vadd.f32 %v307, %v399
  %v401 = vpop.f32.mrb[0].mxu0
  %402 = vmatprep.mubr.f32.mxu0 %v70
  %403 = vmatmul.mubr.f32.gmra.mrb[0].mxu0 %v69
  %v404 = vpop.f32.mrb[0].mxu0
  %v405 = vadd.f32 %v307, %v404
  %v406 = vpop.f32.mrb[0].mxu0
  %407 = vmatprep.mubr.f32.mxu0 %v79
  %408 = vmatmul.mubr.f32.gmra.mrb[0].mxu0 %v78
  %v409 = vpop.f32.mrb[0].mxu0
  %v410 = vadd.f32 %v307, %v409
  %v411 = vpop.f32.mrb[0].mxu0
  %412 = vmatprep.mubr.f32.mxu0 %v88
  %413 = vmatmul.mubr.f32.gmra.mrb[0].mxu0 %v87
  %v414 = vpop.f32.mrb[0].mxu0
  %v415 = vadd.f32 %v307, %v414
  %v416 = vpop.f32.mrb[0].mxu0
  %417 = vmatprep.mubr.f32.mxu0 %v97
  %418 = vmatmul.mubr.f32.gmra.mrb[0].mxu0 %v96
  %v419 = vpop.f32.mrb[0].mxu0
  %v420 = vadd.f32 %v307, %v419
  %v421 = vpop.f32.mrb[0].mxu0
  %422 = vmatprep.mubr.f32.mxu0 %v106
  %423 = vmatmul.mubr.f32.gmra.mrb[0].mxu0 %v105
  %v424 = vpop.f32.mrb[0].mxu0
  %v425 = vadd.f32 %v307, %v424
  %v426 = vpop.f32.mrb[0].mxu0
  %427 = vmatprep.mubr.f32.mxu0 %v115
  %428 = vmatmul.mubr.f32.gmra.mrb[0].mxu0 %v114
  %v429 = vpop.f32.mrb[0].mxu0
  %v430 = vadd.f32 %v307, %v429
  %v431 = vpop.f32.mrb[0].mxu0
  %432 = vmatprep.mubr.f32.mxu0 %v124
  %433 = vmatmul.mubr.f32.gmra.mrb[0].mxu0 %v123
  %v434 = vpop.f32.mrb[0].mxu0
  %v435 = vadd.f32 %v307, %v434
  %v436 = vpop.f32.mrb[0].mxu0
  %437 = vmatprep.mubr.f32.mxu0 %v133
  %438 = vmatmul.mubr.f32.gmra.mrb[0].mxu0 %v132
  %v439 = vpop.f32.mrb[0].mxu0
  %v440 = vadd.f32 %v307, %v439
  %v441 = vpop.f32.mrb[0].mxu0
  %442 = vmatprep.mubr.f32.mxu0 %v142
  %443 = vmatmul.mubr.f32.gmra.mrb[0].mxu0 %v141
  %v444 = vpop.f32.mrb[0].mxu0
  %v445 = vadd.f32 %v307, %v444
  %v446 = vpop.f32.mrb[0].mxu0
  %447 = vmatprep.mubr.f32.mxu0 %v151
  %448 = vmatmul.mubr.f32.gmra.mrb[0].mxu0 %v150
  %v449 = vpop.f32.mrb[0].mxu0
  %v450 = vadd.f32 %v307, %v449
  %v451 = vpop.f32.mrb[0].mxu0
  %452 = vdwg.mxu0
  %453 = vmatprep.subr.mxu0 0.0
  %454 = vmatpush1.msra.mxu0 %v191
  %455 = vmatprep.subr.mxu0 0.0
  %456 = vmatpush1.msra.mxu0 %v192
  %457 = vmatprep.subr.mxu0 0.0
  %458 = vmatpush1.msra.mxu0 %v193
  %459 = vmatprep.subr.mxu0 0.0
  %460 = vmatpush1.msra.mxu0 %v194
  %461 = vmatprep.subr.mxu0 0.0
  %462 = vmatpush1.msra.mxu0 %v195
  %463 = vmatprep.subr.mxu0 0.0
  %464 = vmatpush1.msra.mxu0 %v196
  %465 = vmatprep.subr.mxu0 0.0
  %466 = vmatpush1.msra.mxu0 %v197
  %467 = vmatprep.subr.mxu0 0.0
  %468 = vmatpush1.msra.mxu0 %v198
  %469 = vmatprep.subr.mxu0 0.0
  %470 = vmatpush1.msra.mxu0 %v199
  %471 = vmatprep.subr.mxu0 0.0
  %472 = vmatpush1.msra.mxu0 %v200
  %473 = vmatprep.subr.mxu0 0.0
  %474 = vmatpush1.msra.mxu0 %v201
  %475 = vmatprep.subr.mxu0 0.0
  %476 = vmatpush1.msra.mxu0 %v202
  %477 = vmatprep.subr.mxu0 0.0
  %478 = vmatpush1.msra.mxu0 %v203
  %479 = vmatprep.subr.mxu0 0.0
  %480 = vmatpush1.msra.mxu0 %v204
  %481 = vmatprep.subr.mxu0 0.0
  %482 = vmatpush1.msra.mxu0 %v205
  %483 = vmatprep.subr.mxu0 0.0
  %484 = vmatpush1.msra.mxu0 %v206
  %485 = vmatprep.subr.mxu0 0.0
  %486 = vmatpush1.msra.mxu0 %v207
  %487 = vmatprep.subr.mxu0 0.0
  %488 = vmatpush1.msra.mxu0 %v208
  %489 = vmatprep.subr.mxu0 0.0
  %490 = vmatpush1.msra.mxu0 %v209
  %491 = vmatprep.subr.mxu0 0.0
  %492 = vmatpush1.msra.mxu0 %v210
  %493 = vmatprep.subr.mxu0 0.0
  %494 = vmatpush1.msra.mxu0 %v211
  %495 = vmatprep.subr.mxu0 0.0
  %496 = vmatpush1.msra.mxu0 %v212
  %497 = vmatprep.subr.mxu0 0.0
  %498 = vmatpush1.msra.mxu0 %v213
  %499 = vmatprep.subr.mxu0 0.0
  %500 = vmatpush1.msra.mxu0 %v214
  %501 = vmatprep.subr.mxu0 0.0
  %502 = vmatpush1.msra.mxu0 %v215
  %503 = vmatprep.subr.mxu0 0.0
  %504 = vmatpush1.msra.mxu0 %v216
  %505 = vmatprep.subr.mxu0 0.0
  %506 = vmatpush1.msra.mxu0 %v217
  %507 = vmatprep.subr.mxu0 0.0
  %508 = vmatpush1.msra.mxu0 %v218
  %509 = vmatprep.subr.mxu0 0.0
  %510 = vmatpush1.msra.mxu0 %v219
  %511 = vmatprep.subr.mxu0 0.0
  %512 = vmatpush1.msra.mxu0 %v220
  %513 = vmatprep.subr.mxu0 0.0
  %514 = vmatpush1.msra.mxu0 %v221
  %515 = vmatprep.subr.mxu0 0.0
  %516 = vmatpush1.msra.mxu0 %v222
  %517 = vmatprep.mubr.f32.mxu0 %v18
  %518 = vmatmul.mubr.f32.gmra.mrb[0].mxu0 %v17
  %v519 = vpop.f32.mrb[0].mxu0
  %v520 = vadd.f32 %v375, %v519
  %v521 = vpop.f32.mrb[0].mxu0
  %522 = vmatprep.mubr.f32.mxu0 %v27
  %523 = vmatmul.mubr.f32.gmra.mrb[0].mxu0 %v26
  %v524 = vpop.f32.mrb[0].mxu0
  %v525 = vadd.f32 %v380, %v524
  %v526 = vpop.f32.mrb[0].mxu0
  %527 = vmatprep.mubr.f32.mxu0 %v36
  %528 = vmatmul.mubr.f32.gmra.mrb[0].mxu0 %v35
  %v529 = vpop.f32.mrb[0].mxu0
  %v530 = vadd.f32 %v385, %v529
  %v531 = vpop.f32.mrb[0].mxu0
  %532 = vmatprep.mubr.f32.mxu0 %v45
  %533 = vmatmul.mubr.f32.gmra.mrb[0].mxu0 %v44
  %v534 = vpop.f32.mrb[0].mxu0
  %v535 = vadd.f32 %v390, %v534
  %v536 = vpop.f32.mrb[0].mxu0
  %537 = vmatprep.mubr.f32.mxu0 %v54
  %538 = vmatmul.mubr.f32.gmra.mrb[0].mxu0 %v53
  %v539 = vpop.f32.mrb[0].mxu0
  %v540 = vadd.f32 %v395, %v539
  %v541 = vpop.f32.mrb[0].mxu0
  %542 = vmatprep.mubr.f32.mxu0 %v63
  %543 = vmatmul.mubr.f32.gmra.mrb[0].mxu0 %v62
  %v544 = vpop.f32.mrb[0].mxu0
  %v545 = vadd.f32 %v400, %v544
  %v546 = vpop.f32.mrb[0].mxu0
  %547 = vmatprep.mubr.f32.mxu0 %v72
  %548 = vmatmul.mubr.f32.gmra.mrb[0].mxu0 %v71
  %v549 = vpop.f32.mrb[0].mxu0
  %v550 = vadd.f32 %v405, %v549
  %v551 = vpop.f32.mrb[0].mxu0
  %552 = vmatprep.mubr.f32.mxu0 %v81
  %553 = vmatmul.mubr.f32.gmra.mrb[0].mxu0 %v80
  %v554 = vpop.f32.mrb[0].mxu0
  %v555 = vadd.f32 %v410, %v554
  %v556 = vpop.f32.mrb[0].mxu0
  %557 = vmatprep.mubr.f32.mxu0 %v90
  %558 = vmatmul.mubr.f32.gmra.mrb[0].mxu0 %v89
  %v559 = vpop.f32.mrb[0].mxu0
  %v560 = vadd.f32 %v415, %v559
  %v561 = vpop.f32.mrb[0].mxu0
  %562 = vmatprep.mubr.f32.mxu0 %v99
  %563 = vmatmul.mubr.f32.gmra.mrb[0].mxu0 %v98
  %v564 = vpop.f32.mrb[0].mxu0
  %v565 = vadd.f32 %v420, %v564
  %v566 = vpop.f32.mrb[0].mxu0
  %567 = vmatprep.mubr.f32.mxu0 %v108
  %568 = vmatmul.mubr.f32.gmra.mrb[0].mxu0 %v107
  %v569 = vpop.f32.mrb[0].mxu0
  %v570 = vadd.f32 %v425, %v569
  %v571 = vpop.f32.mrb[0].mxu0
  %572 = vmatprep.mubr.f32.mxu0 %v117
  %573 = vmatmul.mubr.f32.gmra.mrb[0].mxu0 %v116
  %v574 = vpop.f32.mrb[0].mxu0
  %v575 = vadd.f32 %v430, %v574
  %v576 = vpop.f32.mrb[0].mxu0
  %577 = vmatprep.mubr.f32.mxu0 %v126
  %578 = vmatmul.mubr.f32.gmra.mrb[0].mxu0 %v125
  %v579 = vpop.f32.mrb[0].mxu0
  %v580 = vadd.f32 %v435, %v579
  %v581 = vpop.f32.mrb[0].mxu0
  %582 = vmatprep.mubr.f32.mxu0 %v135
  %583 = vmatmul.mubr.f32.gmra.mrb[0].mxu0 %v134
  %v584 = vpop.f32.mrb[0].mxu0
  %v585 = vadd.f32 %v440, %v584
  %v586 = vpop.f32.mrb[0].mxu0
  %587 = vmatprep.mubr.f32.mxu0 %v144
  %588 = vmatmul.mubr.f32.gmra.mrb[0].mxu0 %v143
  %v589 = vpop.f32.mrb[0].mxu0
  %v590 = vadd.f32 %v445, %v589
  %v591 = vpop.f32.mrb[0].mxu0
  %592 = vmatprep.mubr.f32.mxu0 %v153
  %593 = vmatmul.mubr.f32.gmra.mrb[0].mxu0 %v152
  %v594 = vpop.f32.mrb[0].mxu0
  %v595 = vadd.f32 %v450, %v594
  %v596 = vpop.f32.mrb[0].mxu0
  %597 = vdwg.mxu0
  %598 = vmatprep.subr.mxu0 0.0
  %599 = vmatpush1.msra.mxu0 %v223
  %600 = vmatprep.subr.mxu0 0.0
  %601 = vmatpush1.msra.mxu0 %v224
  %602 = vmatprep.subr.mxu0 0.0
  %603 = vmatpush1.msra.mxu0 %v225
  %604 = vmatprep.subr.mxu0 0.0
  %605 = vmatpush1.msra.mxu0 %v226
  %606 = vmatprep.subr.mxu0 0.0
  %607 = vmatpush1.msra.mxu0 %v227
  %608 = vmatprep.subr.mxu0 0.0
  %609 = vmatpush1.msra.mxu0 %v228
  %610 = vmatprep.subr.mxu0 0.0
  %611 = vmatpush1.msra.mxu0 %v229
  %612 = vmatprep.subr.mxu0 0.0
  %613 = vmatpush1.msra.mxu0 %v230
  %614 = vmatprep.subr.mxu0 0.0
  %615 = vmatpush1.msra.mxu0 %v231
  %616 = vmatprep.subr.mxu0 0.0
  %617 = vmatpush1.msra.mxu0 %v232
  %618 = vmatprep.subr.mxu0 0.0
  %619 = vmatpush1.msra.mxu0 %v233
  %620 = vmatprep.subr.mxu0 0.0
  %621 = vmatpush1.msra.mxu0 %v234
  %622 = vmatprep.subr.mxu0 0.0
  %623 = vmatpush1.msra.mxu0 %v235
  %624 = vmatprep.subr.mxu0 0.0
  %625 = vmatpush1.msra.mxu0 %v236
  %626 = vmatprep.subr.mxu0 0.0
  %627 = vmatpush1.msra.mxu0 %v237
  %628 = vmatprep.subr.mxu0 0.0
  %629 = vmatpush1.msra.mxu0 %v238
  %630 = vmatprep.subr.mxu0 0.0
  %631 = vmatpush1.msra.mxu0 %v239
  %632 = vmatprep.subr.mxu0 0.0
  %633 = vmatpush1.msra.mxu0 %v240
  %634 = vmatprep.subr.mxu0 0.0
  %635 = vmatpush1.msra.mxu0 %v241
  %636 = vmatprep.subr.mxu0 0.0
  %637 = vmatpush1.msra.mxu0 %v242
  %638 = vmatprep.subr.mxu0 0.0
  %639 = vmatpush1.msra.mxu0 %v243
  %640 = vmatprep.subr.mxu0 0.0
  %641 = vmatpush1.msra.mxu0 %v244
  %642 = vmatprep.subr.mxu0 0.0
  %643 = vmatpush1.msra.mxu0 %v245
  %644 = vmatprep.subr.mxu0 0.0
  %645 = vmatpush1.msra.mxu0 %v246
  %646 = vmatprep.subr.mxu0 0.0
  %647 = vmatpush1.msra.mxu0 %v247
  %648 = vmatprep.subr.mxu0 0.0
  %649 = vmatpush1.msra.mxu0 %v248
  %650 = vmatprep.subr.mxu0 0.0
  %651 = vmatpush1.msra.mxu0 %v249
  %652 = vmatprep.subr.mxu0 0.0
  %653 = vmatpush1.msra.mxu0 %v250
  %654 = vmatprep.subr.mxu0 0.0
  %655 = vmatpush1.msra.mxu0 %v251
  %656 = vmatprep.subr.mxu0 0.0
  %657 = vmatpush1.msra.mxu0 %v252
  %658 = vmatprep.subr.mxu0 0.0
  %659 = vmatpush1.msra.mxu0 %v253
  %660 = vmatprep.subr.mxu0 0.0
  %661 = vmatpush1.msra.mxu0 %v254
  %662 = vmatprep.mubr.f32.mxu0 %v20
  %663 = vmatmul.mubr.f32.gmra.mrb[0].mxu0 %v19
  %v664 = vpop.f32.mrb[0].mxu0
  %v665 = vadd.f32 %v520, %v664
  %v666 = vpop.f32.mrb[0].mxu0
  %667 = vmatprep.mubr.f32.mxu0 %v29
  %668 = vmatmul.mubr.f32.gmra.mrb[0].mxu0 %v28
  %v669 = vpop.f32.mrb[0].mxu0
  %v670 = vadd.f32 %v525, %v669
  %v671 = vpop.f32.mrb[0].mxu0
  %672 = vmatprep.mubr.f32.mxu0 %v38
  %673 = vmatmul.mubr.f32.gmra.mrb[0].mxu0 %v37
  %v674 = vpop.f32.mrb[0].mxu0
  %v675 = vadd.f32 %v530, %v674
  %v676 = vpop.f32.mrb[0].mxu0
  %677 = vmatprep.mubr.f32.mxu0 %v47
  %678 = vmatmul.mubr.f32.gmra.mrb[0].mxu0 %v46
  %v679 = vpop.f32.mrb[0].mxu0
  %v680 = vadd.f32 %v535, %v679
  %v681 = vpop.f32.mrb[0].mxu0
  %682 = vmatprep.mubr.f32.mxu0 %v56
  %683 = vmatmul.mubr.f32.gmra.mrb[0].mxu0 %v55
  %v684 = vpop.f32.mrb[0].mxu0
  %v685 = vadd.f32 %v540, %v684
  %v686 = vpop.f32.mrb[0].mxu0
  %687 = vmatprep.mubr.f32.mxu0 %v65
  %688 = vmatmul.mubr.f32.gmra.mrb[0].mxu0 %v64
  %v689 = vpop.f32.mrb[0].mxu0
  %v690 = vadd.f32 %v545, %v689
  %v691 = vpop.f32.mrb[0].mxu0
  %692 = vmatprep.mubr.f32.mxu0 %v74
  %693 = vmatmul.mubr.f32.gmra.mrb[0].mxu0 %v73
  %v694 = vpop.f32.mrb[0].mxu0
  %v695 = vadd.f32 %v550, %v694
  %v696 = vpop.f32.mrb[0].mxu0
  %697 = vmatprep.mubr.f32.mxu0 %v83
  %698 = vmatmul.mubr.f32.gmra.mrb[0].mxu0 %v82
  %v699 = vpop.f32.mrb[0].mxu0
  %v700 = vadd.f32 %v555, %v699
  %v701 = vpop.f32.mrb[0].mxu0
  %702 = vmatprep.mubr.f32.mxu0 %v92
  %703 = vmatmul.mubr.f32.gmra.mrb[0].mxu0 %v91
  %v704 = vpop.f32.mrb[0].mxu0
  %v705 = vadd.f32 %v560, %v704
  %v706 = vpop.f32.mrb[0].mxu0
  %707 = vmatprep.mubr.f32.mxu0 %v101
  %708 = vmatmul.mubr.f32.gmra.mrb[0].mxu0 %v100
  %v709 = vpop.f32.mrb[0].mxu0
  %v710 = vadd.f32 %v565, %v709
  %v711 = vpop.f32.mrb[0].mxu0
  %712 = vmatprep.mubr.f32.mxu0 %v110
  %713 = vmatmul.mubr.f32.gmra.mrb[0].mxu0 %v109
  %v714 = vpop.f32.mrb[0].mxu0
  %v715 = vadd.f32 %v570, %v714
  %v716 = vpop.f32.mrb[0].mxu0
  %717 = vmatprep.mubr.f32.mxu0 %v119
  %718 = vmatmul.mubr.f32.gmra.mrb[0].mxu0 %v118
  %v719 = vpop.f32.mrb[0].mxu0
  %v720 = vadd.f32 %v575, %v719
  %v721 = vpop.f32.mrb[0].mxu0
  %722 = vmatprep.mubr.f32.mxu0 %v128
  %723 = vmatmul.mubr.f32.gmra.mrb[0].mxu0 %v127
  %v724 = vpop.f32.mrb[0].mxu0
  %v725 = vadd.f32 %v580, %v724
  %v726 = vpop.f32.mrb[0].mxu0
  %727 = vmatprep.mubr.f32.mxu0 %v137
  %728 = vmatmul.mubr.f32.gmra.mrb[0].mxu0 %v136
  %v729 = vpop.f32.mrb[0].mxu0
  %v730 = vadd.f32 %v585, %v729
  %v731 = vpop.f32.mrb[0].mxu0
  %732 = vmatprep.mubr.f32.mxu0 %v146
  %733 = vmatmul.mubr.f32.gmra.mrb[0].mxu0 %v145
  %v734 = vpop.f32.mrb[0].mxu0
  %v735 = vadd.f32 %v590, %v734
  %v736 = vpop.f32.mrb[0].mxu0
  %737 = vmatprep.mubr.f32.mxu0 %v155
  %738 = vmatmul.mubr.f32.gmra.mrb[0].mxu0 %v154
  %v739 = vpop.f32.mrb[0].mxu0
  %v740 = vadd.f32 %v595, %v739
  %v741 = vpop.f32.mrb[0].mxu0
  %742 = vdwg.mxu0
  %743 = vmatprep.subr.mxu0 0.0
  %744 = vmatpush1.msra.mxu0 %v255
  %745 = vmatprep.subr.mxu0 0.0
  %746 = vmatpush1.msra.mxu0 %v256
  %747 = vmatprep.subr.mxu0 0.0
  %748 = vmatpush1.msra.mxu0 %v257
  %749 = vmatprep.subr.mxu0 0.0
  %750 = vmatpush1.msra.mxu0 %v258
  %751 = vmatprep.subr.mxu0 0.0
  %752 = vmatpush1.msra.mxu0 %v259
  %753 = vmatprep.subr.mxu0 0.0
  %754 = vmatpush1.msra.mxu0 %v260
  %755 = vmatprep.subr.mxu0 0.0
  %756 = vmatpush1.msra.mxu0 %v261
  %757 = vmatprep.subr.mxu0 0.0
  %758 = vmatpush1.msra.mxu0 %v262
  %759 = vmatprep.subr.mxu0 0.0
  %760 = vmatpush1.msra.mxu0 %v263
  %761 = vmatprep.subr.mxu0 0.0
  %762 = vmatpush1.msra.mxu0 %v264
  %763 = vmatprep.subr.mxu0 0.0
  %764 = vmatpush1.msra.mxu0 %v265
  %765 = vmatprep.subr.mxu0 0.0
  %766 = vmatpush1.msra.mxu0 %v266
  %767 = vmatprep.subr.mxu0 0.0
  %768 = vmatpush1.msra.mxu0 %v267
  %769 = vmatprep.subr.mxu0 0.0
  %770 = vmatpush1.msra.mxu0 %v268
  %771 = vmatprep.subr.mxu0 0.0
  %772 = vmatpush1.msra.mxu0 %v269
  %773 = vmatprep.subr.mxu0 0.0
  %774 = vmatpush1.msra.mxu0 %v270
  %775 = vmatprep.subr.mxu0 0.0
  %776 = vmatpush1.msra.mxu0 %v271
  %777 = vmatprep.subr.mxu0 0.0
  %778 = vmatpush1.msra.mxu0 %v272
  %779 = vmatprep.subr.mxu0 0.0
  %780 = vmatpush1.msra.mxu0 %v273
  %781 = vmatprep.subr.mxu0 0.0
  %782 = vmatpush1.msra.mxu0 %v274
  %783 = vmatprep.subr.mxu0 0.0
  %784 = vmatpush1.msra.mxu0 %v275
  %785 = vmatprep.subr.mxu0 0.0
  %786 = vmatpush1.msra.mxu0 %v276
  %787 = vmatprep.subr.mxu0 0.0
  %788 = vmatpush1.msra.mxu0 %v277
  %789 = vmatprep.subr.mxu0 0.0
  %790 = vmatpush1.msra.mxu0 %v278
  %791 = vmatprep.subr.mxu0 0.0
  %792 = vmatpush1.msra.mxu0 %v279
  %793 = vmatprep.subr.mxu0 0.0
  %794 = vmatpush1.msra.mxu0 %v280
  %795 = vmatprep.subr.mxu0 0.0
  %796 = vmatpush1.msra.mxu0 %v281
  %797 = vmatprep.subr.mxu0 0.0
  %798 = vmatpush1.msra.mxu0 %v282
  %799 = vmatprep.subr.mxu0 0.0
  %800 = vmatpush1.msra.mxu0 %v283
  %801 = vmatprep.subr.mxu0 0.0
  %802 = vmatpush1.msra.mxu0 %v284
  %803 = vmatprep.subr.mxu0 0.0
  %804 = vmatpush1.msra.mxu0 %v285
  %805 = vmatprep.subr.mxu0 0.0
  %806 = vmatpush1.msra.mxu0 %v286
  %807 = vmatprep.mubr.f32.mxu0 %v22
  %808 = vmatmul.mubr.f32.gmra.mrb[0].mxu0 %v21
  %v809 = vpop.f32.mrb[0].mxu0
  %v810 = vadd.f32 %v665, %v809
  %v811 = vpop.f32.mrb[0].mxu0
  %812 = vmatprep.mubr.f32.mxu0 %v31
  %813 = vmatmul.mubr.f32.gmra.mrb[0].mxu0 %v30
  %v814 = vpop.f32.mrb[0].mxu0
  %v815 = vadd.f32 %v670, %v814
  %v816 = vpop.f32.mrb[0].mxu0
  %817 = vmatprep.mubr.f32.mxu0 %v40
  %818 = vmatmul.mubr.f32.gmra.mrb[0].mxu0 %v39
  %v819 = vpop.f32.mrb[0].mxu0
  %v820 = vadd.f32 %v675, %v819
  %v821 = vpop.f32.mrb[0].mxu0
  %822 = vmatprep.mubr.f32.mxu0 %v49
  %823 = vmatmul.mubr.f32.gmra.mrb[0].mxu0 %v48
  %v824 = vpop.f32.mrb[0].mxu0
  %v825 = vadd.f32 %v680, %v824
  %v826 = vpop.f32.mrb[0].mxu0
  %827 = vmatprep.mubr.f32.mxu0 %v58
  %828 = vmatmul.mubr.f32.gmra.mrb[0].mxu0 %v57
  %v829 = vpop.f32.mrb[0].mxu0
  %v830 = vadd.f32 %v685, %v829
  %v831 = vpop.f32.mrb[0].mxu0
  %832 = vmatprep.mubr.f32.mxu0 %v67
  %833 = vmatmul.mubr.f32.gmra.mrb[0].mxu0 %v66
  %v834 = vpop.f32.mrb[0].mxu0
  %v835 = vadd.f32 %v690, %v834
  %v836 = vpop.f32.mrb[0].mxu0
  %837 = vmatprep.mubr.f32.mxu0 %v76
  %838 = vmatmul.mubr.f32.gmra.mrb[0].mxu0 %v75
  %v839 = vpop.f32.mrb[0].mxu0
  %v840 = vadd.f32 %v695, %v839
  %v841 = vpop.f32.mrb[0].mxu0
  %842 = vmatprep.mubr.f32.mxu0 %v85
  %843 = vmatmul.mubr.f32.gmra.mrb[0].mxu0 %v84
  %v844 = vpop.f32.mrb[0].mxu0
  %v845 = vadd.f32 %v700, %v844
  %v846 = vpop.f32.mrb[0].mxu0
  %847 = vmatprep.mubr.f32.mxu0 %v94
  %848 = vmatmul.mubr.f32.gmra.mrb[0].mxu0 %v93
  %v849 = vpop.f32.mrb[0].mxu0
  %v850 = vadd.f32 %v705, %v849
  %v851 = vpop.f32.mrb[0].mxu0
  %852 = vmatprep.mubr.f32.mxu0 %v103
  %853 = vmatmul.mubr.f32.gmra.mrb[0].mxu0 %v102
  %v854 = vpop.f32.mrb[0].mxu0
  %v855 = vadd.f32 %v710, %v854
  %v856 = vpop.f32.mrb[0].mxu0
  %857 = vmatprep.mubr.f32.mxu0 %v112
  %858 = vmatmul.mubr.f32.gmra.mrb[0].mxu0 %v111
  %v859 = vpop.f32.mrb[0].mxu0
  %v860 = vadd.f32 %v715, %v859
  %v861 = vpop.f32.mrb[0].mxu0
  %862 = vmatprep.mubr.f32.mxu0 %v121
  %863 = vmatmul.mubr.f32.gmra.mrb[0].mxu0 %v120
  %v864 = vpop.f32.mrb[0].mxu0
  %v865 = vadd.f32 %v720, %v864
  %v866 = vpop.f32.mrb[0].mxu0
  %867 = vmatprep.mubr.f32.mxu0 %v130
  %868 = vmatmul.mubr.f32.gmra.mrb[0].mxu0 %v129
  %v869 = vpop.f32.mrb[0].mxu0
  %v870 = vadd.f32 %v725, %v869
  %v871 = vpop.f32.mrb[0].mxu0
  %872 = vmatprep.mubr.f32.mxu0 %v139
  %873 = vmatmul.mubr.f32.gmra.mrb[0].mxu0 %v138
  %v874 = vpop.f32.mrb[0].mxu0
  %v875 = vadd.f32 %v730, %v874
  %v876 = vpop.f32.mrb[0].mxu0
  %877 = vmatprep.mubr.f32.mxu0 %v148
  %878 = vmatmul.mubr.f32.gmra.mrb[0].mxu0 %v147
  %v879 = vpop.f32.mrb[0].mxu0
  %v880 = vadd.f32 %v735, %v879
  %v881 = vpop.f32.mrb[0].mxu0
  %882 = vmatprep.mubr.f32.mxu0 %v157
  %883 = vmatmul.mubr.f32.gmra.mrb[0].mxu0 %v156
  %v884 = vpop.f32.mrb[0].mxu0
  %v885 = vadd.f32 %v740, %v884
  %v886 = vpop.f32.mrb[0].mxu0
  %887 = vdwg.mxu0
  %888 = vmatprep.subr.mxu0 0.0
  %889 = vmatpush1.msra.mxu0 %v287
  %890 = vmatprep.subr.mxu0 0.0
  %891 = vmatpush1.msra.mxu0 %v288
  %892 = vmatprep.subr.mxu0 0.0
  %893 = vmatpush1.msra.mxu0 %v289
  %894 = vmatprep.subr.mxu0 0.0
  %895 = vmatpush1.msra.mxu0 %v290
  %896 = vmatprep.subr.mxu0 0.0
  %897 = vmatpush1.msra.mxu0 %v291
  %898 = vmatprep.subr.mxu0 0.0
  %899 = vmatpush1.msra.mxu0 %v292
  %900 = vmatprep.subr.mxu0 0.0
  %901 = vmatpush1.msra.mxu0 %v293
  %902 = vmatprep.subr.mxu0 0.0
  %903 = vmatpush1.msra.mxu0 %v294
  %904 = vmatprep.subr.mxu0 0.0
  %905 = vmatpush1.msra.mxu0 %v295
  %906 = vmatprep.subr.mxu0 0.0
  %907 = vmatpush1.msra.mxu0 %v296
  %908 = vmatprep.subr.mxu0 0.0
  %909 = vmatpush1.msra.mxu0 %v297
  %910 = vmatprep.subr.mxu0 0.0
  %911 = vmatpush1.msra.mxu0 %v298
  %912 = vmatprep.subr.mxu0 0.0
  %913 = vmatpush1.msra.mxu0 %v299
  %914 = vmatprep.subr.mxu0 0.0
  %915 = vmatpush1.msra.mxu0 %v300
  %916 = vmatprep.subr.mxu0 0.0
  %917 = vmatpush1.msra.mxu0 %v301
  %918 = vmatprep.subr.mxu0 0.0
  %919 = vmatpush1.msra.mxu0 %v302
  %920 = vmatprep.subr.mxu0 0.0
  %921 = vmatpush1.msra.mxu0 0.0
  %922 = vmatprep.subr.mxu0 0.0
  %923 = vmatpush1.msra.mxu0 0.0
  %924 = vmatprep.subr.mxu0 0.0
  %925 = vmatpush1.msra.mxu0 0.0
  %926 = vmatprep.subr.mxu0 0.0
  %927 = vmatpush1.msra.mxu0 0.0
  %928 = vmatprep.subr.mxu0 0.0
  %929 = vmatpush1.msra.mxu0 0.0
  %930 = vmatprep.subr.mxu0 0.0
  %931 = vmatpush1.msra.mxu0 0.0
  %932 = vmatprep.subr.mxu0 0.0
  %933 = vmatpush1.msra.mxu0 0.0
  %934 = vmatprep.subr.mxu0 0.0
  %935 = vmatpush1.msra.mxu0 0.0
  %936 = vmatprep.subr.mxu0 0.0
  %937 = vmatpush1.msra.mxu0 0.0
  %938 = vmatprep.subr.mxu0 0.0
  %939 = vmatpush1.msra.mxu0 0.0
  %940 = vmatprep.subr.mxu0 0.0
  %941 = vmatpush1.msra.mxu0 0.0
  %942 = vmatprep.subr.mxu0 0.0
  %943 = vmatpush1.msra.mxu0 0.0
  %944 = vmatprep.subr.mxu0 0.0
  %945 = vmatpush1.msra.mxu0 0.0
  %946 = vmatprep.subr.mxu0 0.0
  %947 = vmatpush1.msra.mxu0 0.0
  %948 = vmatprep.subr.mxu0 0.0
  %949 = vmatpush1.msra.mxu0 0.0
  %950 = vmatprep.subr.mxu0 0.0
  %951 = vmatpush1.msra.mxu0 0.0
  %952 = vmatprep.mubr.f32.mxu0 0.0
  %953 = vmatmul.mubr.f32.gmra.mrb[0].mxu0 %v23
  %v954 = vpop.f32.mrb[0].mxu0
  %v955 = vadd.f32 %v810, %v954
  %v956 = vpop.f32.mrb[0].mxu0
  %957 = vmatprep.mubr.f32.mxu0 0.0
  %958 = vmatmul.mubr.f32.gmra.mrb[0].mxu0 %v32
  %v959 = vpop.f32.mrb[0].mxu0
  %v960 = vadd.f32 %v815, %v959
  %v961 = vpop.f32.mrb[0].mxu0
  %962 = vmatprep.mubr.f32.mxu0 0.0
  %963 = vmatmul.mubr.f32.gmra.mrb[0].mxu0 %v41
  %v964 = vpop.f32.mrb[0].mxu0
  %v965 = vadd.f32 %v820, %v964
  %v966 = vpop.f32.mrb[0].mxu0
  %967 = vmatprep.mubr.f32.mxu0 0.0
  %968 = vmatmul.mubr.f32.gmra.mrb[0].mxu0 %v50
  %v969 = vpop.f32.mrb[0].mxu0
  %v970 = vadd.f32 %v825, %v969
  %v971 = vpop.f32.mrb[0].mxu0
  %972 = vmatprep.mubr.f32.mxu0 0.0
  %973 = vmatmul.mubr.f32.gmra.mrb[0].mxu0 %v59
  %v974 = vpop.f32.mrb[0].mxu0
  %v975 = vadd.f32 %v830, %v974
  %v976 = vpop.f32.mrb[0].mxu0
  %977 = vmatprep.mubr.f32.mxu0 0.0
  %978 = vmatmul.mubr.f32.gmra.mrb[0].mxu0 %v68
  %v979 = vpop.f32.mrb[0].mxu0
  %v980 = vadd.f32 %v835, %v979
  %v981 = vpop.f32.mrb[0].mxu0
  %982 = vmatprep.mubr.f32.mxu0 0.0
  %983 = vmatmul.mubr.f32.gmra.mrb[0].mxu0 %v77
  %v984 = vpop.f32.mrb[0].mxu0
  %v985 = vadd.f32 %v840, %v984
  %v986 = vpop.f32.mrb[0].mxu0
  %987 = vmatprep.mubr.f32.mxu0 0.0
  %988 = vmatmul.mubr.f32.gmra.mrb[0].mxu0 %v86
  %v989 = vpop.f32.mrb[0].mxu0
  %v990 = vadd.f32 %v845, %v989
  %v991 = vpop.f32.mrb[0].mxu0
  %992 = vmatprep.mubr.f32.mxu0 0.0
  %993 = vmatmul.mubr.f32.gmra.mrb[0].mxu0 %v95
  %v994 = vpop.f32.mrb[0].mxu0
  %v995 = vadd.f32 %v850, %v994
  %v996 = vpop.f32.mrb[0].mxu0
  %997 = vmatprep.mubr.f32.mxu0 0.0
  %998 = vmatmul.mubr.f32.gmra.mrb[0].mxu0 %v104
  %v999 = vpop.f32.mrb[0].mxu0
  %v1000 = vadd.f32 %v855, %v999
  %v1001 = vpop.f32.mrb[0].mxu0
  %1002 = vmatprep.mubr.f32.mxu0 0.0
  %1003 = vmatmul.mubr.f32.gmra.mrb[0].mxu0 %v113
  %v1004 = vpop.f32.mrb[0].mxu0
  %v1005 = vadd.f32 %v860, %v1004
  %v1006 = vpop.f32.mrb[0].mxu0
  %1007 = vmatprep.mubr.f32.mxu0 0.0
  %1008 = vmatmul.mubr.f32.gmra.mrb[0].mxu0 %v122
  %v1009 = vpop.f32.mrb[0].mxu0
  %v1010 = vadd.f32 %v865, %v1009
  %v1011 = vpop.f32.mrb[0].mxu0
  %1012 = vmatprep.mubr.f32.mxu0 0.0
  %1013 = vmatmul.mubr.f32.gmra.mrb[0].mxu0 %v131
  %v1014 = vpop.f32.mrb[0].mxu0
  %v1015 = vadd.f32 %v870, %v1014
  %v1016 = vpop.f32.mrb[0].mxu0
  %1017 = vmatprep.mubr.f32.mxu0 0.0
  %1018 = vmatmul.mubr.f32.gmra.mrb[0].mxu0 %v140
  %v1019 = vpop.f32.mrb[0].mxu0
  %v1020 = vadd.f32 %v875, %v1019
  %v1021 = vpop.f32.mrb[0].mxu0
  %1022 = vmatprep.mubr.f32.mxu0 0.0
  %1023 = vmatmul.mubr.f32.gmra.mrb[0].mxu0 %v149
  %v1024 = vpop.f32.mrb[0].mxu0
  %v1025 = vadd.f32 %v880, %v1024
  %v1026 = vpop.f32.mrb[0].mxu0
  %1027 = vmatprep.mubr.f32.mxu0 0.0
  %1028 = vmatmul.mubr.f32.gmra.mrb[0].mxu0 %v158
  %v1029 = vpop.f32.mrb[0].mxu0
  %v1030 = vadd.f32 %v885, %v1029
  %v1031 = vpop.f32.mrb[0].mxu0
  %1032 = vdwg.mxu0
  %s1033 = sld [smem:[#allocation2]]
  %vm1034 = vcmp.ge.f32.partialorder %v955, 0.0
  %vm1035 = vcmp.ge.f32.partialorder %v960, 0.0
  %vm1036 = vcmp.ge.f32.partialorder %v965, 0.0
  %vm1037 = vcmp.ge.f32.partialorder %v970, 0.0
  %vm1038 = vcmp.ge.f32.partialorder %v975, 0.0
  %vm1039 = vcmp.ge.f32.partialorder %v980, 0.0
  %vm1040 = vcmp.ge.f32.partialorder %v985, 0.0
  %vm1041 = vcmp.ge.f32.partialorder %v990, 0.0
  %vm1042 = vcmp.ge.f32.partialorder %v995, 0.0
  %vm1043 = vcmp.ge.f32.partialorder %v1000, 0.0
  %vm1044 = vcmp.ge.f32.partialorder %v1005, 0.0
  %vm1045 = vcmp.ge.f32.partialorder %v1010, 0.0
  %vm1046 = vcmp.ge.f32.partialorder %v1015, 0.0
  %vm1047 = vcmp.ge.f32.partialorder %v1020, 0.0
  %vm1048 = vcmp.ge.f32.partialorder %v1025, 0.0
  %vm1049 = vcmp.ge.f32.partialorder %v1030, 0.0
  %v1050 = vstv %s1033
  %v1051 = vmul.f32 %v1050, %v955
  %v1052 = vmul.f32 %v1050, %v960
  %v1053 = vmul.f32 %v1050, %v965
  %v1054 = vmul.f32 %v1050, %v970
  %v1055 = vmul.f32 %v1050, %v975
  %v1056 = vmul.f32 %v1050, %v980
  %v1057 = vmul.f32 %v1050, %v985
  %v1058 = vmul.f32 %v1050, %v990
  %v1059 = vmul.f32 %v1050, %v995
  %v1060 = vmul.f32 %v1050, %v1000
  %v1061 = vmul.f32 %v1050, %v1005
  %v1062 = vmul.f32 %v1050, %v1010
  %v1063 = vmul.f32 %v1050, %v1015
  %v1064 = vmul.f32 %v1050, %v1020
  %v1065 = vmul.f32 %v1050, %v1025
  %v1066 = vmul.f32 %v1050, %v1030
  %v1067 = vsel %vm1034, %v955, %v1051
  %v1068 = vsel %vm1035, %v960, %v1052
  %v1069 = vsel %vm1036, %v965, %v1053
  %v1070 = vsel %vm1037, %v970, %v1054
  %v1071 = vsel %vm1038, %v975, %v1055
  %v1072 = vsel %vm1039, %v980, %v1056
  %v1073 = vsel %vm1040, %v985, %v1057
  %v1074 = vsel %vm1041, %v990, %v1058
  %v1075 = vsel %vm1042, %v995, %v1059
  %v1076 = vsel %vm1043, %v1000, %v1060
  %v1077 = vsel %vm1044, %v1005, %v1061
  %v1078 = vsel %vm1045, %v1010, %v1062
  %v1079 = vsel %vm1046, %v1015, %v1063
  %v1080 = vsel %vm1047, %v1020, %v1064
  %v1081 = vsel %vm1048, %v1025, %v1065
  %v1082 = vsel %vm1049, %v1030, %v1066
  %1083 = vst [vmem:[%s3] sm:$0xff] %v1067
  %1084 = vst [vmem:[%s3 + $0x8] sm:$0xff] %v1068
  %1085 = vst [vmem:[%s3 + $0x10] sm:$0xff] %v1069
  %1086 = vst [vmem:[%s3 + $0x18] sm:$0xff] %v1070
  %1087 = vst [vmem:[%s3 + $0x20] sm:$0xff] %v1071
  %1088 = vst [vmem:[%s3 + $0x28] sm:$0xff] %v1072
  %1089 = vst [vmem:[%s3 + $0x30] sm:$0xff] %v1073
  %1090 = vst [vmem:[%s3 + $0x38] sm:$0xff] %v1074
  %1091 = vst [vmem:[%s3 + $0x40] sm:$0xff] %v1075
  %1092 = vst [vmem:[%s3 + $0x48] sm:$0xff] %v1076
  %1093 = vst [vmem:[%s3 + $0x50] sm:$0xff] %v1077
  %1094 = vst [vmem:[%s3 + $0x58] sm:$0xff] %v1078
  %1095 = vst [vmem:[%s3 + $0x60] sm:$0xff] %v1079
  %1096 = vst [vmem:[%s3 + $0x68] sm:$0xff] %v1080
  %1097 = vst [vmem:[%s3 + $0x70] sm:$0xff] %v1081
  %1098 = vst [vmem:[%s3 + $0x78] sm:$0xff] %v1082
  // Predicated region
  $region14: #{domain_adaption_forward.3} parent=0 // pred_check
    _
  $region15: #{domain_adaption_forward.3} parent=0 // pred_check_branch
    %1100 = sbr.rel (0) target = $region17
  $region16: #{domain_adaption_forward.3} parent=0 // pred_region
    _
  $region17: #{domain_adaption_forward.3} parent=0 // pred_fallthru
    _
  // Predicated region
  $region18: #{domain_adaption_forward.3} parent=0 // pred_check
    _
  $region19: #{domain_adaption_forward.3} parent=0 // pred_check_branch
    %1102 = sbr.rel (0) target = $region21
  $region20: #{domain_adaption_forward.3} parent=0 // pred_region
    _
  $region21: #{domain_adaption_forward.3} parent=0 // pred_fallthru
    _

// kernel: domain_adaption_forward.4
$region0: #{domain_adaption_forward.4}
  #allocation0 [shape = 'u32[]', space=smem, size = 0x4, offset = 0x4, fixed_abs, tag = 'smem constant byte address 0x4 - core index']
  #allocation1 [shape = 'u32[144,128]{1,0:T(1,128)}', space=vmem, size = 0x12000, scoped, tag = 'internal scratch']
  #allocation2 [shape = 'f32[1]{0:T(128)S(6)}', space=smem, size = 0x200, scoped, tag = 'scoped memory for domain_adaption_forward.4']
  %s0 = inlined_call_operand.vmem [shape: f32[128,1152], index: 0, kind: input, shape index: {}]
  %s1 = inlined_call_operand.vmem [shape: f32[1153,128], index: 1, kind: input, shape index: {}]
  %s2 = inlined_call_operand.<no memory space> [shape: f32[1], index: 2, kind: input, shape index: {}]
  %s3 = inlined_call_operand.vmem [shape: f32[128,128], index: 3, kind: output, shape index: {}]
  %s4 = sld [smem:[#allocation0]]
  $region22: #{domain_adaption_forward.4} parent=0
    _
  %s6 = ssub.s32 1, %s4
  %s7 = scalar_select 0, %s6, %s4
  %8 = sst [smem:[#allocation2]] %s2
  // Predicated region
  $region2: #{domain_adaption_forward.4} parent=0 // pred_check
    _
  $region3: #{domain_adaption_forward.4} parent=0 // pred_check_branch
    %10 = sbr.rel (0) target = $region5
  $region4: #{domain_adaption_forward.4} parent=0 // pred_region
    _
  $region5: #{domain_adaption_forward.4} parent=0 // pred_fallthru
    _
  // Predicated region
  $region6: #{domain_adaption_forward.4} parent=0 // pred_check
    _
  $region7: #{domain_adaption_forward.4} parent=0 // pred_check_branch
    %12 = sbr.rel (0) target = $region9
  $region8: #{domain_adaption_forward.4} parent=0 // pred_region
    _
  $region9: #{domain_adaption_forward.4} parent=0 // pred_fallthru
    _
  // Predicated region
  $region10: #{domain_adaption_forward.4} parent=0 // pred_check
    _
  $region11: #{domain_adaption_forward.4} parent=0 // pred_check_branch
    %14 = sbr.rel (0) target = $region13
  $region12: #{domain_adaption_forward.4} parent=0 // pred_region
    _
  $region13: #{domain_adaption_forward.4} parent=0 // pred_fallthru
    _
  %v15 = vld [vmem:[%s0] sm:$0xff]
  %v16 = vld [vmem:[%s0 + $0x8] sm:$0xff]
  %v17 = vld [vmem:[%s0 + $0x10] sm:$0xff]
  %v18 = vld [vmem:[%s0 + $0x18] sm:$0xff]
  %v19 = vld [vmem:[%s0 + $0x20] sm:$0xff]
  %v20 = vld [vmem:[%s0 + $0x28] sm:$0xff]
  %v21 = vld [vmem:[%s0 + $0x30] sm:$0xff]
  %v22 = vld [vmem:[%s0 + $0x38] sm:$0xff]
  %v23 = vld [vmem:[%s0 + $0x40] sm:$0xff]
  %v24 = vld [vmem:[%s0 + $0x48] sm:$0xff]
  %v25 = vld [vmem:[%s0 + $0x50] sm:$0xff]
  %v26 = vld [vmem:[%s0 + $0x58] sm:$0xff]
  %v27 = vld [vmem:[%s0 + $0x60] sm:$0xff]
  %v28 = vld [vmem:[%s0 + $0x68] sm:$0xff]
  %v29 = vld [vmem:[%s0 + $0x70] sm:$0xff]
  %v30 = vld [vmem:[%s0 + $0x78] sm:$0xff]
  %v31 = vld [vmem:[%s0 + $0x80] sm:$0xff]
  %v32 = vld [vmem:[%s0 + $0x88] sm:$0xff]
  %v33 = vld [vmem:[%s0 + $0x90] sm:$0xff]
  %v34 = vld [vmem:[%s0 + $0x98] sm:$0xff]
  %v35 = vld [vmem:[%s0 + $0xa0] sm:$0xff]
  %v36 = vld [vmem:[%s0 + $0xa8] sm:$0xff]
  %v37 = vld [vmem:[%s0 + $0xb0] sm:$0xff]
  %v38 = vld [vmem:[%s0 + $0xb8] sm:$0xff]
  %v39 = vld [vmem:[%s0 + $0xc0] sm:$0xff]
  %v40 = vld [vmem:[%s0 + $0xc8] sm:$0xff]
  %v41 = vld [vmem:[%s0 + $0xd0] sm:$0xff]
  %v42 = vld [vmem:[%s0 + $0xd8] sm:$0xff]
  %v43 = vld [vmem:[%s0 + $0xe0] sm:$0xff]
  %v44 = vld [vmem:[%s0 + $0xe8] sm:$0xff]
  %v45 = vld [vmem:[%s0 + $0xf0] sm:$0xff]
  %v46 = vld [vmem:[%s0 + $0xf8] sm:$0xff]
  %v47 = vld [vmem:[%s0 + $0x100] sm:$0xff]
  %v48 = vld [vmem:[%s0 + $0x108] sm:$0xff]
  %v49 = vld [vmem:[%s0 + $0x110] sm:$0xff]
  %v50 = vld [vmem:[%s0 + $0x118] sm:$0xff]
  %v51 = vld [vmem:[%s0 + $0x120] sm:$0xff]
  %v52 = vld [vmem:[%s0 + $0x128] sm:$0xff]
  %v53 = vld [vmem:[%s0 + $0x130] sm:$0xff]
  %v54 = vld [vmem:[%s0 + $0x138] sm:$0xff]
  %v55 = vld [vmem:[%s0 + $0x140] sm:$0xff]
  %v56 = vld [vmem:[%s0 + $0x148] sm:$0xff]
  %v57 = vld [vmem:[%s0 + $0x150] sm:$0xff]
  %v58 = vld [vmem:[%s0 + $0x158] sm:$0xff]
  %v59 = vld [vmem:[%s0 + $0x160] sm:$0xff]
  %v60 = vld [vmem:[%s0 + $0x168] sm:$0xff]
  %v61 = vld [vmem:[%s0 + $0x170] sm:$0xff]
  %v62 = vld [vmem:[%s0 + $0x178] sm:$0xff]
  %v63 = vld [vmem:[%s0 + $0x180] sm:$0xff]
  %v64 = vld [vmem:[%s0 + $0x188] sm:$0xff]
  %v65 = vld [vmem:[%s0 + $0x190] sm:$0xff]
  %v66 = vld [vmem:[%s0 + $0x198] sm:$0xff]
  %v67 = vld [vmem:[%s0 + $0x1a0] sm:$0xff]
  %v68 = vld [vmem:[%s0 + $0x1a8] sm:$0xff]
  %v69 = vld [vmem:[%s0 + $0x1b0] sm:$0xff]
  %v70 = vld [vmem:[%s0 + $0x1b8] sm:$0xff]
  %v71 = vld [vmem:[%s0 + $0x1c0] sm:$0xff]
  %v72 = vld [vmem:[%s0 + $0x1c8] sm:$0xff]
  %v73 = vld [vmem:[%s0 + $0x1d0] sm:$0xff]
  %v74 = vld [vmem:[%s0 + $0x1d8] sm:$0xff]
  %v75 = vld [vmem:[%s0 + $0x1e0] sm:$0xff]
  %v76 = vld [vmem:[%s0 + $0x1e8] sm:$0xff]
  %v77 = vld [vmem:[%s0 + $0x1f0] sm:$0xff]
  %v78 = vld [vmem:[%s0 + $0x1f8] sm:$0xff]
  %v79 = vld [vmem:[%s0 + $0x200] sm:$0xff]
  %v80 = vld [vmem:[%s0 + $0x208] sm:$0xff]
  %v81 = vld [vmem:[%s0 + $0x210] sm:$0xff]
  %v82 = vld [vmem:[%s0 + $0x218] sm:$0xff]
  %v83 = vld [vmem:[%s0 + $0x220] sm:$0xff]
  %v84 = vld [vmem:[%s0 + $0x228] sm:$0xff]
  %v85 = vld [vmem:[%s0 + $0x230] sm:$0xff]
  %v86 = vld [vmem:[%s0 + $0x238] sm:$0xff]
  %v87 = vld [vmem:[%s0 + $0x240] sm:$0xff]
  %v88 = vld [vmem:[%s0 + $0x248] sm:$0xff]
  %v89 = vld [vmem:[%s0 + $0x250] sm:$0xff]
  %v90 = vld [vmem:[%s0 + $0x258] sm:$0xff]
  %v91 = vld [vmem:[%s0 + $0x260] sm:$0xff]
  %v92 = vld [vmem:[%s0 + $0x268] sm:$0xff]
  %v93 = vld [vmem:[%s0 + $0x270] sm:$0xff]
  %v94 = vld [vmem:[%s0 + $0x278] sm:$0xff]
  %v95 = vld [vmem:[%s0 + $0x280] sm:$0xff]
  %v96 = vld [vmem:[%s0 + $0x288] sm:$0xff]
  %v97 = vld [vmem:[%s0 + $0x290] sm:$0xff]
  %v98 = vld [vmem:[%s0 + $0x298] sm:$0xff]
  %v99 = vld [vmem:[%s0 + $0x2a0] sm:$0xff]
  %v100 = vld [vmem:[%s0 + $0x2a8] sm:$0xff]
  %v101 = vld [vmem:[%s0 + $0x2b0] sm:$0xff]
  %v102 = vld [vmem:[%s0 + $0x2b8] sm:$0xff]
  %v103 = vld [vmem:[%s0 + $0x2c0] sm:$0xff]
  %v104 = vld [vmem:[%s0 + $0x2c8] sm:$0xff]
  %v105 = vld [vmem:[%s0 + $0x2d0] sm:$0xff]
  %v106 = vld [vmem:[%s0 + $0x2d8] sm:$0xff]
  %v107 = vld [vmem:[%s0 + $0x2e0] sm:$0xff]
  %v108 = vld [vmem:[%s0 + $0x2e8] sm:$0xff]
  %v109 = vld [vmem:[%s0 + $0x2f0] sm:$0xff]
  %v110 = vld [vmem:[%s0 + $0x2f8] sm:$0xff]
  %v111 = vld [vmem:[%s0 + $0x300] sm:$0xff]
  %v112 = vld [vmem:[%s0 + $0x308] sm:$0xff]
  %v113 = vld [vmem:[%s0 + $0x310] sm:$0xff]
  %v114 = vld [vmem:[%s0 + $0x318] sm:$0xff]
  %v115 = vld [vmem:[%s0 + $0x320] sm:$0xff]
  %v116 = vld [vmem:[%s0 + $0x328] sm:$0xff]
  %v117 = vld [vmem:[%s0 + $0x330] sm:$0xff]
  %v118 = vld [vmem:[%s0 + $0x338] sm:$0xff]
  %v119 = vld [vmem:[%s0 + $0x340] sm:$0xff]
  %v120 = vld [vmem:[%s0 + $0x348] sm:$0xff]
  %v121 = vld [vmem:[%s0 + $0x350] sm:$0xff]
  %v122 = vld [vmem:[%s0 + $0x358] sm:$0xff]
  %v123 = vld [vmem:[%s0 + $0x360] sm:$0xff]
  %v124 = vld [vmem:[%s0 + $0x368] sm:$0xff]
  %v125 = vld [vmem:[%s0 + $0x370] sm:$0xff]
  %v126 = vld [vmem:[%s0 + $0x378] sm:$0xff]
  %v127 = vld [vmem:[%s0 + $0x380] sm:$0xff]
  %v128 = vld [vmem:[%s0 + $0x388] sm:$0xff]
  %v129 = vld [vmem:[%s0 + $0x390] sm:$0xff]
  %v130 = vld [vmem:[%s0 + $0x398] sm:$0xff]
  %v131 = vld [vmem:[%s0 + $0x3a0] sm:$0xff]
  %v132 = vld [vmem:[%s0 + $0x3a8] sm:$0xff]
  %v133 = vld [vmem:[%s0 + $0x3b0] sm:$0xff]
  %v134 = vld [vmem:[%s0 + $0x3b8] sm:$0xff]
  %v135 = vld [vmem:[%s0 + $0x3c0] sm:$0xff]
  %v136 = vld [vmem:[%s0 + $0x3c8] sm:$0xff]
  %v137 = vld [vmem:[%s0 + $0x3d0] sm:$0xff]
  %v138 = vld [vmem:[%s0 + $0x3d8] sm:$0xff]
  %v139 = vld [vmem:[%s0 + $0x3e0] sm:$0xff]
  %v140 = vld [vmem:[%s0 + $0x3e8] sm:$0xff]
  %v141 = vld [vmem:[%s0 + $0x3f0] sm:$0xff]
  %v142 = vld [vmem:[%s0 + $0x3f8] sm:$0xff]
  %v143 = vld [vmem:[%s0 + $0x400] sm:$0xff]
  %v144 = vld [vmem:[%s0 + $0x408] sm:$0xff]
  %v145 = vld [vmem:[%s0 + $0x410] sm:$0xff]
  %v146 = vld [vmem:[%s0 + $0x418] sm:$0xff]
  %v147 = vld [vmem:[%s0 + $0x420] sm:$0xff]
  %v148 = vld [vmem:[%s0 + $0x428] sm:$0xff]
  %v149 = vld [vmem:[%s0 + $0x430] sm:$0xff]
  %v150 = vld [vmem:[%s0 + $0x438] sm:$0xff]
  %v151 = vld [vmem:[%s0 + $0x440] sm:$0xff]
  %v152 = vld [vmem:[%s0 + $0x448] sm:$0xff]
  %v153 = vld [vmem:[%s0 + $0x450] sm:$0xff]
  %v154 = vld [vmem:[%s0 + $0x458] sm:$0xff]
  %v155 = vld [vmem:[%s0 + $0x460] sm:$0xff]
  %v156 = vld [vmem:[%s0 + $0x468] sm:$0xff]
  %v157 = vld [vmem:[%s0 + $0x470] sm:$0xff]
  %v158 = vld [vmem:[%s0 + $0x478] sm:$0xff]
  %v159 = vld [vmem:[%s1] sm:$0xff]
  %v160 = vld [vmem:[%s1 + $0x8] sm:$0xff]
  %v161 = vld [vmem:[%s1 + $0x10] sm:$0xff]
  %v162 = vld [vmem:[%s1 + $0x18] sm:$0xff]
  %v163 = vld [vmem:[%s1 + $0x20] sm:$0xff]
  %v164 = vld [vmem:[%s1 + $0x28] sm:$0xff]
  %v165 = vld [vmem:[%s1 + $0x30] sm:$0xff]
  %v166 = vld [vmem:[%s1 + $0x38] sm:$0xff]
  %v167 = vld [vmem:[%s1 + $0x40] sm:$0xff]
  %v168 = vld [vmem:[%s1 + $0x48] sm:$0xff]
  %v169 = vld [vmem:[%s1 + $0x50] sm:$0xff]
  %v170 = vld [vmem:[%s1 + $0x58] sm:$0xff]
  %v171 = vld [vmem:[%s1 + $0x60] sm:$0xff]
  %v172 = vld [vmem:[%s1 + $0x68] sm:$0xff]
  %v173 = vld [vmem:[%s1 + $0x70] sm:$0xff]
  %v174 = vld [vmem:[%s1 + $0x78] sm:$0xff]
  %v175 = vld [vmem:[%s1 + $0x80] sm:$0xff]
  %v176 = vld [vmem:[%s1 + $0x88] sm:$0xff]
  %v177 = vld [vmem:[%s1 + $0x90] sm:$0xff]
  %v178 = vld [vmem:[%s1 + $0x98] sm:$0xff]
  %v179 = vld [vmem:[%s1 + $0xa0] sm:$0xff]
  %v180 = vld [vmem:[%s1 + $0xa8] sm:$0xff]
  %v181 = vld [vmem:[%s1 + $0xb0] sm:$0xff]
  %v182 = vld [vmem:[%s1 + $0xb8] sm:$0xff]
  %v183 = vld [vmem:[%s1 + $0xc0] sm:$0xff]
  %v184 = vld [vmem:[%s1 + $0xc8] sm:$0xff]
  %v185 = vld [vmem:[%s1 + $0xd0] sm:$0xff]
  %v186 = vld [vmem:[%s1 + $0xd8] sm:$0xff]
  %v187 = vld [vmem:[%s1 + $0xe0] sm:$0xff]
  %v188 = vld [vmem:[%s1 + $0xe8] sm:$0xff]
  %v189 = vld [vmem:[%s1 + $0xf0] sm:$0xff]
  %v190 = vld [vmem:[%s1 + $0xf8] sm:$0xff]
  %v191 = vld [vmem:[%s1 + $0x100] sm:$0xff]
  %v192 = vld [vmem:[%s1 + $0x108] sm:$0xff]
  %v193 = vld [vmem:[%s1 + $0x110] sm:$0xff]
  %v194 = vld [vmem:[%s1 + $0x118] sm:$0xff]
  %v195 = vld [vmem:[%s1 + $0x120] sm:$0xff]
  %v196 = vld [vmem:[%s1 + $0x128] sm:$0xff]
  %v197 = vld [vmem:[%s1 + $0x130] sm:$0xff]
  %v198 = vld [vmem:[%s1 + $0x138] sm:$0xff]
  %v199 = vld [vmem:[%s1 + $0x140] sm:$0xff]
  %v200 = vld [vmem:[%s1 + $0x148] sm:$0xff]
  %v201 = vld [vmem:[%s1 + $0x150] sm:$0xff]
  %v202 = vld [vmem:[%s1 + $0x158] sm:$0xff]
  %v203 = vld [vmem:[%s1 + $0x160] sm:$0xff]
  %v204 = vld [vmem:[%s1 + $0x168] sm:$0xff]
  %v205 = vld [vmem:[%s1 + $0x170] sm:$0xff]
  %v206 = vld [vmem:[%s1 + $0x178] sm:$0xff]
  %v207 = vld [vmem:[%s1 + $0x180] sm:$0xff]
  %v208 = vld [vmem:[%s1 + $0x188] sm:$0xff]
  %v209 = vld [vmem:[%s1 + $0x190] sm:$0xff]
  %v210 = vld [vmem:[%s1 + $0x198] sm:$0xff]
  %v211 = vld [vmem:[%s1 + $0x1a0] sm:$0xff]
  %v212 = vld [vmem:[%s1 + $0x1a8] sm:$0xff]
  %v213 = vld [vmem:[%s1 + $0x1b0] sm:$0xff]
  %v214 = vld [vmem:[%s1 + $0x1b8] sm:$0xff]
  %v215 = vld [vmem:[%s1 + $0x1c0] sm:$0xff]
  %v216 = vld [vmem:[%s1 + $0x1c8] sm:$0xff]
  %v217 = vld [vmem:[%s1 + $0x1d0] sm:$0xff]
  %v218 = vld [vmem:[%s1 + $0x1d8] sm:$0xff]
  %v219 = vld [vmem:[%s1 + $0x1e0] sm:$0xff]
  %v220 = vld [vmem:[%s1 + $0x1e8] sm:$0xff]
  %v221 = vld [vmem:[%s1 + $0x1f0] sm:$0xff]
  %v222 = vld [vmem:[%s1 + $0x1f8] sm:$0xff]
  %v223 = vld [vmem:[%s1 + $0x200] sm:$0xff]
  %v224 = vld [vmem:[%s1 + $0x208] sm:$0xff]
  %v225 = vld [vmem:[%s1 + $0x210] sm:$0xff]
  %v226 = vld [vmem:[%s1 + $0x218] sm:$0xff]
  %v227 = vld [vmem:[%s1 + $0x220] sm:$0xff]
  %v228 = vld [vmem:[%s1 + $0x228] sm:$0xff]
  %v229 = vld [vmem:[%s1 + $0x230] sm:$0xff]
  %v230 = vld [vmem:[%s1 + $0x238] sm:$0xff]
  %v231 = vld [vmem:[%s1 + $0x240] sm:$0xff]
  %v232 = vld [vmem:[%s1 + $0x248] sm:$0xff]
  %v233 = vld [vmem:[%s1 + $0x250] sm:$0xff]
  %v234 = vld [vmem:[%s1 + $0x258] sm:$0xff]
  %v235 = vld [vmem:[%s1 + $0x260] sm:$0xff]
  %v236 = vld [vmem:[%s1 + $0x268] sm:$0xff]
  %v237 = vld [vmem:[%s1 + $0x270] sm:$0xff]
  %v238 = vld [vmem:[%s1 + $0x278] sm:$0xff]
  %v239 = vld [vmem:[%s1 + $0x280] sm:$0xff]
  %v240 = vld [vmem:[%s1 + $0x288] sm:$0xff]
  %v241 = vld [vmem:[%s1 + $0x290] sm:$0xff]
  %v242 = vld [vmem:[%s1 + $0x298] sm:$0xff]
  %v243 = vld [vmem:[%s1 + $0x2a0] sm:$0xff]
  %v244 = vld [vmem:[%s1 + $0x2a8] sm:$0xff]
  %v245 = vld [vmem:[%s1 + $0x2b0] sm:$0xff]
  %v246 = vld [vmem:[%s1 + $0x2b8] sm:$0xff]
  %v247 = vld [vmem:[%s1 + $0x2c0] sm:$0xff]
  %v248 = vld [vmem:[%s1 + $0x2c8] sm:$0xff]
  %v249 = vld [vmem:[%s1 + $0x2d0] sm:$0xff]
  %v250 = vld [vmem:[%s1 + $0x2d8] sm:$0xff]
  %v251 = vld [vmem:[%s1 + $0x2e0] sm:$0xff]
  %v252 = vld [vmem:[%s1 + $0x2e8] sm:$0xff]
  %v253 = vld [vmem:[%s1 + $0x2f0] sm:$0xff]
  %v254 = vld [vmem:[%s1 + $0x2f8] sm:$0xff]
  %v255 = vld [vmem:[%s1 + $0x300] sm:$0xff]
  %v256 = vld [vmem:[%s1 + $0x308] sm:$0xff]
  %v257 = vld [vmem:[%s1 + $0x310] sm:$0xff]
  %v258 = vld [vmem:[%s1 + $0x318] sm:$0xff]
  %v259 = vld [vmem:[%s1 + $0x320] sm:$0xff]
  %v260 = vld [vmem:[%s1 + $0x328] sm:$0xff]
  %v261 = vld [vmem:[%s1 + $0x330] sm:$0xff]
  %v262 = vld [vmem:[%s1 + $0x338] sm:$0xff]
  %v263 = vld [vmem:[%s1 + $0x340] sm:$0xff]
  %v264 = vld [vmem:[%s1 + $0x348] sm:$0xff]
  %v265 = vld [vmem:[%s1 + $0x350] sm:$0xff]
  %v266 = vld [vmem:[%s1 + $0x358] sm:$0xff]
  %v267 = vld [vmem:[%s1 + $0x360] sm:$0xff]
  %v268 = vld [vmem:[%s1 + $0x368] sm:$0xff]
  %v269 = vld [vmem:[%s1 + $0x370] sm:$0xff]
  %v270 = vld [vmem:[%s1 + $0x378] sm:$0xff]
  %v271 = vld [vmem:[%s1 + $0x380] sm:$0xff]
  %v272 = vld [vmem:[%s1 + $0x388] sm:$0xff]
  %v273 = vld [vmem:[%s1 + $0x390] sm:$0xff]
  %v274 = vld [vmem:[%s1 + $0x398] sm:$0xff]
  %v275 = vld [vmem:[%s1 + $0x3a0] sm:$0xff]
  %v276 = vld [vmem:[%s1 + $0x3a8] sm:$0xff]
  %v277 = vld [vmem:[%s1 + $0x3b0] sm:$0xff]
  %v278 = vld [vmem:[%s1 + $0x3b8] sm:$0xff]
  %v279 = vld [vmem:[%s1 + $0x3c0] sm:$0xff]
  %v280 = vld [vmem:[%s1 + $0x3c8] sm:$0xff]
  %v281 = vld [vmem:[%s1 + $0x3d0] sm:$0xff]
  %v282 = vld [vmem:[%s1 + $0x3d8] sm:$0xff]
  %v283 = vld [vmem:[%s1 + $0x3e0] sm:$0xff]
  %v284 = vld [vmem:[%s1 + $0x3e8] sm:$0xff]
  %v285 = vld [vmem:[%s1 + $0x3f0] sm:$0xff]
  %v286 = vld [vmem:[%s1 + $0x3f8] sm:$0xff]
  %v287 = vld [vmem:[%s1 + $0x400] sm:$0xff]
  %v288 = vld [vmem:[%s1 + $0x408] sm:$0xff]
  %v289 = vld [vmem:[%s1 + $0x410] sm:$0xff]
  %v290 = vld [vmem:[%s1 + $0x418] sm:$0xff]
  %v291 = vld [vmem:[%s1 + $0x420] sm:$0xff]
  %v292 = vld [vmem:[%s1 + $0x428] sm:$0xff]
  %v293 = vld [vmem:[%s1 + $0x430] sm:$0xff]
  %v294 = vld [vmem:[%s1 + $0x438] sm:$0xff]
  %v295 = vld [vmem:[%s1 + $0x440] sm:$0xff]
  %v296 = vld [vmem:[%s1 + $0x448] sm:$0xff]
  %v297 = vld [vmem:[%s1 + $0x450] sm:$0xff]
  %v298 = vld [vmem:[%s1 + $0x458] sm:$0xff]
  %v299 = vld [vmem:[%s1 + $0x460] sm:$0xff]
  %v300 = vld [vmem:[%s1 + $0x468] sm:$0xff]
  %v301 = vld [vmem:[%s1 + $0x470] sm:$0xff]
  %v302 = vld [vmem:[%s1 + $0x478] sm:$0xff]
  %v303 = vld [vmem:[%s1 + $0x480] sm:$0x1]
  %v304 = vlaneseq
  %v305 = vshrl.u32 %v304, 7
  %v306 = vsub.s32 0, %v305
  %v307 = vrot.slane %v303, %v306
  %308 = vmatprep.subr.mxu0 0.0
  %309 = vmatpush1.msra.mxu0 %v159
  %310 = vmatprep.subr.mxu0 0.0
  %311 = vmatpush1.msra.mxu0 %v160
  %312 = vmatprep.subr.mxu0 0.0
  %313 = vmatpush1.msra.mxu0 %v161
  %314 = vmatprep.subr.mxu0 0.0
  %315 = vmatpush1.msra.mxu0 %v162
  %316 = vmatprep.subr.mxu0 0.0
  %317 = vmatpush1.msra.mxu0 %v163
  %318 = vmatprep.subr.mxu0 0.0
  %319 = vmatpush1.msra.mxu0 %v164
  %320 = vmatprep.subr.mxu0 0.0
  %321 = vmatpush1.msra.mxu0 %v165
  %322 = vmatprep.subr.mxu0 0.0
  %323 = vmatpush1.msra.mxu0 %v166
  %324 = vmatprep.subr.mxu0 0.0
  %325 = vmatpush1.msra.mxu0 %v167
  %326 = vmatprep.subr.mxu0 0.0
  %327 = vmatpush1.msra.mxu0 %v168
  %328 = vmatprep.subr.mxu0 0.0
  %329 = vmatpush1.msra.mxu0 %v169
  %330 = vmatprep.subr.mxu0 0.0
  %331 = vmatpush1.msra.mxu0 %v170
  %332 = vmatprep.subr.mxu0 0.0
  %333 = vmatpush1.msra.mxu0 %v171
  %334 = vmatprep.subr.mxu0 0.0
  %335 = vmatpush1.msra.mxu0 %v172
  %336 = vmatprep.subr.mxu0 0.0
  %337 = vmatpush1.msra.mxu0 %v173
  %338 = vmatprep.subr.mxu0 0.0
  %339 = vmatpush1.msra.mxu0 %v174
  %340 = vmatprep.subr.mxu0 0.0
  %341 = vmatpush1.msra.mxu0 %v175
  %342 = vmatprep.subr.mxu0 0.0
  %343 = vmatpush1.msra.mxu0 %v176
  %344 = vmatprep.subr.mxu0 0.0
  %345 = vmatpush1.msra.mxu0 %v177
  %346 = vmatprep.subr.mxu0 0.0
  %347 = vmatpush1.msra.mxu0 %v178
  %348 = vmatprep.subr.mxu0 0.0
  %349 = vmatpush1.msra.mxu0 %v179
  %350 = vmatprep.subr.mxu0 0.0
  %351 = vmatpush1.msra.mxu0 %v180
  %352 = vmatprep.subr.mxu0 0.0
  %353 = vmatpush1.msra.mxu0 %v181
  %354 = vmatprep.subr.mxu0 0.0
  %355 = vmatpush1.msra.mxu0 %v182
  %356 = vmatprep.subr.mxu0 0.0
  %357 = vmatpush1.msra.mxu0 %v183
  %358 = vmatprep.subr.mxu0 0.0
  %359 = vmatpush1.msra.mxu0 %v184
  %360 = vmatprep.subr.mxu0 0.0
  %361 = vmatpush1.msra.mxu0 %v185
  %362 = vmatprep.subr.mxu0 0.0
  %363 = vmatpush1.msra.mxu0 %v186
  %364 = vmatprep.subr.mxu0 0.0
  %365 = vmatpush1.msra.mxu0 %v187
  %366 = vmatprep.subr.mxu0 0.0
  %367 = vmatpush1.msra.mxu0 %v188
  %368 = vmatprep.subr.mxu0 0.0
  %369 = vmatpush1.msra.mxu0 %v189
  %370 = vmatprep.subr.mxu0 0.0
  %371 = vmatpush1.msra.mxu0 %v190
  %372 = vmatprep.mubr.f32.mxu0 %v16
  %373 = vmatmul.mubr.f32.gmra.mrb[0].mxu0 %v15
  %v374 = vpop.f32.mrb[0].mxu0
  %v375 = vadd.f32 %v307, %v374
  %v376 = vpop.f32.mrb[0].mxu0
  %377 = vmatprep.mubr.f32.mxu0 %v25
  %378 = vmatmul.mubr.f32.gmra.mrb[0].mxu0 %v24
  %v379 = vpop.f32.mrb[0].mxu0
  %v380 = vadd.f32 %v307, %v379
  %v381 = vpop.f32.mrb[0].mxu0
  %382 = vmatprep.mubr.f32.mxu0 %v34
  %383 = vmatmul.mubr.f32.gmra.mrb[0].mxu0 %v33
  %v384 = vpop.f32.mrb[0].mxu0
  %v385 = vadd.f32 %v307, %v384
  %v386 = vpop.f32.mrb[0].mxu0
  %387 = vmatprep.mubr.f32.mxu0 %v43
  %388 = vmatmul.mubr.f32.gmra.mrb[0].mxu0 %v42
  %v389 = vpop.f32.mrb[0].mxu0
  %v390 = vadd.f32 %v307, %v389
  %v391 = vpop.f32.mrb[0].mxu0
  %392 = vmatprep.mubr.f32.mxu0 %v52
  %393 = vmatmul.mubr.f32.gmra.mrb[0].mxu0 %v51
  %v394 = vpop.f32.mrb[0].mxu0
  %v395 = vadd.f32 %v307, %v394
  %v396 = vpop.f32.mrb[0].mxu0
  %397 = vmatprep.mubr.f32.mxu0 %v61
  %398 = vmatmul.mubr.f32.gmra.mrb[0].mxu0 %v60
  %v399 = vpop.f32.mrb[0].mxu0
  %v400 = vadd.f32 %v307, %v399
  %v401 = vpop.f32.mrb[0].mxu0
  %402 = vmatprep.mubr.f32.mxu0 %v70
  %403 = vmatmul.mubr.f32.gmra.mrb[0].mxu0 %v69
  %v404 = vpop.f32.mrb[0].mxu0
  %v405 = vadd.f32 %v307, %v404
  %v406 = vpop.f32.mrb[0].mxu0
  %407 = vmatprep.mubr.f32.mxu0 %v79
  %408 = vmatmul.mubr.f32.gmra.mrb[0].mxu0 %v78
  %v409 = vpop.f32.mrb[0].mxu0
  %v410 = vadd.f32 %v307, %v409
  %v411 = vpop.f32.mrb[0].mxu0
  %412 = vmatprep.mubr.f32.mxu0 %v88
  %413 = vmatmul.mubr.f32.gmra.mrb[0].mxu0 %v87
  %v414 = vpop.f32.mrb[0].mxu0
  %v415 = vadd.f32 %v307, %v414
  %v416 = vpop.f32.mrb[0].mxu0
  %417 = vmatprep.mubr.f32.mxu0 %v97
  %418 = vmatmul.mubr.f32.gmra.mrb[0].mxu0 %v96
  %v419 = vpop.f32.mrb[0].mxu0
  %v420 = vadd.f32 %v307, %v419
  %v421 = vpop.f32.mrb[0].mxu0
  %422 = vmatprep.mubr.f32.mxu0 %v106
  %423 = vmatmul.mubr.f32.gmra.mrb[0].mxu0 %v105
  %v424 = vpop.f32.mrb[0].mxu0
  %v425 = vadd.f32 %v307, %v424
  %v426 = vpop.f32.mrb[0].mxu0
  %427 = vmatprep.mubr.f32.mxu0 %v115
  %428 = vmatmul.mubr.f32.gmra.mrb[0].mxu0 %v114
  %v429 = vpop.f32.mrb[0].mxu0
  %v430 = vadd.f32 %v307, %v429
  %v431 = vpop.f32.mrb[0].mxu0
  %432 = vmatprep.mubr.f32.mxu0 %v124
  %433 = vmatmul.mubr.f32.gmra.mrb[0].mxu0 %v123
  %v434 = vpop.f32.mrb[0].mxu0
  %v435 = vadd.f32 %v307, %v434
  %v436 = vpop.f32.mrb[0].mxu0
  %437 = vmatprep.mubr.f32.mxu0 %v133
  %438 = vmatmul.mubr.f32.gmra.mrb[0].mxu0 %v132
  %v439 = vpop.f32.mrb[0].mxu0
  %v440 = vadd.f32 %v307, %v439
  %v441 = vpop.f32.mrb[0].mxu0
  %442 = vmatprep.mubr.f32.mxu0 %v142
  %443 = vmatmul.mubr.f32.gmra.mrb[0].mxu0 %v141
  %v444 = vpop.f32.mrb[0].mxu0
  %v445 = vadd.f32 %v307, %v444
  %v446 = vpop.f32.mrb[0].mxu0
  %447 = vmatprep.mubr.f32.mxu0 %v151
  %448 = vmatmul.mubr.f32.gmra.mrb[0].mxu0 %v150
  %v449 = vpop.f32.mrb[0].mxu0
  %v450 = vadd.f32 %v307, %v449
  %v451 = vpop.f32.mrb[0].mxu0
  %452 = vdwg.mxu0
  %453 = vmatprep.subr.mxu0 0.0
  %454 = vmatpush1.msra.mxu0 %v191
  %455 = vmatprep.subr.mxu0 0.0
  %456 = vmatpush1.msra.mxu0 %v192
  %457 = vmatprep.subr.mxu0 0.0
  %458 = vmatpush1.msra.mxu0 %v193
  %459 = vmatprep.subr.mxu0 0.0
  %460 = vmatpush1.msra.mxu0 %v194
  %461 = vmatprep.subr.mxu0 0.0
  %462 = vmatpush1.msra.mxu0 %v195
  %463 = vmatprep.subr.mxu0 0.0
  %464 = vmatpush1.msra.mxu0 %v196
  %465 = vmatprep.subr.mxu0 0.0
  %466 = vmatpush1.msra.mxu0 %v197
  %467 = vmatprep.subr.mxu0 0.0
  %468 = vmatpush1.msra.mxu0 %v198
  %469 = vmatprep.subr.mxu0 0.0
  %470 = vmatpush1.msra.mxu0 %v199
  %471 = vmatprep.subr.mxu0 0.0
  %472 = vmatpush1.msra.mxu0 %v200
  %473 = vmatprep.subr.mxu0 0.0
  %474 = vmatpush1.msra.mxu0 %v201
  %475 = vmatprep.subr.mxu0 0.0
  %476 = vmatpush1.msra.mxu0 %v202
  %477 = vmatprep.subr.mxu0 0.0
  %478 = vmatpush1.msra.mxu0 %v203
  %479 = vmatprep.subr.mxu0 0.0
  %480 = vmatpush1.msra.mxu0 %v204
  %481 = vmatprep.subr.mxu0 0.0
  %482 = vmatpush1.msra.mxu0 %v205
  %483 = vmatprep.subr.mxu0 0.0
  %484 = vmatpush1.msra.mxu0 %v206
  %485 = vmatprep.subr.mxu0 0.0
  %486 = vmatpush1.msra.mxu0 %v207
  %487 = vmatprep.subr.mxu0 0.0
  %488 = vmatpush1.msra.mxu0 %v208
  %489 = vmatprep.subr.mxu0 0.0
  %490 = vmatpush1.msra.mxu0 %v209
  %491 = vmatprep.subr.mxu0 0.0
  %492 = vmatpush1.msra.mxu0 %v210
  %493 = vmatprep.subr.mxu0 0.0
  %494 = vmatpush1.msra.mxu0 %v211
  %495 = vmatprep.subr.mxu0 0.0
  %496 = vmatpush1.msra.mxu0 %v212
  %497 = vmatprep.subr.mxu0 0.0
  %498 = vmatpush1.msra.mxu0 %v213
  %499 = vmatprep.subr.mxu0 0.0
  %500 = vmatpush1.msra.mxu0 %v214
  %501 = vmatprep.subr.mxu0 0.0
  %502 = vmatpush1.msra.mxu0 %v215
  %503 = vmatprep.subr.mxu0 0.0
  %504 = vmatpush1.msra.mxu0 %v216
  %505 = vmatprep.subr.mxu0 0.0
  %506 = vmatpush1.msra.mxu0 %v217
  %507 = vmatprep.subr.mxu0 0.0
  %508 = vmatpush1.msra.mxu0 %v218
  %509 = vmatprep.subr.mxu0 0.0
  %510 = vmatpush1.msra.mxu0 %v219
  %511 = vmatprep.subr.mxu0 0.0
  %512 = vmatpush1.msra.mxu0 %v220
  %513 = vmatprep.subr.mxu0 0.0
  %514 = vmatpush1.msra.mxu0 %v221
  %515 = vmatprep.subr.mxu0 0.0
  %516 = vmatpush1.msra.mxu0 %v222
  %517 = vmatprep.mubr.f32.mxu0 %v18
  %518 = vmatmul.mubr.f32.gmra.mrb[0].mxu0 %v17
  %v519 = vpop.f32.mrb[0].mxu0
  %v520 = vadd.f32 %v375, %v519
  %v521 = vpop.f32.mrb[0].mxu0
  %522 = vmatprep.mubr.f32.mxu0 %v27
  %523 = vmatmul.mubr.f32.gmra.mrb[0].mxu0 %v26
  %v524 = vpop.f32.mrb[0].mxu0
  %v525 = vadd.f32 %v380, %v524
  %v526 = vpop.f32.mrb[0].mxu0
  %527 = vmatprep.mubr.f32.mxu0 %v36
  %528 = vmatmul.mubr.f32.gmra.mrb[0].mxu0 %v35
  %v529 = vpop.f32.mrb[0].mxu0
  %v530 = vadd.f32 %v385, %v529
  %v531 = vpop.f32.mrb[0].mxu0
  %532 = vmatprep.mubr.f32.mxu0 %v45
  %533 = vmatmul.mubr.f32.gmra.mrb[0].mxu0 %v44
  %v534 = vpop.f32.mrb[0].mxu0
  %v535 = vadd.f32 %v390, %v534
  %v536 = vpop.f32.mrb[0].mxu0
  %537 = vmatprep.mubr.f32.mxu0 %v54
  %538 = vmatmul.mubr.f32.gmra.mrb[0].mxu0 %v53
  %v539 = vpop.f32.mrb[0].mxu0
  %v540 = vadd.f32 %v395, %v539
  %v541 = vpop.f32.mrb[0].mxu0
  %542 = vmatprep.mubr.f32.mxu0 %v63
  %543 = vmatmul.mubr.f32.gmra.mrb[0].mxu0 %v62
  %v544 = vpop.f32.mrb[0].mxu0
  %v545 = vadd.f32 %v400, %v544
  %v546 = vpop.f32.mrb[0].mxu0
  %547 = vmatprep.mubr.f32.mxu0 %v72
  %548 = vmatmul.mubr.f32.gmra.mrb[0].mxu0 %v71
  %v549 = vpop.f32.mrb[0].mxu0
  %v550 = vadd.f32 %v405, %v549
  %v551 = vpop.f32.mrb[0].mxu0
  %552 = vmatprep.mubr.f32.mxu0 %v81
  %553 = vmatmul.mubr.f32.gmra.mrb[0].mxu0 %v80
  %v554 = vpop.f32.mrb[0].mxu0
  %v555 = vadd.f32 %v410, %v554
  %v556 = vpop.f32.mrb[0].mxu0
  %557 = vmatprep.mubr.f32.mxu0 %v90
  %558 = vmatmul.mubr.f32.gmra.mrb[0].mxu0 %v89
  %v559 = vpop.f32.mrb[0].mxu0
  %v560 = vadd.f32 %v415, %v559
  %v561 = vpop.f32.mrb[0].mxu0
  %562 = vmatprep.mubr.f32.mxu0 %v99
  %563 = vmatmul.mubr.f32.gmra.mrb[0].mxu0 %v98
  %v564 = vpop.f32.mrb[0].mxu0
  %v565 = vadd.f32 %v420, %v564
  %v566 = vpop.f32.mrb[0].mxu0
  %567 = vmatprep.mubr.f32.mxu0 %v108
  %568 = vmatmul.mubr.f32.gmra.mrb[0].mxu0 %v107
  %v569 = vpop.f32.mrb[0].mxu0
  %v570 = vadd.f32 %v425, %v569
  %v571 = vpop.f32.mrb[0].mxu0
  %572 = vmatprep.mubr.f32.mxu0 %v117
  %573 = vmatmul.mubr.f32.gmra.mrb[0].mxu0 %v116
  %v574 = vpop.f32.mrb[0].mxu0
  %v575 = vadd.f32 %v430, %v574
  %v576 = vpop.f32.mrb[0].mxu0
  %577 = vmatprep.mubr.f32.mxu0 %v126
  %578 = vmatmul.mubr.f32.gmra.mrb[0].mxu0 %v125
  %v579 = vpop.f32.mrb[0].mxu0
  %v580 = vadd.f32 %v435, %v579
  %v581 = vpop.f32.mrb[0].mxu0
  %582 = vmatprep.mubr.f32.mxu0 %v135
  %583 = vmatmul.mubr.f32.gmra.mrb[0].mxu0 %v134
  %v584 = vpop.f32.mrb[0].mxu0
  %v585 = vadd.f32 %v440, %v584
  %v586 = vpop.f32.mrb[0].mxu0
  %587 = vmatprep.mubr.f32.mxu0 %v144
  %588 = vmatmul.mubr.f32.gmra.mrb[0].mxu0 %v143
  %v589 = vpop.f32.mrb[0].mxu0
  %v590 = vadd.f32 %v445, %v589
  %v591 = vpop.f32.mrb[0].mxu0
  %592 = vmatprep.mubr.f32.mxu0 %v153
  %593 = vmatmul.mubr.f32.gmra.mrb[0].mxu0 %v152
  %v594 = vpop.f32.mrb[0].mxu0
  %v595 = vadd.f32 %v450, %v594
  %v596 = vpop.f32.mrb[0].mxu0
  %597 = vdwg.mxu0
  %598 = vmatprep.subr.mxu0 0.0
  %599 = vmatpush1.msra.mxu0 %v223
  %600 = vmatprep.subr.mxu0 0.0
  %601 = vmatpush1.msra.mxu0 %v224
  %602 = vmatprep.subr.mxu0 0.0
  %603 = vmatpush1.msra.mxu0 %v225
  %604 = vmatprep.subr.mxu0 0.0
  %605 = vmatpush1.msra.mxu0 %v226
  %606 = vmatprep.subr.mxu0 0.0
  %607 = vmatpush1.msra.mxu0 %v227
  %608 = vmatprep.subr.mxu0 0.0
  %609 = vmatpush1.msra.mxu0 %v228
  %610 = vmatprep.subr.mxu0 0.0
  %611 = vmatpush1.msra.mxu0 %v229
  %612 = vmatprep.subr.mxu0 0.0
  %613 = vmatpush1.msra.mxu0 %v230
  %614 = vmatprep.subr.mxu0 0.0
  %615 = vmatpush1.msra.mxu0 %v231
  %616 = vmatprep.subr.mxu0 0.0
  %617 = vmatpush1.msra.mxu0 %v232
  %618 = vmatprep.subr.mxu0 0.0
  %619 = vmatpush1.msra.mxu0 %v233
  %620 = vmatprep.subr.mxu0 0.0
  %621 = vmatpush1.msra.mxu0 %v234
  %622 = vmatprep.subr.mxu0 0.0
  %623 = vmatpush1.msra.mxu0 %v235
  %624 = vmatprep.subr.mxu0 0.0
  %625 = vmatpush1.msra.mxu0 %v236
  %626 = vmatprep.subr.mxu0 0.0
  %627 = vmatpush1.msra.mxu0 %v237
  %628 = vmatprep.subr.mxu0 0.0
  %629 = vmatpush1.msra.mxu0 %v238
  %630 = vmatprep.subr.mxu0 0.0
  %631 = vmatpush1.msra.mxu0 %v239
  %632 = vmatprep.subr.mxu0 0.0
  %633 = vmatpush1.msra.mxu0 %v240
  %634 = vmatprep.subr.mxu0 0.0
  %635 = vmatpush1.msra.mxu0 %v241
  %636 = vmatprep.subr.mxu0 0.0
  %637 = vmatpush1.msra.mxu0 %v242
  %638 = vmatprep.subr.mxu0 0.0
  %639 = vmatpush1.msra.mxu0 %v243
  %640 = vmatprep.subr.mxu0 0.0
  %641 = vmatpush1.msra.mxu0 %v244
  %642 = vmatprep.subr.mxu0 0.0
  %643 = vmatpush1.msra.mxu0 %v245
  %644 = vmatprep.subr.mxu0 0.0
  %645 = vmatpush1.msra.mxu0 %v246
  %646 = vmatprep.subr.mxu0 0.0
  %647 = vmatpush1.msra.mxu0 %v247
  %648 = vmatprep.subr.mxu0 0.0
  %649 = vmatpush1.msra.mxu0 %v248
  %650 = vmatprep.subr.mxu0 0.0
  %651 = vmatpush1.msra.mxu0 %v249
  %652 = vmatprep.subr.mxu0 0.0
  %653 = vmatpush1.msra.mxu0 %v250
  %654 = vmatprep.subr.mxu0 0.0
  %655 = vmatpush1.msra.mxu0 %v251
  %656 = vmatprep.subr.mxu0 0.0
  %657 = vmatpush1.msra.mxu0 %v252
  %658 = vmatprep.subr.mxu0 0.0
  %659 = vmatpush1.msra.mxu0 %v253
  %660 = vmatprep.subr.mxu0 0.0
  %661 = vmatpush1.msra.mxu0 %v254
  %662 = vmatprep.mubr.f32.mxu0 %v20
  %663 = vmatmul.mubr.f32.gmra.mrb[0].mxu0 %v19
  %v664 = vpop.f32.mrb[0].mxu0
  %v665 = vadd.f32 %v520, %v664
  %v666 = vpop.f32.mrb[0].mxu0
  %667 = vmatprep.mubr.f32.mxu0 %v29
  %668 = vmatmul.mubr.f32.gmra.mrb[0].mxu0 %v28
  %v669 = vpop.f32.mrb[0].mxu0
  %v670 = vadd.f32 %v525, %v669
  %v671 = vpop.f32.mrb[0].mxu0
  %672 = vmatprep.mubr.f32.mxu0 %v38
  %673 = vmatmul.mubr.f32.gmra.mrb[0].mxu0 %v37
  %v674 = vpop.f32.mrb[0].mxu0
  %v675 = vadd.f32 %v530, %v674
  %v676 = vpop.f32.mrb[0].mxu0
  %677 = vmatprep.mubr.f32.mxu0 %v47
  %678 = vmatmul.mubr.f32.gmra.mrb[0].mxu0 %v46
  %v679 = vpop.f32.mrb[0].mxu0
  %v680 = vadd.f32 %v535, %v679
  %v681 = vpop.f32.mrb[0].mxu0
  %682 = vmatprep.mubr.f32.mxu0 %v56
  %683 = vmatmul.mubr.f32.gmra.mrb[0].mxu0 %v55
  %v684 = vpop.f32.mrb[0].mxu0
  %v685 = vadd.f32 %v540, %v684
  %v686 = vpop.f32.mrb[0].mxu0
  %687 = vmatprep.mubr.f32.mxu0 %v65
  %688 = vmatmul.mubr.f32.gmra.mrb[0].mxu0 %v64
  %v689 = vpop.f32.mrb[0].mxu0
  %v690 = vadd.f32 %v545, %v689
  %v691 = vpop.f32.mrb[0].mxu0
  %692 = vmatprep.mubr.f32.mxu0 %v74
  %693 = vmatmul.mubr.f32.gmra.mrb[0].mxu0 %v73
  %v694 = vpop.f32.mrb[0].mxu0
  %v695 = vadd.f32 %v550, %v694
  %v696 = vpop.f32.mrb[0].mxu0
  %697 = vmatprep.mubr.f32.mxu0 %v83
  %698 = vmatmul.mubr.f32.gmra.mrb[0].mxu0 %v82
  %v699 = vpop.f32.mrb[0].mxu0
  %v700 = vadd.f32 %v555, %v699
  %v701 = vpop.f32.mrb[0].mxu0
  %702 = vmatprep.mubr.f32.mxu0 %v92
  %703 = vmatmul.mubr.f32.gmra.mrb[0].mxu0 %v91
  %v704 = vpop.f32.mrb[0].mxu0
  %v705 = vadd.f32 %v560, %v704
  %v706 = vpop.f32.mrb[0].mxu0
  %707 = vmatprep.mubr.f32.mxu0 %v101
  %708 = vmatmul.mubr.f32.gmra.mrb[0].mxu0 %v100
  %v709 = vpop.f32.mrb[0].mxu0
  %v710 = vadd.f32 %v565, %v709
  %v711 = vpop.f32.mrb[0].mxu0
  %712 = vmatprep.mubr.f32.mxu0 %v110
  %713 = vmatmul.mubr.f32.gmra.mrb[0].mxu0 %v109
  %v714 = vpop.f32.mrb[0].mxu0
  %v715 = vadd.f32 %v570, %v714
  %v716 = vpop.f32.mrb[0].mxu0
  %717 = vmatprep.mubr.f32.mxu0 %v119
  %718 = vmatmul.mubr.f32.gmra.mrb[0].mxu0 %v118
  %v719 = vpop.f32.mrb[0].mxu0
  %v720 = vadd.f32 %v575, %v719
  %v721 = vpop.f32.mrb[0].mxu0
  %722 = vmatprep.mubr.f32.mxu0 %v128
  %723 = vmatmul.mubr.f32.gmra.mrb[0].mxu0 %v127
  %v724 = vpop.f32.mrb[0].mxu0
  %v725 = vadd.f32 %v580, %v724
  %v726 = vpop.f32.mrb[0].mxu0
  %727 = vmatprep.mubr.f32.mxu0 %v137
  %728 = vmatmul.mubr.f32.gmra.mrb[0].mxu0 %v136
  %v729 = vpop.f32.mrb[0].mxu0
  %v730 = vadd.f32 %v585, %v729
  %v731 = vpop.f32.mrb[0].mxu0
  %732 = vmatprep.mubr.f32.mxu0 %v146
  %733 = vmatmul.mubr.f32.gmra.mrb[0].mxu0 %v145
  %v734 = vpop.f32.mrb[0].mxu0
  %v735 = vadd.f32 %v590, %v734
  %v736 = vpop.f32.mrb[0].mxu0
  %737 = vmatprep.mubr.f32.mxu0 %v155
  %738 = vmatmul.mubr.f32.gmra.mrb[0].mxu0 %v154
  %v739 = vpop.f32.mrb[0].mxu0
  %v740 = vadd.f32 %v595, %v739
  %v741 = vpop.f32.mrb[0].mxu0
  %742 = vdwg.mxu0
  %743 = vmatprep.subr.mxu0 0.0
  %744 = vmatpush1.msra.mxu0 %v255
  %745 = vmatprep.subr.mxu0 0.0
  %746 = vmatpush1.msra.mxu0 %v256
  %747 = vmatprep.subr.mxu0 0.0
  %748 = vmatpush1.msra.mxu0 %v257
  %749 = vmatprep.subr.mxu0 0.0
  %750 = vmatpush1.msra.mxu0 %v258
  %751 = vmatprep.subr.mxu0 0.0
  %752 = vmatpush1.msra.mxu0 %v259
  %753 = vmatprep.subr.mxu0 0.0
  %754 = vmatpush1.msra.mxu0 %v260
  %755 = vmatprep.subr.mxu0 0.0
  %756 = vmatpush1.msra.mxu0 %v261
  %757 = vmatprep.subr.mxu0 0.0
  %758 = vmatpush1.msra.mxu0 %v262
  %759 = vmatprep.subr.mxu0 0.0
  %760 = vmatpush1.msra.mxu0 %v263
  %761 = vmatprep.subr.mxu0 0.0
  %762 = vmatpush1.msra.mxu0 %v264
  %763 = vmatprep.subr.mxu0 0.0
  %764 = vmatpush1.msra.mxu0 %v265
  %765 = vmatprep.subr.mxu0 0.0
  %766 = vmatpush1.msra.mxu0 %v266
  %767 = vmatprep.subr.mxu0 0.0
  %768 = vmatpush1.msra.mxu0 %v267
  %769 = vmatprep.subr.mxu0 0.0
  %770 = vmatpush1.msra.mxu0 %v268
  %771 = vmatprep.subr.mxu0 0.0
  %772 = vmatpush1.msra.mxu0 %v269
  %773 = vmatprep.subr.mxu0 0.0
  %774 = vmatpush1.msra.mxu0 %v270
  %775 = vmatprep.subr.mxu0 0.0
  %776 = vmatpush1.msra.mxu0 %v271
  %777 = vmatprep.subr.mxu0 0.0
  %778 = vmatpush1.msra.mxu0 %v272
  %779 = vmatprep.subr.mxu0 0.0
  %780 = vmatpush1.msra.mxu0 %v273
  %781 = vmatprep.subr.mxu0 0.0
  %782 = vmatpush1.msra.mxu0 %v274
  %783 = vmatprep.subr.mxu0 0.0
  %784 = vmatpush1.msra.mxu0 %v275
  %785 = vmatprep.subr.mxu0 0.0
  %786 = vmatpush1.msra.mxu0 %v276
  %787 = vmatprep.subr.mxu0 0.0
  %788 = vmatpush1.msra.mxu0 %v277
  %789 = vmatprep.subr.mxu0 0.0
  %790 = vmatpush1.msra.mxu0 %v278
  %791 = vmatprep.subr.mxu0 0.0
  %792 = vmatpush1.msra.mxu0 %v279
  %793 = vmatprep.subr.mxu0 0.0
  %794 = vmatpush1.msra.mxu0 %v280
  %795 = vmatprep.subr.mxu0 0.0
  %796 = vmatpush1.msra.mxu0 %v281
  %797 = vmatprep.subr.mxu0 0.0
  %798 = vmatpush1.msra.mxu0 %v282
  %799 = vmatprep.subr.mxu0 0.0
  %800 = vmatpush1.msra.mxu0 %v283
  %801 = vmatprep.subr.mxu0 0.0
  %802 = vmatpush1.msra.mxu0 %v284
  %803 = vmatprep.subr.mxu0 0.0
  %804 = vmatpush1.msra.mxu0 %v285
  %805 = vmatprep.subr.mxu0 0.0
  %806 = vmatpush1.msra.mxu0 %v286
  %807 = vmatprep.mubr.f32.mxu0 %v22
  %808 = vmatmul.mubr.f32.gmra.mrb[0].mxu0 %v21
  %v809 = vpop.f32.mrb[0].mxu0
  %v810 = vadd.f32 %v665, %v809
  %v811 = vpop.f32.mrb[0].mxu0
  %812 = vmatprep.mubr.f32.mxu0 %v31
  %813 = vmatmul.mubr.f32.gmra.mrb[0].mxu0 %v30
  %v814 = vpop.f32.mrb[0].mxu0
  %v815 = vadd.f32 %v670, %v814
  %v816 = vpop.f32.mrb[0].mxu0
  %817 = vmatprep.mubr.f32.mxu0 %v40
  %818 = vmatmul.mubr.f32.gmra.mrb[0].mxu0 %v39
  %v819 = vpop.f32.mrb[0].mxu0
  %v820 = vadd.f32 %v675, %v819
  %v821 = vpop.f32.mrb[0].mxu0
  %822 = vmatprep.mubr.f32.mxu0 %v49
  %823 = vmatmul.mubr.f32.gmra.mrb[0].mxu0 %v48
  %v824 = vpop.f32.mrb[0].mxu0
  %v825 = vadd.f32 %v680, %v824
  %v826 = vpop.f32.mrb[0].mxu0
  %827 = vmatprep.mubr.f32.mxu0 %v58
  %828 = vmatmul.mubr.f32.gmra.mrb[0].mxu0 %v57
  %v829 = vpop.f32.mrb[0].mxu0
  %v830 = vadd.f32 %v685, %v829
  %v831 = vpop.f32.mrb[0].mxu0
  %832 = vmatprep.mubr.f32.mxu0 %v67
  %833 = vmatmul.mubr.f32.gmra.mrb[0].mxu0 %v66
  %v834 = vpop.f32.mrb[0].mxu0
  %v835 = vadd.f32 %v690, %v834
  %v836 = vpop.f32.mrb[0].mxu0
  %837 = vmatprep.mubr.f32.mxu0 %v76
  %838 = vmatmul.mubr.f32.gmra.mrb[0].mxu0 %v75
  %v839 = vpop.f32.mrb[0].mxu0
  %v840 = vadd.f32 %v695, %v839
  %v841 = vpop.f32.mrb[0].mxu0
  %842 = vmatprep.mubr.f32.mxu0 %v85
  %843 = vmatmul.mubr.f32.gmra.mrb[0].mxu0 %v84
  %v844 = vpop.f32.mrb[0].mxu0
  %v845 = vadd.f32 %v700, %v844
  %v846 = vpop.f32.mrb[0].mxu0
  %847 = vmatprep.mubr.f32.mxu0 %v94
  %848 = vmatmul.mubr.f32.gmra.mrb[0].mxu0 %v93
  %v849 = vpop.f32.mrb[0].mxu0
  %v850 = vadd.f32 %v705, %v849
  %v851 = vpop.f32.mrb[0].mxu0
  %852 = vmatprep.mubr.f32.mxu0 %v103
  %853 = vmatmul.mubr.f32.gmra.mrb[0].mxu0 %v102
  %v854 = vpop.f32.mrb[0].mxu0
  %v855 = vadd.f32 %v710, %v854
  %v856 = vpop.f32.mrb[0].mxu0
  %857 = vmatprep.mubr.f32.mxu0 %v112
  %858 = vmatmul.mubr.f32.gmra.mrb[0].mxu0 %v111
  %v859 = vpop.f32.mrb[0].mxu0
  %v860 = vadd.f32 %v715, %v859
  %v861 = vpop.f32.mrb[0].mxu0
  %862 = vmatprep.mubr.f32.mxu0 %v121
  %863 = vmatmul.mubr.f32.gmra.mrb[0].mxu0 %v120
  %v864 = vpop.f32.mrb[0].mxu0
  %v865 = vadd.f32 %v720, %v864
  %v866 = vpop.f32.mrb[0].mxu0
  %867 = vmatprep.mubr.f32.mxu0 %v130
  %868 = vmatmul.mubr.f32.gmra.mrb[0].mxu0 %v129
  %v869 = vpop.f32.mrb[0].mxu0
  %v870 = vadd.f32 %v725, %v869
  %v871 = vpop.f32.mrb[0].mxu0
  %872 = vmatprep.mubr.f32.mxu0 %v139
  %873 = vmatmul.mubr.f32.gmra.mrb[0].mxu0 %v138
  %v874 = vpop.f32.mrb[0].mxu0
  %v875 = vadd.f32 %v730, %v874
  %v876 = vpop.f32.mrb[0].mxu0
  %877 = vmatprep.mubr.f32.mxu0 %v148
  %878 = vmatmul.mubr.f32.gmra.mrb[0].mxu0 %v147
  %v879 = vpop.f32.mrb[0].mxu0
  %v880 = vadd.f32 %v735, %v879
  %v881 = vpop.f32.mrb[0].mxu0
  %882 = vmatprep.mubr.f32.mxu0 %v157
  %883 = vmatmul.mubr.f32.gmra.mrb[0].mxu0 %v156
  %v884 = vpop.f32.mrb[0].mxu0
  %v885 = vadd.f32 %v740, %v884
  %v886 = vpop.f32.mrb[0].mxu0
  %887 = vdwg.mxu0
  %888 = vmatprep.subr.mxu0 0.0
  %889 = vmatpush1.msra.mxu0 %v287
  %890 = vmatprep.subr.mxu0 0.0
  %891 = vmatpush1.msra.mxu0 %v288
  %892 = vmatprep.subr.mxu0 0.0
  %893 = vmatpush1.msra.mxu0 %v289
  %894 = vmatprep.subr.mxu0 0.0
  %895 = vmatpush1.msra.mxu0 %v290
  %896 = vmatprep.subr.mxu0 0.0
  %897 = vmatpush1.msra.mxu0 %v291
  %898 = vmatprep.subr.mxu0 0.0
  %899 = vmatpush1.msra.mxu0 %v292
  %900 = vmatprep.subr.mxu0 0.0
  %901 = vmatpush1.msra.mxu0 %v293
  %902 = vmatprep.subr.mxu0 0.0
  %903 = vmatpush1.msra.mxu0 %v294
  %904 = vmatprep.subr.mxu0 0.0
  %905 = vmatpush1.msra.mxu0 %v295
  %906 = vmatprep.subr.mxu0 0.0
  %907 = vmatpush1.msra.mxu0 %v296
  %908 = vmatprep.subr.mxu0 0.0
  %909 = vmatpush1.msra.mxu0 %v297
  %910 = vmatprep.subr.mxu0 0.0
  %911 = vmatpush1.msra.mxu0 %v298
  %912 = vmatprep.subr.mxu0 0.0
  %913 = vmatpush1.msra.mxu0 %v299
  %914 = vmatprep.subr.mxu0 0.0
  %915 = vmatpush1.msra.mxu0 %v300
  %916 = vmatprep.subr.mxu0 0.0
  %917 = vmatpush1.msra.mxu0 %v301
  %918 = vmatprep.subr.mxu0 0.0
  %919 = vmatpush1.msra.mxu0 %v302
  %920 = vmatprep.subr.mxu0 0.0
  %921 = vmatpush1.msra.mxu0 0.0
  %922 = vmatprep.subr.mxu0 0.0
  %923 = vmatpush1.msra.mxu0 0.0
  %924 = vmatprep.subr.mxu0 0.0
  %925 = vmatpush1.msra.mxu0 0.0
  %926 = vmatprep.subr.mxu0 0.0
  %927 = vmatpush1.msra.mxu0 0.0
  %928 = vmatprep.subr.mxu0 0.0
  %929 = vmatpush1.msra.mxu0 0.0
  %930 = vmatprep.subr.mxu0 0.0
  %931 = vmatpush1.msra.mxu0 0.0
  %932 = vmatprep.subr.mxu0 0.0
  %933 = vmatpush1.msra.mxu0 0.0
  %934 = vmatprep.subr.mxu0 0.0
  %935 = vmatpush1.msra.mxu0 0.0
  %936 = vmatprep.subr.mxu0 0.0
  %937 = vmatpush1.msra.mxu0 0.0
  %938 = vmatprep.subr.mxu0 0.0
  %939 = vmatpush1.msra.mxu0 0.0
  %940 = vmatprep.subr.mxu0 0.0
  %941 = vmatpush1.msra.mxu0 0.0
  %942 = vmatprep.subr.mxu0 0.0
  %943 = vmatpush1.msra.mxu0 0.0
  %944 = vmatprep.subr.mxu0 0.0
  %945 = vmatpush1.msra.mxu0 0.0
  %946 = vmatprep.subr.mxu0 0.0
  %947 = vmatpush1.msra.mxu0 0.0
  %948 = vmatprep.subr.mxu0 0.0
  %949 = vmatpush1.msra.mxu0 0.0
  %950 = vmatprep.subr.mxu0 0.0
  %951 = vmatpush1.msra.mxu0 0.0
  %952 = vmatprep.mubr.f32.mxu0 0.0
  %953 = vmatmul.mubr.f32.gmra.mrb[0].mxu0 %v23
  %v954 = vpop.f32.mrb[0].mxu0
  %v955 = vadd.f32 %v810, %v954
  %v956 = vpop.f32.mrb[0].mxu0
  %957 = vmatprep.mubr.f32.mxu0 0.0
  %958 = vmatmul.mubr.f32.gmra.mrb[0].mxu0 %v32
  %v959 = vpop.f32.mrb[0].mxu0
  %v960 = vadd.f32 %v815, %v959
  %v961 = vpop.f32.mrb[0].mxu0
  %962 = vmatprep.mubr.f32.mxu0 0.0
  %963 = vmatmul.mubr.f32.gmra.mrb[0].mxu0 %v41
  %v964 = vpop.f32.mrb[0].mxu0
  %v965 = vadd.f32 %v820, %v964
  %v966 = vpop.f32.mrb[0].mxu0
  %967 = vmatprep.mubr.f32.mxu0 0.0
  %968 = vmatmul.mubr.f32.gmra.mrb[0].mxu0 %v50
  %v969 = vpop.f32.mrb[0].mxu0
  %v970 = vadd.f32 %v825, %v969
  %v971 = vpop.f32.mrb[0].mxu0
  %972 = vmatprep.mubr.f32.mxu0 0.0
  %973 = vmatmul.mubr.f32.gmra.mrb[0].mxu0 %v59
  %v974 = vpop.f32.mrb[0].mxu0
  %v975 = vadd.f32 %v830, %v974
  %v976 = vpop.f32.mrb[0].mxu0
  %977 = vmatprep.mubr.f32.mxu0 0.0
  %978 = vmatmul.mubr.f32.gmra.mrb[0].mxu0 %v68
  %v979 = vpop.f32.mrb[0].mxu0
  %v980 = vadd.f32 %v835, %v979
  %v981 = vpop.f32.mrb[0].mxu0
  %982 = vmatprep.mubr.f32.mxu0 0.0
  %983 = vmatmul.mubr.f32.gmra.mrb[0].mxu0 %v77
  %v984 = vpop.f32.mrb[0].mxu0
  %v985 = vadd.f32 %v840, %v984
  %v986 = vpop.f32.mrb[0].mxu0
  %987 = vmatprep.mubr.f32.mxu0 0.0
  %988 = vmatmul.mubr.f32.gmra.mrb[0].mxu0 %v86
  %v989 = vpop.f32.mrb[0].mxu0
  %v990 = vadd.f32 %v845, %v989
  %v991 = vpop.f32.mrb[0].mxu0
  %992 = vmatprep.mubr.f32.mxu0 0.0
  %993 = vmatmul.mubr.f32.gmra.mrb[0].mxu0 %v95
  %v994 = vpop.f32.mrb[0].mxu0
  %v995 = vadd.f32 %v850, %v994
  %v996 = vpop.f32.mrb[0].mxu0
  %997 = vmatprep.mubr.f32.mxu0 0.0
  %998 = vmatmul.mubr.f32.gmra.mrb[0].mxu0 %v104
  %v999 = vpop.f32.mrb[0].mxu0
  %v1000 = vadd.f32 %v855, %v999
  %v1001 = vpop.f32.mrb[0].mxu0
  %1002 = vmatprep.mubr.f32.mxu0 0.0
  %1003 = vmatmul.mubr.f32.gmra.mrb[0].mxu0 %v113
  %v1004 = vpop.f32.mrb[0].mxu0
  %v1005 = vadd.f32 %v860, %v1004
  %v1006 = vpop.f32.mrb[0].mxu0
  %1007 = vmatprep.mubr.f32.mxu0 0.0
  %1008 = vmatmul.mubr.f32.gmra.mrb[0].mxu0 %v122
  %v1009 = vpop.f32.mrb[0].mxu0
  %v1010 = vadd.f32 %v865, %v1009
  %v1011 = vpop.f32.mrb[0].mxu0
  %1012 = vmatprep.mubr.f32.mxu0 0.0
  %1013 = vmatmul.mubr.f32.gmra.mrb[0].mxu0 %v131
  %v1014 = vpop.f32.mrb[0].mxu0
  %v1015 = vadd.f32 %v870, %v1014
  %v1016 = vpop.f32.mrb[0].mxu0
  %1017 = vmatprep.mubr.f32.mxu0 0.0
  %1018 = vmatmul.mubr.f32.gmra.mrb[0].mxu0 %v140
  %v1019 = vpop.f32.mrb[0].mxu0
  %v1020 = vadd.f32 %v875, %v1019
  %v1021 = vpop.f32.mrb[0].mxu0
  %1022 = vmatprep.mubr.f32.mxu0 0.0
  %1023 = vmatmul.mubr.f32.gmra.mrb[0].mxu0 %v149
  %v1024 = vpop.f32.mrb[0].mxu0
  %v1025 = vadd.f32 %v880, %v1024
  %v1026 = vpop.f32.mrb[0].mxu0
  %1027 = vmatprep.mubr.f32.mxu0 0.0
  %1028 = vmatmul.mubr.f32.gmra.mrb[0].mxu0 %v158
  %v1029 = vpop.f32.mrb[0].mxu0
  %v1030 = vadd.f32 %v885, %v1029
  %v1031 = vpop.f32.mrb[0].mxu0
  %1032 = vdwg.mxu0
  %1033 = vst [vmem:[%s3] sm:$0xff] %v955
  %1034 = vst [vmem:[%s3 + $0x8] sm:$0xff] %v960
  %1035 = vst [vmem:[%s3 + $0x10] sm:$0xff] %v965
  %1036 = vst [vmem:[%s3 + $0x18] sm:$0xff] %v970
  %1037 = vst [vmem:[%s3 + $0x20] sm:$0xff] %v975
  %1038 = vst [vmem:[%s3 + $0x28] sm:$0xff] %v980
  %1039 = vst [vmem:[%s3 + $0x30] sm:$0xff] %v985
  %1040 = vst [vmem:[%s3 + $0x38] sm:$0xff] %v990
  %1041 = vst [vmem:[%s3 + $0x40] sm:$0xff] %v995
  %1042 = vst [vmem:[%s3 + $0x48] sm:$0xff] %v1000
  %1043 = vst [vmem:[%s3 + $0x50] sm:$0xff] %v1005
  %1044 = vst [vmem:[%s3 + $0x58] sm:$0xff] %v1010
  %1045 = vst [vmem:[%s3 + $0x60] sm:$0xff] %v1015
  %1046 = vst [vmem:[%s3 + $0x68] sm:$0xff] %v1020
  %1047 = vst [vmem:[%s3 + $0x70] sm:$0xff] %v1025
  %1048 = vst [vmem:[%s3 + $0x78] sm:$0xff] %v1030
  // Predicated region
  $region14: #{domain_adaption_forward.4} parent=0 // pred_check
    _
  $region15: #{domain_adaption_forward.4} parent=0 // pred_check_branch
    %1050 = sbr.rel (0) target = $region17
  $region16: #{domain_adaption_forward.4} parent=0 // pred_region
    _
  $region17: #{domain_adaption_forward.4} parent=0 // pred_fallthru
    _
  // Predicated region
  $region18: #{domain_adaption_forward.4} parent=0 // pred_check
    _
  $region19: #{domain_adaption_forward.4} parent=0 // pred_check_branch
    %1052 = sbr.rel (0) target = $region21
  $region20: #{domain_adaption_forward.4} parent=0 // pred_region
    _
  $region21: #{domain_adaption_forward.4} parent=0 // pred_fallthru
    _

// kernel: domain_adaption_forward.5
$region0: #{domain_adaption_forward.5}
  #allocation0 [shape = 'u32[]', space=smem, size = 0x4, offset = 0x4, fixed_abs, tag = 'smem constant byte address 0x4 - core index']
  #allocation1 [shape = 'u32[144,128]{1,0:T(1,128)}', space=vmem, size = 0x12000, scoped, tag = 'internal scratch']
  #allocation2 [shape = 'f32[1]{0:T(128)S(6)}', space=smem, size = 0x200, scoped, tag = 'scoped memory for domain_adaption_forward.5']
  %s0 = inlined_call_operand.vmem [shape: f32[2,64,128], index: 0, kind: input, shape index: {}]
  %s1 = inlined_call_operand.vmem [shape: f32[2,64,128], index: 1, kind: input, shape index: {}]
  %s2 = inlined_call_operand.vmem [shape: f32[2,3], index: 2, kind: input, shape index: {}]
  %s3 = inlined_call_operand.vmem [shape: f32[3,129,32], index: 3, kind: input, shape index: {}]
  %s4 = inlined_call_operand.vmem [shape: f32[3,33,128], index: 4, kind: input, shape index: {}]
  %s5 = inlined_call_operand.<no memory space> [shape: f32[1], index: 5, kind: input, shape index: {}]
  %s6 = inlined_call_operand.hbm [shape: f32[2,64,128], index: 6, kind: output, shape index: {}]
  %s7 = sld [smem:[#allocation0]]
  $region34: #{domain_adaption_forward.5} parent=0
    _
  %s9 = ssub.s32 1, %s7
  %s10 = scalar_select 0, %s9, %s7
  %11 = sst [smem:[#allocation2]] %s5
  $region1: #{domain_adaption_forward.5} parent=0
    #allocation3 [shape = 'u8[65536]{0}', space=vmem, size = 0x10000, scoped, tag = 'output window, operand 0, single buffered']
    #allocation4 [shape = 's32[1]{0}', space=sflag, size = 0x4, scoped, tag = 'scoped memory for domain_adaption_forward.5']
    %12 = vsyncpa [#allocation4], 0
    // Predicated region
    $region2: #{domain_adaption_forward.5} parent=1 // pred_check
      _
    $region3: #{domain_adaption_forward.5} parent=1 // pred_check_branch
      %14 = sbr.rel (0) target = $region5
    $region4: #{domain_adaption_forward.5} parent=1 // pred_region
      _
    $region5: #{domain_adaption_forward.5} parent=1 // pred_fallthru
      _
    // Predicated region
    $region6: #{domain_adaption_forward.5} parent=1 // pred_check
      _
    $region7: #{domain_adaption_forward.5} parent=1 // pred_check_branch
      %16 = sbr.rel (0) target = $region9
    $region8: #{domain_adaption_forward.5} parent=1 // pred_region
      _
    $region9: #{domain_adaption_forward.5} parent=1 // pred_fallthru
      _
    // Predicated region
    $region10: #{domain_adaption_forward.5} parent=1 // pred_check
      _
    $region11: #{domain_adaption_forward.5} parent=1 // pred_check_branch
      %18 = sbr.rel (0) target = $region13
    $region12: #{domain_adaption_forward.5} parent=1 // pred_region
      _
    $region13: #{domain_adaption_forward.5} parent=1 // pred_fallthru
      _
    // Predicated region
    $region14: #{domain_adaption_forward.5} parent=1 // pred_check
      _
    $region15: #{domain_adaption_forward.5} parent=1 // pred_check_branch
      %20 = sbr.rel (0) target = $region17
    $region16: #{domain_adaption_forward.5} parent=1 // pred_region
      _
    $region17: #{domain_adaption_forward.5} parent=1 // pred_fallthru
      _
    // Predicated region
    $region18: #{domain_adaption_forward.5} parent=1 // pred_check
      _
    $region19: #{domain_adaption_forward.5} parent=1 // pred_check_branch
      %22 = sbr.rel (0) target = $region21
    $region20: #{domain_adaption_forward.5} parent=1 // pred_region
      _
    $region21: #{domain_adaption_forward.5} parent=1 // pred_fallthru
      _
    // Predicated region
    $region22: #{domain_adaption_forward.5} parent=1 // pred_check
      _
    $region23: #{domain_adaption_forward.5} parent=1 // pred_check_branch
      %24 = sbr.rel (0) target = $region25
    $region24: #{domain_adaption_forward.5} parent=1 // pred_region
      _
    $region25: #{domain_adaption_forward.5} parent=1 // pred_fallthru
      _
    %v25 = vld [vmem:[%s0] sm:$0xff]
    %v26 = vld [vmem:[%s0 + $0x8] sm:$0xff]
    %v27 = vld [vmem:[%s0 + $0x10] sm:$0xff]
    %v28 = vld [vmem:[%s0 + $0x18] sm:$0xff]
    %v29 = vld [vmem:[%s0 + $0x20] sm:$0xff]
    %v30 = vld [vmem:[%s0 + $0x28] sm:$0xff]
    %v31 = vld [vmem:[%s0 + $0x30] sm:$0xff]
    %v32 = vld [vmem:[%s0 + $0x38] sm:$0xff]
    %v33 = vld [vmem:[%s0 + $0x40] sm:$0xff]
    %v34 = vld [vmem:[%s0 + $0x48] sm:$0xff]
    %v35 = vld [vmem:[%s0 + $0x50] sm:$0xff]
    %v36 = vld [vmem:[%s0 + $0x58] sm:$0xff]
    %v37 = vld [vmem:[%s0 + $0x60] sm:$0xff]
    %v38 = vld [vmem:[%s0 + $0x68] sm:$0xff]
    %v39 = vld [vmem:[%s0 + $0x70] sm:$0xff]
    %v40 = vld [vmem:[%s0 + $0x78] sm:$0xff]
    %v41 = vadd.f32 %v25, %v26
    %v42 = vadd.f32 %v41, %v27
    %v43 = vadd.f32 %v42, %v28
    %v44 = vadd.f32 %v43, %v29
    %v45 = vadd.f32 %v44, %v30
    %v46 = vadd.f32 %v45, %v31
    %v47 = vadd.f32 %v46, %v32
    %v48 = vrot.slane %v47, 4
    %v49 = vadd.f32 %v47, %v48
    %v50 = vrot.slane %v49, 2
    %v51 = vadd.f32 %v49, %v50
    %v52 = vrot.slane %v51, 1
    %v53 = vadd.f32 %v51, %v52
    %v54 = vadd.f32 %v33, %v34
    %v55 = vadd.f32 %v54, %v35
    %v56 = vadd.f32 %v55, %v36
    %v57 = vadd.f32 %v56, %v37
    %v58 = vadd.f32 %v57, %v38
    %v59 = vadd.f32 %v58, %v39
    %v60 = vadd.f32 %v59, %v40
    %v61 = vrot.slane %v60, 4
    %v62 = vadd.f32 %v60, %v61
    %v63 = vrot.slane %v62, 2
    %v64 = vadd.f32 %v62, %v63
    %v65 = vrot.slane %v64, 1
    %v66 = vadd.f32 %v64, %v65
    %v67 = vmul.f32 %v53, 0.015625
    %v68 = vmul.f32 %v66, 0.015625
    %v69 = vld [vmem:[%s3] sm:$0xff]
    %v70 = vld [vmem:[%s3 + $0x8] sm:$0xff]
    %v71 = vld [vmem:[%s3 + $0x10] sm:$0xff]
    %v72 = vld [vmem:[%s3 + $0x18] sm:$0xff]
    %v73 = vld [vmem:[%s3 + $0x20] sm:$0xff]
    %v74 = vld [vmem:[%s3 + $0x28] sm:$0xff]
    %v75 = vld [vmem:[%s3 + $0x30] sm:$0xff]
    %v76 = vld [vmem:[%s3 + $0x38] sm:$0xff]
    %v77 = vld [vmem:[%s3 + $0x40] sm:$0xff]
    %v78 = vld [vmem:[%s3 + $0x48] sm:$0xff]
    %v79 = vld [vmem:[%s3 + $0x50] sm:$0xff]
    %v80 = vld [vmem:[%s3 + $0x58] sm:$0xff]
    %v81 = vld [vmem:[%s3 + $0x60] sm:$0xff]
    %v82 = vld [vmem:[%s3 + $0x68] sm:$0xff]
    %v83 = vld [vmem:[%s3 + $0x70] sm:$0xff]
    %v84 = vld [vmem:[%s3 + $0x78] sm:$0xff]
    %v85 = vld [vmem:[%s3 + $0x80] sm:$0x1]
    %v86 = vld [vmem:[%s4] sm:$0xff]
    %v87 = vld [vmem:[%s4 + $0x8] sm:$0xff]
    %v88 = vld [vmem:[%s4 + $0x10] sm:$0xff]
    %v89 = vld [vmem:[%s4 + $0x18] sm:$0xff]
    %v90 = vld [vmem:[%s4 + $0x20] sm:$0x1]
    %v91 = vlaneseq
    %v92 = vshrl.u32 %v91, 7
    %v93 = vsub.s32 0, %v92
    %v94 = vrot.slane %v85, %v93
    %vm97 = vcmask 1041409
    %v98 = vsel %vm97, %v68, %v67
    %100 = vmatprep.subr.mxu0 0.0
    %101 = vmatpush1.msra.mxu0 %v69
    %102 = vmatprep.subr.mxu0 0.0
    %103 = vmatpush1.msra.mxu0 %v70
    %104 = vmatprep.subr.mxu0 0.0
    %105 = vmatpush1.msra.mxu0 %v71
    %106 = vmatprep.subr.mxu0 0.0
    %107 = vmatpush1.msra.mxu0 %v72
    %108 = vmatprep.subr.mxu0 0.0
    %109 = vmatpush1.msra.mxu0 %v73
    %110 = vmatprep.subr.mxu0 0.0
    %111 = vmatpush1.msra.mxu0 %v74
    %112 = vmatprep.subr.mxu0 0.0
    %113 = vmatpush1.msra.mxu0 %v75
    %114 = vmatprep.subr.mxu0 0.0
    %115 = vmatpush1.msra.mxu0 %v76
    %116 = vmatprep.subr.mxu0 0.0
    %117 = vmatpush1.msra.mxu0 %v77
    %118 = vmatprep.subr.mxu0 0.0
    %119 = vmatpush1.msra.mxu0 %v78
    %120 = vmatprep.subr.mxu0 0.0
    %121 = vmatpush1.msra.mxu0 %v79
    %122 = vmatprep.subr.mxu0 0.0
    %123 = vmatpush1.msra.mxu0 %v80
    %124 = vmatprep.subr.mxu0 0.0
    %125 = vmatpush1.msra.mxu0 %v81
    %126 = vmatprep.subr.mxu0 0.0
    %127 = vmatpush1.msra.mxu0 %v82
    %128 = vmatprep.subr.mxu0 0.0
    %129 = vmatpush1.msra.mxu0 %v83
    %130 = vmatprep.subr.mxu0 0.0
    %131 = vmatpush1.msra.mxu0 %v84
    %132 = vmatprep.subr.mxu0 0.0
    %133 = vmatpush1.msra.mxu0 0.0
    %134 = vmatprep.subr.mxu0 0.0
    %135 = vmatpush1.msra.mxu0 0.0
    %136 = vmatprep.subr.mxu0 0.0
    %137 = vmatpush1.msra.mxu0 0.0
    %138 = vmatprep.subr.mxu0 0.0
    %139 = vmatpush1.msra.mxu0 0.0
    %140 = vmatprep.subr.mxu0 0.0
    %141 = vmatpush1.msra.mxu0 0.0
    %142 = vmatprep.subr.mxu0 0.0
    %143 = vmatpush1.msra.mxu0 0.0
    %144 = vmatprep.subr.mxu0 0.0
    %145 = vmatpush1.msra.mxu0 0.0
    %146 = vmatprep.subr.mxu0 0.0
    %147 = vmatpush1.msra.mxu0 0.0
    %148 = vmatprep.subr.mxu0 0.0
    %149 = vmatpush1.msra.mxu0 0.0
    %150 = vmatprep.subr.mxu0 0.0
    %151 = vmatpush1.msra.mxu0 0.0
    %152 = vmatprep.subr.mxu0 0.0
    %153 = vmatpush1.msra.mxu0 0.0
    %154 = vmatprep.subr.mxu0 0.0
    %155 = vmatpush1.msra.mxu0 0.0
    %156 = vmatprep.subr.mxu0 0.0
    %157 = vmatpush1.msra.mxu0 0.0
    %158 = vmatprep.subr.mxu0 0.0
    %159 = vmatpush1.msra.mxu0 0.0
    %160 = vmatprep.subr.mxu0 0.0
    %161 = vmatpush1.msra.mxu0 0.0
    %162 = vmatprep.subr.mxu0 0.0
    %163 = vmatpush1.msra.mxu0 0.0
    %164 = vmatprep.mubr.f32.mxu0 0.0
    %165 = vmatmul.mubr.f32.gmra.mrb[0].mxu0 %v98
    %v166 = vpop.f32.mrb[0].mxu0
    %v167 = vadd.f32 %v94, %v166
    %v168 = vpop.f32.mrb[0].mxu0
    %169 = vdwg.mxu0
    %v170 = vmax.f32 %v167, 0.0
    %v171 = vlaneseq
    %v172 = vshrl.u32 %v171, 7
    %v173 = vsub.s32 0, %v172
    %v174 = vrot.slane %v90, %v173
    %vm175 = vcmask 261120
    %v177 = vsel %vm175, %v170, 0
    %179 = vmatprep.subr.mxu0 0.0
    %180 = vmatpush1.msra.mxu0 %v86
    %181 = vmatprep.subr.mxu0 0.0
    %182 = vmatpush1.msra.mxu0 %v87
    %183 = vmatprep.subr.mxu0 0.0
    %184 = vmatpush1.msra.mxu0 %v88
    %185 = vmatprep.subr.mxu0 0.0
    %186 = vmatpush1.msra.mxu0 %v89
    %187 = vmatprep.subr.mxu0 0.0
    %188 = vmatpush1.msra.mxu0 0.0
    %189 = vmatprep.subr.mxu0 0.0
    %190 = vmatpush1.msra.mxu0 0.0
    %191 = vmatprep.subr.mxu0 0.0
    %192 = vmatpush1.msra.mxu0 0.0
    %193 = vmatprep.subr.mxu0 0.0
    %194 = vmatpush1.msra.mxu0 0.0
    %195 = vmatprep.subr.mxu0 0.0
    %196 = vmatpush1.msra.mxu0 0.0
    %197 = vmatprep.subr.mxu0 0.0
    %198 = vmatpush1.msra.mxu0 0.0
    %199 = vmatprep.subr.mxu0 0.0
    %200 = vmatpush1.msra.mxu0 0.0
    %201 = vmatprep.subr.mxu0 0.0
    %202 = vmatpush1.msra.mxu0 0.0
    %203 = vmatprep.subr.mxu0 0.0
    %204 = vmatpush1.msra.mxu0 0.0
    %205 = vmatprep.subr.mxu0 0.0
    %206 = vmatpush1.msra.mxu0 0.0
    %207 = vmatprep.subr.mxu0 0.0
    %208 = vmatpush1.msra.mxu0 0.0
    %209 = vmatprep.subr.mxu0 0.0
    %210 = vmatpush1.msra.mxu0 0.0
    %211 = vmatprep.subr.mxu0 0.0
    %212 = vmatpush1.msra.mxu0 0.0
    %213 = vmatprep.subr.mxu0 0.0
    %214 = vmatpush1.msra.mxu0 0.0
    %215 = vmatprep.subr.mxu0 0.0
    %216 = vmatpush1.msra.mxu0 0.0
    %217 = vmatprep.subr.mxu0 0.0
    %218 = vmatpush1.msra.mxu0 0.0
    %219 = vmatprep.subr.mxu0 0.0
    %220 = vmatpush1.msra.mxu0 0.0
    %221 = vmatprep.subr.mxu0 0.0
    %222 = vmatpush1.msra.mxu0 0.0
    %223 = vmatprep.subr.mxu0 0.0
    %224 = vmatpush1.msra.mxu0 0.0
    %225 = vmatprep.subr.mxu0 0.0
    %226 = vmatpush1.msra.mxu0 0.0
    %227 = vmatprep.subr.mxu0 0.0
    %228 = vmatpush1.msra.mxu0 0.0
    %229 = vmatprep.subr.mxu0 0.0
    %230 = vmatpush1.msra.mxu0 0.0
    %231 = vmatprep.subr.mxu0 0.0
    %232 = vmatpush1.msra.mxu0 0.0
    %233 = vmatprep.subr.mxu0 0.0
    %234 = vmatpush1.msra.mxu0 0.0
    %235 = vmatprep.subr.mxu0 0.0
    %236 = vmatpush1.msra.mxu0 0.0
    %237 = vmatprep.subr.mxu0 0.0
    %238 = vmatpush1.msra.mxu0 0.0
    %239 = vmatprep.subr.mxu0 0.0
    %240 = vmatpush1.msra.mxu0 0.0
    %241 = vmatprep.subr.mxu0 0.0
    %242 = vmatpush1.msra.mxu0 0.0
    %243 = vmatprep.mubr.f32.mxu0 0.0
    %244 = vmatmul.mubr.f32.gmra.mrb[0].mxu0 %v177
    %v245 = vpop.f32.mrb[0].mxu0
    %v246 = vadd.f32 %v174, %v245
    %v247 = vpop.f32.mrb[0].mxu0
    %248 = vdwg.mxu0
    %v249 = vld [vmem:[%s2] sm:$0x3]
    %251 = vset.pattern.permute.xlu0 0
    %252 = vperm.xlu0 %251, %v249
    %v253 = vpop.permute.xlu0 %252
    %v255 = vmul.f32 %v253, %v246
    %v256 = vadd.f32 %v255, 0.0
    %s257 = scalar_lea.vmem %s3, 136
    %v258 = vld [vmem:[%s257] sm:$0xff]
    %v259 = vld [vmem:[%s257 + $0x8] sm:$0xff]
    %v260 = vld [vmem:[%s257 + $0x10] sm:$0xff]
    %v261 = vld [vmem:[%s257 + $0x18] sm:$0xff]
    %v262 = vld [vmem:[%s257 + $0x20] sm:$0xff]
    %v263 = vld [vmem:[%s257 + $0x28] sm:$0xff]
    %v264 = vld [vmem:[%s257 + $0x30] sm:$0xff]
    %v265 = vld [vmem:[%s257 + $0x38] sm:$0xff]
    %v266 = vld [vmem:[%s257 + $0x40] sm:$0xff]
    %v267 = vld [vmem:[%s257 + $0x48] sm:$0xff]
    %v268 = vld [vmem:[%s257 + $0x50] sm:$0xff]
    %v269 = vld [vmem:[%s257 + $0x58] sm:$0xff]
    %v270 = vld [vmem:[%s257 + $0x60] sm:$0xff]
    %v271 = vld [vmem:[%s257 + $0x68] sm:$0xff]
    %v272 = vld [vmem:[%s257 + $0x70] sm:$0xff]
    %v273 = vld [vmem:[%s257 + $0x78] sm:$0xff]
    %v274 = vld [vmem:[%s257 + $0x80] sm:$0x1]
    %s275 = scalar_lea.vmem %s4, 40
    %v276 = vld [vmem:[%s275] sm:$0xff]
    %v277 = vld [vmem:[%s275 + $0x8] sm:$0xff]
    %v278 = vld [vmem:[%s275 + $0x10] sm:$0xff]
    %v279 = vld [vmem:[%s275 + $0x18] sm:$0xff]
    %v280 = vld [vmem:[%s275 + $0x20] sm:$0x1]
    %v281 = vlaneseq
    %v282 = vshrl.u32 %v281, 7
    %v283 = vsub.s32 0, %v282
    %v284 = vrot.slane %v274, %v283
    %285 = vmatprep.subr.mxu0 0.0
    %286 = vmatpush1.msra.mxu0 %v258
    %287 = vmatprep.subr.mxu0 0.0
    %288 = vmatpush1.msra.mxu0 %v259
    %289 = vmatprep.subr.mxu0 0.0
    %290 = vmatpush1.msra.mxu0 %v260
    %291 = vmatprep.subr.mxu0 0.0
    %292 = vmatpush1.msra.mxu0 %v261
    %293 = vmatprep.subr.mxu0 0.0
    %294 = vmatpush1.msra.mxu0 %v262
    %295 = vmatprep.subr.mxu0 0.0
    %296 = vmatpush1.msra.mxu0 %v263
    %297 = vmatprep.subr.mxu0 0.0
    %298 = vmatpush1.msra.mxu0 %v264
    %299 = vmatprep.subr.mxu0 0.0
    %300 = vmatpush1.msra.mxu0 %v265
    %301 = vmatprep.subr.mxu0 0.0
    %302 = vmatpush1.msra.mxu0 %v266
    %303 = vmatprep.subr.mxu0 0.0
    %304 = vmatpush1.msra.mxu0 %v267
    %305 = vmatprep.subr.mxu0 0.0
    %306 = vmatpush1.msra.mxu0 %v268
    %307 = vmatprep.subr.mxu0 0.0
    %308 = vmatpush1.msra.mxu0 %v269
    %309 = vmatprep.subr.mxu0 0.0
    %310 = vmatpush1.msra.mxu0 %v270
    %311 = vmatprep.subr.mxu0 0.0
    %312 = vmatpush1.msra.mxu0 %v271
    %313 = vmatprep.subr.mxu0 0.0
    %314 = vmatpush1.msra.mxu0 %v272
    %315 = vmatprep.subr.mxu0 0.0
    %316 = vmatpush1.msra.mxu0 %v273
    %317 = vmatprep.subr.mxu0 0.0
    %318 = vmatpush1.msra.mxu0 0.0
    %319 = vmatprep.subr.mxu0 0.0
    %320 = vmatpush1.msra.mxu0 0.0
    %321 = vmatprep.subr.mxu0 0.0
    %322 = vmatpush1.msra.mxu0 0.0
    %323 = vmatprep.subr.mxu0 0.0
    %324 = vmatpush1.msra.mxu0 0.0
    %325 = vmatprep.subr.mxu0 0.0
    %326 = vmatpush1.msra.mxu0 0.0
    %327 = vmatprep.subr.mxu0 0.0
    %328 = vmatpush1.msra.mxu0 0.0
    %329 = vmatprep.subr.mxu0 0.0
    %330 = vmatpush1.msra.mxu0 0.0
    %331 = vmatprep.subr.mxu0 0.0
    %332 = vmatpush1.msra.mxu0 0.0
    %333 = vmatprep.subr.mxu0 0.0
    %334 = vmatpush1.msra.mxu0 0.0
    %335 = vmatprep.subr.mxu0 0.0
    %336 = vmatpush1.msra.mxu0 0.0
    %337 = vmatprep.subr.mxu0 0.0
    %338 = vmatpush1.msra.mxu0 0.0
    %339 = vmatprep.subr.mxu0 0.0
    %340 = vmatpush1.msra.mxu0 0.0
    %341 = vmatprep.subr.mxu0 0.0
    %342 = vmatpush1.msra.mxu0 0.0
    %343 = vmatprep.subr.mxu0 0.0
    %344 = vmatpush1.msra.mxu0 0.0
    %345 = vmatprep.subr.mxu0 0.0
    %346 = vmatpush1.msra.mxu0 0.0
    %347 = vmatprep.subr.mxu0 0.0
    %348 = vmatpush1.msra.mxu0 0.0
    %349 = vmatprep.mubr.f32.mxu0 0.0
    %350 = vmatmul.mubr.f32.gmra.mrb[0].mxu0 %v98
    %v351 = vpop.f32.mrb[0].mxu0
    %v352 = vadd.f32 %v284, %v351
    %v353 = vpop.f32.mrb[0].mxu0
    %354 = vdwg.mxu0
    %v355 = vmax.f32 %v352, 0.0
    %v356 = vlaneseq
    %v357 = vshrl.u32 %v356, 7
    %v358 = vsub.s32 0, %v357
    %v359 = vrot.slane %v280, %v358
    %v361 = vsel %vm175, %v355, 0
    %363 = vmatprep.subr.mxu0 0.0
    %364 = vmatpush1.msra.mxu0 %v276
    %365 = vmatprep.subr.mxu0 0.0
    %366 = vmatpush1.msra.mxu0 %v277
    %367 = vmatprep.subr.mxu0 0.0
    %368 = vmatpush1.msra.mxu0 %v278
    %369 = vmatprep.subr.mxu0 0.0
    %370 = vmatpush1.msra.mxu0 %v279
    %371 = vmatprep.subr.mxu0 0.0
    %372 = vmatpush1.msra.mxu0 0.0
    %373 = vmatprep.subr.mxu0 0.0
    %374 = vmatpush1.msra.mxu0 0.0
    %375 = vmatprep.subr.mxu0 0.0
    %376 = vmatpush1.msra.mxu0 0.0
    %377 = vmatprep.subr.mxu0 0.0
    %378 = vmatpush1.msra.mxu0 0.0
    %379 = vmatprep.subr.mxu0 0.0
    %380 = vmatpush1.msra.mxu0 0.0
    %381 = vmatprep.subr.mxu0 0.0
    %382 = vmatpush1.msra.mxu0 0.0
    %383 = vmatprep.subr.mxu0 0.0
    %384 = vmatpush1.msra.mxu0 0.0
    %385 = vmatprep.subr.mxu0 0.0
    %386 = vmatpush1.msra.mxu0 0.0
    %387 = vmatprep.subr.mxu0 0.0
    %388 = vmatpush1.msra.mxu0 0.0
    %389 = vmatprep.subr.mxu0 0.0
    %390 = vmatpush1.msra.mxu0 0.0
    %391 = vmatprep.subr.mxu0 0.0
    %392 = vmatpush1.msra.mxu0 0.0
    %393 = vmatprep.subr.mxu0 0.0
    %394 = vmatpush1.msra.mxu0 0.0
    %395 = vmatprep.subr.mxu0 0.0
    %396 = vmatpush1.msra.mxu0 0.0
    %397 = vmatprep.subr.mxu0 0.0
    %398 = vmatpush1.msra.mxu0 0.0
    %399 = vmatprep.subr.mxu0 0.0
    %400 = vmatpush1.msra.mxu0 0.0
    %401 = vmatprep.subr.mxu0 0.0
    %402 = vmatpush1.msra.mxu0 0.0
    %403 = vmatprep.subr.mxu0 0.0
    %404 = vmatpush1.msra.mxu0 0.0
    %405 = vmatprep.subr.mxu0 0.0
    %406 = vmatpush1.msra.mxu0 0.0
    %407 = vmatprep.subr.mxu0 0.0
    %408 = vmatpush1.msra.mxu0 0.0
    %409 = vmatprep.subr.mxu0 0.0
    %410 = vmatpush1.msra.mxu0 0.0
    %411 = vmatprep.subr.mxu0 0.0
    %412 = vmatpush1.msra.mxu0 0.0
    %413 = vmatprep.subr.mxu0 0.0
    %414 = vmatpush1.msra.mxu0 0.0
    %415 = vmatprep.subr.mxu0 0.0
    %416 = vmatpush1.msra.mxu0 0.0
    %417 = vmatprep.subr.mxu0 0.0
    %418 = vmatpush1.msra.mxu0 0.0
    %419 = vmatprep.subr.mxu0 0.0
    %420 = vmatpush1.msra.mxu0 0.0
    %421 = vmatprep.subr.mxu0 0.0
    %422 = vmatpush1.msra.mxu0 0.0
    %423 = vmatprep.subr.mxu0 0.0
    %424 = vmatpush1.msra.mxu0 0.0
    %425 = vmatprep.subr.mxu0 0.0
    %426 = vmatpush1.msra.mxu0 0.0
    %427 = vmatprep.mubr.f32.mxu0 0.0
    %428 = vmatmul.mubr.f32.gmra.mrb[0].mxu0 %v361
    %v429 = vpop.f32.mrb[0].mxu0
    %v430 = vadd.f32 %v359, %v429
    %v431 = vpop.f32.mrb[0].mxu0
    %432 = vdwg.mxu0
    %433 = vset.pattern.permute.xlu0 1
    %434 = vperm.xlu0 %433, %v249
    %v435 = vpop.permute.xlu0 %434
    %v437 = vmul.f32 %v435, %v430
    %v438 = vadd.f32 %v256, %v437
    %s439 = scalar_lea.vmem %s3, 272
    %v440 = vld [vmem:[%s439] sm:$0xff]
    %v441 = vld [vmem:[%s439 + $0x8] sm:$0xff]
    %v442 = vld [vmem:[%s439 + $0x10] sm:$0xff]
    %v443 = vld [vmem:[%s439 + $0x18] sm:$0xff]
    %v444 = vld [vmem:[%s439 + $0x20] sm:$0xff]
    %v445 = vld [vmem:[%s439 + $0x28] sm:$0xff]
    %v446 = vld [vmem:[%s439 + $0x30] sm:$0xff]
    %v447 = vld [vmem:[%s439 + $0x38] sm:$0xff]
    %v448 = vld [vmem:[%s439 + $0x40] sm:$0xff]
    %v449 = vld [vmem:[%s439 + $0x48] sm:$0xff]
    %v450 = vld [vmem:[%s439 + $0x50] sm:$0xff]
    %v451 = vld [vmem:[%s439 + $0x58] sm:$0xff]
    %v452 = vld [vmem:[%s439 + $0x60] sm:$0xff]
    %v453 = vld [vmem:[%s439 + $0x68] sm:$0xff]
    %v454 = vld [vmem:[%s439 + $0x70] sm:$0xff]
    %v455 = vld [vmem:[%s439 + $0x78] sm:$0xff]
    %v456 = vld [vmem:[%s439 + $0x80] sm:$0x1]
    %s457 = scalar_lea.vmem %s4, 80
    %v458 = vld [vmem:[%s457] sm:$0xff]
    %v459 = vld [vmem:[%s457 + $0x8] sm:$0xff]
    %v460 = vld [vmem:[%s457 + $0x10] sm:$0xff]
    %v461 = vld [vmem:[%s457 + $0x18] sm:$0xff]
    %v462 = vld [vmem:[%s457 + $0x20] sm:$0x1]
    %v463 = vlaneseq
    %v464 = vshrl.u32 %v463, 7
    %v465 = vsub.s32 0, %v464
    %v466 = vrot.slane %v456, %v465
    %467 = vmatprep.subr.mxu0 0.0
    %468 = vmatpush1.msra.mxu0 %v440
    %469 = vmatprep.subr.mxu0 0.0
    %470 = vmatpush1.msra.mxu0 %v441
    %471 = vmatprep.subr.mxu0 0.0
    %472 = vmatpush1.msra.mxu0 %v442
    %473 = vmatprep.subr.mxu0 0.0
    %474 = vmatpush1.msra.mxu0 %v443
    %475 = vmatprep.subr.mxu0 0.0
    %476 = vmatpush1.msra.mxu0 %v444
    %477 = vmatprep.subr.mxu0 0.0
    %478 = vmatpush1.msra.mxu0 %v445
    %479 = vmatprep.subr.mxu0 0.0
    %480 = vmatpush1.msra.mxu0 %v446
    %481 = vmatprep.subr.mxu0 0.0
    %482 = vmatpush1.msra.mxu0 %v447
    %483 = vmatprep.subr.mxu0 0.0
    %484 = vmatpush1.msra.mxu0 %v448
    %485 = vmatprep.subr.mxu0 0.0
    %486 = vmatpush1.msra.mxu0 %v449
    %487 = vmatprep.subr.mxu0 0.0
    %488 = vmatpush1.msra.mxu0 %v450
    %489 = vmatprep.subr.mxu0 0.0
    %490 = vmatpush1.msra.mxu0 %v451
    %491 = vmatprep.subr.mxu0 0.0
    %492 = vmatpush1.msra.mxu0 %v452
    %493 = vmatprep.subr.mxu0 0.0
    %494 = vmatpush1.msra.mxu0 %v453
    %495 = vmatprep.subr.mxu0 0.0
    %496 = vmatpush1.msra.mxu0 %v454
    %497 = vmatprep.subr.mxu0 0.0
    %498 = vmatpush1.msra.mxu0 %v455
    %499 = vmatprep.subr.mxu0 0.0
    %500 = vmatpush1.msra.mxu0 0.0
    %501 = vmatprep.subr.mxu0 0.0
    %502 = vmatpush1.msra.mxu0 0.0
    %503 = vmatprep.subr.mxu0 0.0
    %504 = vmatpush1.msra.mxu0 0.0
    %505 = vmatprep.subr.mxu0 0.0
    %506 = vmatpush1.msra.mxu0 0.0
    %507 = vmatprep.subr.mxu0 0.0
    %508 = vmatpush1.msra.mxu0 0.0
    %509 = vmatprep.subr.mxu0 0.0
    %510 = vmatpush1.msra.mxu0 0.0
    %511 = vmatprep.subr.mxu0 0.0
    %512 = vmatpush1.msra.mxu0 0.0
    %513 = vmatprep.subr.mxu0 0.0
    %514 = vmatpush1.msra.mxu0 0.0
    %515 = vmatprep.subr.mxu0 0.0
    %516 = vmatpush1.msra.mxu0 0.0
    %517 = vmatprep.subr.mxu0 0.0
    %518 = vmatpush1.msra.mxu0 0.0
    %519 = vmatprep.subr.mxu0 0.0
    %520 = vmatpush1.msra.mxu0 0.0
    %521 = vmatprep.subr.mxu0 0.0
    %522 = vmatpush1.msra.mxu0 0.0
    %523 = vmatprep.subr.mxu0 0.0
    %524 = vmatpush1.msra.mxu0 0.0
    %525 = vmatprep.subr.mxu0 0.0
    %526 = vmatpush1.msra.mxu0 0.0
    %527 = vmatprep.subr.mxu0 0.0
    %528 = vmatpush1.msra.mxu0 0.0
    %529 = vmatprep.subr.mxu0 0.0
    %530 = vmatpush1.msra.mxu0 0.0
    %531 = vmatprep.mubr.f32.mxu0 0.0
    %532 = vmatmul.mubr.f32.gmra.mrb[0].mxu0 %v98
    %v533 = vpop.f32.mrb[0].mxu0
    %v534 = vadd.f32 %v466, %v533
    %v535 = vpop.f32.mrb[0].mxu0
    %536 = vdwg.mxu0
    %v537 = vmax.f32 %v534, 0.0
    %v538 = vlaneseq
    %v539 = vshrl.u32 %v538, 7
    %v540 = vsub.s32 0, %v539
    %v541 = vrot.slane %v462, %v540
    %v543 = vsel %vm175, %v537, 0
    %545 = vmatprep.subr.mxu0 0.0
    %546 = vmatpush1.msra.mxu0 %v458
    %547 = vmatprep.subr.mxu0 0.0
    %548 = vmatpush1.msra.mxu0 %v459
    %549 = vmatprep.subr.mxu0 0.0
    %550 = vmatpush1.msra.mxu0 %v460
    %551 = vmatprep.subr.mxu0 0.0
    %552 = vmatpush1.msra.mxu0 %v461
    %553 = vmatprep.subr.mxu0 0.0
    %554 = vmatpush1.msra.mxu0 0.0
    %555 = vmatprep.subr.mxu0 0.0
    %556 = vmatpush1.msra.mxu0 0.0
    %557 = vmatprep.subr.mxu0 0.0
    %558 = vmatpush1.msra.mxu0 0.0
    %559 = vmatprep.subr.mxu0 0.0
    %560 = vmatpush1.msra.mxu0 0.0
    %561 = vmatprep.subr.mxu0 0.0
    %562 = vmatpush1.msra.mxu0 0.0
    %563 = vmatprep.subr.mxu0 0.0
    %564 = vmatpush1.msra.mxu0 0.0
    %565 = vmatprep.subr.mxu0 0.0
    %566 = vmatpush1.msra.mxu0 0.0
    %567 = vmatprep.subr.mxu0 0.0
    %568 = vmatpush1.msra.mxu0 0.0
    %569 = vmatprep.subr.mxu0 0.0
    %570 = vmatpush1.msra.mxu0 0.0
    %571 = vmatprep.subr.mxu0 0.0
    %572 = vmatpush1.msra.mxu0 0.0
    %573 = vmatprep.subr.mxu0 0.0
    %574 = vmatpush1.msra.mxu0 0.0
    %575 = vmatprep.subr.mxu0 0.0
    %576 = vmatpush1.msra.mxu0 0.0
    %577 = vmatprep.subr.mxu0 0.0
    %578 = vmatpush1.msra.mxu0 0.0
    %579 = vmatprep.subr.mxu0 0.0
    %580 = vmatpush1.msra.mxu0 0.0
    %581 = vmatprep.subr.mxu0 0.0
    %582 = vmatpush1.msra.mxu0 0.0
    %583 = vmatprep.subr.mxu0 0.0
    %584 = vmatpush1.msra.mxu0 0.0
    %585 = vmatprep.subr.mxu0 0.0
    %586 = vmatpush1.msra.mxu0 0.0
    %587 = vmatprep.subr.mxu0 0.0
    %588 = vmatpush1.msra.mxu0 0.0
    %589 = vmatprep.subr.mxu0 0.0
    %590 = vmatpush1.msra.mxu0 0.0
    %591 = vmatprep.subr.mxu0 0.0
    %592 = vmatpush1.msra.mxu0 0.0
    %593 = vmatprep.subr.mxu0 0.0
    %594 = vmatpush1.msra.mxu0 0.0
    %595 = vmatprep.subr.mxu0 0.0
    %596 = vmatpush1.msra.mxu0 0.0
    %597 = vmatprep.subr.mxu0 0.0
    %598 = vmatpush1.msra.mxu0 0.0
    %599 = vmatprep.subr.mxu0 0.0
    %600 = vmatpush1.msra.mxu0 0.0
    %601 = vmatprep.subr.mxu0 0.0
    %602 = vmatpush1.msra.mxu0 0.0
    %603 = vmatprep.subr.mxu0 0.0
    %604 = vmatpush1.msra.mxu0 0.0
    %605 = vmatprep.subr.mxu0 0.0
    %606 = vmatpush1.msra.mxu0 0.0
    %607 = vmatprep.subr.mxu0 0.0
    %608 = vmatpush1.msra.mxu0 0.0
    %609 = vmatprep.mubr.f32.mxu0 0.0
    %610 = vmatmul.mubr.f32.gmra.mrb[0].mxu0 %v543
    %v611 = vpop.f32.mrb[0].mxu0
    %v612 = vadd.f32 %v541, %v611
    %v613 = vpop.f32.mrb[0].mxu0
    %614 = vdwg.mxu0
    %615 = vset.pattern.permute.xlu0 2
    %616 = vperm.xlu0 %615, %v249
    %v617 = vpop.permute.xlu0 %616
    %v619 = vmul.f32 %v617, %v612
    %v620 = vadd.f32 %v438, %v619
    %v621 = vxor.u32 %v620, 2147483648
    %v622 = vmul.f32 %v621, 1.442695
    %v623 = vpow.pop %v622
    %v624 = vadd.f32 %v623, 1.0
    %v625 = vrcp.pop %v624
    %v626 = vmul.f32 1.0, %v625
    %v629 = vunpack.c.l.s4 1966171168
    %v630 = vunpack.c.0.s8 %v629
    %v631 = vlaneseq
    %v632 = vshrl.u32 %v631, 7
    %v633 = vsub.s32 %v630, %v632
    %v634 = vrot.slane %v626, %v633
    %v635 = vcombine.high %v634, %v634
    %v637 = vunpack.c.l.s4 1966171168
    %v638 = vunpack.c.0.s8 %v637
    %v639 = vlaneseq
    %v640 = vshrl.u32 %v639, 7
    %v641 = vsub.s32 %v638, %v640
    %v642 = vrot.slane %v634, %v641
    %v644 = vunpack.c.l.s4 1966171168
    %v645 = vunpack.c.0.s8 %v644
    %v646 = vlaneseq
    %v647 = vshrl.u32 %v646, 7
    %v648 = vsub.s32 %v645, %v647
    %v649 = vrot.slane %v635, %v648
    %v650 = vlaneseq
    %v651 = vshrl.u32 %v650, 7
    %v652 = vsub.s32 0, %v651
    %v653 = vrot.slane %v642, %v652
    %v654 = vlaneseq
    %v655 = vshrl.u32 %v654, 7
    %v656 = vsub.s32 0, %v655
    %v657 = vrot.slane %v649, %v656
    %v660 = vmul.f32 %v25, %v653
    %v661 = vmul.f32 %v26, %v653
    %v662 = vmul.f32 %v27, %v653
    %v663 = vmul.f32 %v28, %v653
    %v664 = vmul.f32 %v29, %v653
    %v665 = vmul.f32 %v30, %v653
    %v666 = vmul.f32 %v31, %v653
    %v667 = vmul.f32 %v32, %v653
    %v668 = vmul.f32 %v33, %v657
    %v669 = vmul.f32 %v34, %v657
    %v670 = vmul.f32 %v35, %v657
    %v671 = vmul.f32 %v36, %v657
    %v672 = vmul.f32 %v37, %v657
    %v673 = vmul.f32 %v38, %v657
    %v674 = vmul.f32 %v39, %v657
    %v675 = vmul.f32 %v40, %v657
    %v676 = vld [vmem:[%s1] sm:$0xff]
    %v677 = vld [vmem:[%s1 + $0x8] sm:$0xff]
    %v678 = vld [vmem:[%s1 + $0x10] sm:$0xff]
    %v679 = vld [vmem:[%s1 + $0x18] sm:$0xff]
    %v680 = vld [vmem:[%s1 + $0x20] sm:$0xff]
    %v681 = vld [vmem:[%s1 + $0x28] sm:$0xff]
    %v682 = vld [vmem:[%s1 + $0x30] sm:$0xff]
    %v683 = vld [vmem:[%s1 + $0x38] sm:$0xff]
    %v684 = vld [vmem:[%s1 + $0x40] sm:$0xff]
    %v685 = vld [vmem:[%s1 + $0x48] sm:$0xff]
    %v686 = vld [vmem:[%s1 + $0x50] sm:$0xff]
    %v687 = vld [vmem:[%s1 + $0x58] sm:$0xff]
    %v688 = vld [vmem:[%s1 + $0x60] sm:$0xff]
    %v689 = vld [vmem:[%s1 + $0x68] sm:$0xff]
    %v690 = vld [vmem:[%s1 + $0x70] sm:$0xff]
    %v691 = vld [vmem:[%s1 + $0x78] sm:$0xff]
    %v692 = vadd.f32 %v660, %v676
    %v693 = vadd.f32 %v661, %v677
    %v694 = vadd.f32 %v662, %v678
    %v695 = vadd.f32 %v663, %v679
    %v696 = vadd.f32 %v664, %v680
    %v697 = vadd.f32 %v665, %v681
    %v698 = vadd.f32 %v666, %v682
    %v699 = vadd.f32 %v667, %v683
    %v700 = vadd.f32 %v668, %v684
    %v701 = vadd.f32 %v669, %v685
    %v702 = vadd.f32 %v670, %v686
    %v703 = vadd.f32 %v671, %v687
    %v704 = vadd.f32 %v672, %v688
    %v705 = vadd.f32 %v673, %v689
    %v706 = vadd.f32 %v674, %v690
    %v707 = vadd.f32 %v675, %v691
    %s708 = sld [smem:[#allocation2]]
    %vm709 = vcmp.ge.f32.partialorder %v692, 0.0
    %vm710 = vcmp.ge.f32.partialorder %v693, 0.0
    %vm711 = vcmp.ge.f32.partialorder %v694, 0.0
    %vm712 = vcmp.ge.f32.partialorder %v695, 0.0
    %vm713 = vcmp.ge.f32.partialorder %v696, 0.0
    %vm714 = vcmp.ge.f32.partialorder %v697, 0.0
    %vm715 = vcmp.ge.f32.partialorder %v698, 0.0
    %vm716 = vcmp.ge.f32.partialorder %v699, 0.0
    %vm717 = vcmp.ge.f32.partialorder %v700, 0.0
    %vm718 = vcmp.ge.f32.partialorder %v701, 0.0
    %vm719 = vcmp.ge.f32.partialorder %v702, 0.0
    %vm720 = vcmp.ge.f32.partialorder %v703, 0.0
    %vm721 = vcmp.ge.f32.partialorder %v704, 0.0
    %vm722 = vcmp.ge.f32.partialorder %v705, 0.0
    %vm723 = vcmp.ge.f32.partialorder %v706, 0.0
    %vm724 = vcmp.ge.f32.partialorder %v707, 0.0
    %v725 = vstv %s708
    %v726 = vmul.f32 %v725, %v692
    %v727 = vmul.f32 %v725, %v693
    %v728 = vmul.f32 %v725, %v694
    %v729 = vmul.f32 %v725, %v695
    %v730 = vmul.f32 %v725, %v696
    %v731 = vmul.f32 %v725, %v697
    %v732 = vmul.f32 %v725, %v698
    %v733 = vmul.f32 %v725, %v699
    %v734 = vmul.f32 %v725, %v700
    %v735 = vmul.f32 %v725, %v701
    %v736 = vmul.f32 %v725, %v702
    %v737 = vmul.f32 %v725, %v703
    %v738 = vmul.f32 %v725, %v704
    %v739 = vmul.f32 %v725, %v705
    %v740 = vmul.f32 %v725, %v706
    %v741 = vmul.f32 %v725, %v707
    %v742 = vsel %vm709, %v692, %v726
    %v743 = vsel %vm710, %v693, %v727
    %v744 = vsel %vm711, %v694, %v728
    %v745 = vsel %vm712, %v695, %v729
    %v746 = vsel %vm713, %v696, %v730
    %v747 = vsel %vm714, %v697, %v731
    %v748 = vsel %vm715, %v698, %v732
    %v749 = vsel %vm716, %v699, %v733
    %v750 = vsel %vm717, %v700, %v734
    %v751 = vsel %vm718, %v701, %v735
    %v752 = vsel %vm719, %v702, %v736
    %v753 = vsel %vm720, %v703, %v737
    %v754 = vsel %vm721, %v704, %v738
    %v755 = vsel %vm722, %v705, %v739
    %v756 = vsel %vm723, %v706, %v740
    %v757 = vsel %vm724, %v707, %v741
    %758 = vst [vmem:[#allocation3] sm:$0xff] %v742
    %759 = vst [vmem:[#allocation3 + $0x8] sm:$0xff] %v743
    %760 = vst [vmem:[#allocation3 + $0x10] sm:$0xff] %v744
    %761 = vst [vmem:[#allocation3 + $0x18] sm:$0xff] %v745
    %762 = vst [vmem:[#allocation3 + $0x20] sm:$0xff] %v746
    %763 = vst [vmem:[#allocation3 + $0x28] sm:$0xff] %v747
    %764 = vst [vmem:[#allocation3 + $0x30] sm:$0xff] %v748
    %765 = vst [vmem:[#allocation3 + $0x38] sm:$0xff] %v749
    %766 = vst [vmem:[#allocation3 + $0x40] sm:$0xff] %v750
    %767 = vst [vmem:[#allocation3 + $0x48] sm:$0xff] %v751
    %768 = vst [vmem:[#allocation3 + $0x50] sm:$0xff] %v752
    %769 = vst [vmem:[#allocation3 + $0x58] sm:$0xff] %v753
    %770 = vst [vmem:[#allocation3 + $0x60] sm:$0xff] %v754
    %771 = vst [vmem:[#allocation3 + $0x68] sm:$0xff] %v755
    %772 = vst [vmem:[#allocation3 + $0x70] sm:$0xff] %v756
    %773 = vst [vmem:[#allocation3 + $0x78] sm:$0xff] %v757
    // Predicated region
    $region26: #{domain_adaption_forward.5} parent=1 // pred_check
      _
    $region27: #{domain_adaption_forward.5} parent=1 // pred_check_branch
      %775 = sbr.rel (0) target = $region29
    $region28: #{domain_adaption_forward.5} parent=1 // pred_region
      %s777 = ssub.s32 2048, 2048
      %778 = vsyncadd [#allocation4], %s777
      %s779 = sshll.u32 [#allocation3], 4
      %s780 = int_to_ptr.vmem [resolvable:$true] %s779
      %785 = dma.vmem_to_hbm [thread:$0]  %s780, 2048, %s6, [#allocation4], 128, 128, 8
    $region29: #{domain_adaption_forward.5} parent=1 // pred_fallthru
      _
    // Predicated region
    $region30: #{domain_adaption_forward.5} parent=1 // pred_check
      _
    $region31: #{domain_adaption_forward.5} parent=1 // pred_check_branch
      %787 = sbr.rel (0) target = $region33
    $region32: #{domain_adaption_forward.5} parent=1 // pred_region
      %788 = dma.done [#allocation4], 2048
    $region33: #{domain_adaption_forward.5} parent=1 // pred_fallthru
      _
    %789 = vsyncpa [#allocation4], 1

</llo_original>
